<compile_context>
chip_gen: v7x
topology: tpu7x:2x2x1
jax: 0.10.0
libtpu: 0.0.40
codegen_flags: <defaults>
</compile_context>

<pallas_src>
import functools

import jax
import jax.numpy as jnp
from jax.experimental import pallas as pl
from jax.experimental.pallas import tpu as pltpu


def _round_up(n: int, m: int) -> int:
    return ((n + m - 1) // m) * m


# --------------------------------------------------------------------------- pass 1: context vector

def _context_kernel(x_ref, wi_ref, bi_ref, wk_ref, bk_ref, ctx_ref,
                    m_sc, l_sc, acc_sc, *, n_valid: int):
    """Online-softmax reduction over point tiles: ctx = sum_n softmax(fc_i(x))_n * fc_k(x)_n."""
    i = pl.program_id(0)
    tm = x_ref.shape[0]

    @pl.when(i == 0)
    def _():
        m_sc[...] = jnp.full_like(m_sc, -jnp.inf)
        l_sc[...] = jnp.zeros_like(l_sc)
        acc_sc[...] = jnp.zeros_like(acc_sc)

    x = x_ref[...]                                   # [tm, d]  bf16
    xf = x.astype(jnp.float32)

    # fc_i logits on the VPU/XLU (row dot with wi) instead of a 1-lane MXU matmul.
    logits = jnp.sum(xf * wi_ref[...], axis=-1, keepdims=True) + bi_ref[...]      # [tm, 1] f32

    # Mask padded rows out of the softmax.
    row = i * tm + jax.lax.broadcasted_iota(jnp.int32, (tm, 1), 0)
    valid = row < n_valid
    logits = jnp.where(valid, logits, -jnp.inf)

    # fc_k on the MXU, f32 accumulation.
    k = jnp.dot(x, wk_ref[...], preferred_element_type=jnp.float32) + bk_ref[...]  # [tm, d] f32

    # Online softmax update of (max, denom, weighted context).
    m_prev = m_sc[...]                                                   # [1,1]
    m_new = jnp.maximum(m_prev, jnp.max(logits, axis=0, keepdims=True))  # [1,1]
    alpha = jnp.exp(m_prev - m_new)                                      # [1,1]
    p = jnp.exp(logits - m_new)                                          # [tm,1] (0 for masked rows)

    l_sc[...] = alpha * l_sc[...] + jnp.sum(p, axis=0, keepdims=True)
    acc_sc[...] = alpha * acc_sc[...] + jnp.sum(p * k, axis=0, keepdims=True)
    m_sc[...] = m_new

    @pl.when(i == pl.num_programs(0) - 1)
    def _():
        ctx_ref[...] = acc_sc[...] / l_sc[...]


# --------------------------------------------------------------------------- pass 2: fc_v * ctx, fc_o

def _output_kernel(x_ref, ctx_ref, wv_ref, bv_ref, wo_ref, bo_ref, o_ref):
    x = x_ref[...]                                                                   # [tm, d] bf16
    v = jnp.dot(x, wv_ref[...], preferred_element_type=jnp.float32) + bv_ref[...]    # fc_v, f32 acc
    v = v * ctx_ref[...]                                                             # * context
    out = jnp.dot(v.astype(wo_ref.dtype), wo_ref[...],
                  preferred_element_type=jnp.float32) + bo_ref[...]                  # fc_o
    o_ref[...] = out.astype(o_ref.dtype)


# --------------------------------------------------------------------------- wrapper

def mobilevitv2_attention(x, params, *, tile_m: int = 256, compute_dtype=jnp.bfloat16):
    """x: [N, d_model] feature matrix (x.F). Returns [N, d_model] float32."""
    N, d = x.shape

    tm = int(min(tile_m, _round_up(N, 8)))
    n_pad = _round_up(N, tm)
    if n_pad != N:
        x = jnp.pad(x, ((0, n_pad - N), (0, 0)))
    grid = (n_pad // tm,)

    xq = x.astype(compute_dtype)
    wi = params['wi'].reshape(1, d).astype(jnp.float32)      # fc_i weight as a row (VPU dot)
    bi = params['bi'].reshape(1, 1).astype(jnp.float32)
    wk = params['wk'].astype(compute_dtype)
    bk = params['bk'].reshape(1, d).astype(jnp.float32)
    wv = params['wv'].astype(compute_dtype)
    bv = params['bv'].reshape(1, d).astype(jnp.float32)
    wo = params['wo'].astype(compute_dtype)
    bo = params['bo'].reshape(1, d).astype(jnp.float32)

    # Pass 1: sequential reduction over point tiles -> context vector [1, d].
    ctx = pl.pallas_call(
        functools.partial(_context_kernel, n_valid=N),
        out_shape=jax.ShapeDtypeStruct((1, d), jnp.float32),
        grid=grid,
        in_specs=[
            pl.BlockSpec((tm, d), lambda i: (i, 0)),
            pl.BlockSpec((1, d), lambda i: (0, 0)),
            pl.BlockSpec((1, 1), lambda i: (0, 0)),
            pl.BlockSpec((d, d), lambda i: (0, 0)),
            pl.BlockSpec((1, d), lambda i: (0, 0)),
        ],
        out_specs=pl.BlockSpec((1, d), lambda i: (0, 0)),
        scratch_shapes=[pltpu.VMEM((1, 1), jnp.float32),     # running max
                        pltpu.VMEM((1, 1), jnp.float32),     # running denom
                        pltpu.VMEM((1, d), jnp.float32)],    # running weighted context
        compiler_params=pltpu.CompilerParams(dimension_semantics=("arbitrary",)),
    )(xq, wi, bi, wk, bk)

    # Pass 2: embarrassingly parallel over point tiles.
    out = pl.pallas_call(
        _output_kernel,
        out_shape=jax.ShapeDtypeStruct((n_pad, d), jnp.float32),
        grid=grid,
        in_specs=[
            pl.BlockSpec((tm, d), lambda i: (i, 0)),
            pl.BlockSpec((1, d), lambda i: (0, 0)),
            pl.BlockSpec((d, d), lambda i: (0, 0)),
            pl.BlockSpec((1, d), lambda i: (0, 0)),
            pl.BlockSpec((d, d), lambda i: (0, 0)),
            pl.BlockSpec((1, d), lambda i: (0, 0)),
        ],
        out_specs=pl.BlockSpec((tm, d), lambda i: (i, 0)),
        compiler_params=pltpu.CompilerParams(dimension_semantics=("parallel",)),
    )(xq, ctx, wv, bv, wo, bo)

    return out[:N]


# --------------------------------------------------------------------------- pure-JAX reference

def reference_attention(x, p):
    logits = x @ p['wi'] + p['bi']                                       # [N,1]
    w = jax.nn.softmax(logits, axis=0)                                   # softmax over points
    ctx = jnp.sum(w * (x @ p['wk'] + p['bk']), axis=0, keepdims=True)    # [1,d]
    v = (x @ p['wv'] + p['bv']) * ctx
    return v @ p['wo'] + p['bo']


# --------------------------------------------------------------------------- main

if __name__ == "__main__":
    key = jax.random.PRNGKey(0)
    kx, k0, k1, k2, k3, k4, k5, k6, k7 = jax.random.split(key, 9)

    N, d_model = 2000, 256          # small N, lane-dense d_model; exercises the padding/mask path
    x = jax.random.normal(kx, (N, d_model), jnp.float32)

    std = 0.05                      # larger than the module's 0.001 init so outputs are well scaled
    params = dict(
        wi=std * jax.random.normal(k0, (d_model, 1), jnp.float32),
        bi=0.01 * jax.random.normal(k1, (1,), jnp.float32),
        wk=std * jax.random.normal(k2, (d_model, d_model), jnp.float32),
        bk=0.01 * jax.random.normal(k3, (d_model,), jnp.float32),
        wv=std * jax.random.normal(k4, (d_model, d_model), jnp.float32),
        bv=0.01 * jax.random.normal(k5, (d_model,), jnp.float32),
        wo=std * jax.random.normal(k6, (d_model, d_model), jnp.float32),
        bo=0.01 * jax.random.normal(k7, (d_model,), jnp.float32),
    )

    fwd = jax.jit(mobilevitv2_attention)
    out = jax.block_until_ready(fwd(x, params))

    assert out.shape == (N, d_model)
    assert bool(jnp.all(jnp.isfinite(out)))

    ref = reference_attention(x, params)
    err = float(jnp.max(jnp.abs(out - ref)))
    scale = float(jnp.max(jnp.abs(ref)))
    assert err <= 0.03 * scale + 1e-5, (err, scale)   # loose tolerance for the bf16 MXU path

    print("KERNEL_OK")
</pallas_src>

<mosaic_0001>
module attributes {stable_mosaic.version = 11 : i64} {
  func.func @_context_kernel(%arg0: i32, %arg1: memref<256x256xbf16, #tpu.memory_space<vmem>>, %arg2: memref<1x256xf32, #tpu.memory_space<vmem>>, %arg3: memref<1x1xf32, #tpu.memory_space<vmem>>, %arg4: memref<256x256xbf16, #tpu.memory_space<vmem>>, %arg5: memref<1x256xf32, #tpu.memory_space<vmem>>, %arg6: memref<1x256xf32, #tpu.memory_space<vmem>>, %arg7: memref<1x1xf32, #tpu.memory_space<vmem>>, %arg8: memref<1x1xf32, #tpu.memory_space<vmem>>, %arg9: memref<1x256xf32, #tpu.memory_space<vmem>>) attributes {dimension_semantics = [#tpu.dimension_semantics<arbitrary>], iteration_bounds = array<i64: 8>, scalar_prefetch = 0 : i64, scratch_operands = 3 : i64, tpu.core_type = #tpu.core_type<tc>, window_params = [{transform_indices = @transform_0, window_bounds = array<i64: 256, 256>}, {pipeline_mode = #tpu.pipeline_mode<synchronous>, transform_indices = @transform_1, window_bounds = array<i64: 1, 256>}, {pipeline_mode = #tpu.pipeline_mode<synchronous>, transform_indices = @transform_2, window_bounds = array<i64: 1, 1>}, {pipeline_mode = #tpu.pipeline_mode<synchronous>, transform_indices = @transform_3, window_bounds = array<i64: 256, 256>}, {pipeline_mode = #tpu.pipeline_mode<synchronous>, transform_indices = @transform_4, window_bounds = array<i64: 1, 256>}, {pipeline_mode = #tpu.pipeline_mode<synchronous>, transform_indices = @transform_5, window_bounds = array<i64: 1, 256>}]} {
    %c0_i32 = arith.constant 0 : i32
    %0 = arith.cmpi eq, %arg0, %c0_i32 : i32
    %1 = arith.extui %0 : i1 to i32
    %c0_i32_0 = arith.constant 0 : i32
    %2 = arith.cmpi ne, %1, %c0_i32_0 : i32
    scf.if %2 {
      %cst_28 = arith.constant 0xFF800000 : f32
      %54 = vector.broadcast %cst_28 : f32 to vector<1x1xf32>
      %c0_29 = arith.constant 0 : index
      %c0_30 = arith.constant 0 : index
      %55 = vector.load %arg7[%c0_29, %c0_30] : memref<1x1xf32, #tpu.memory_space<vmem>>, vector<1x1xf32>
      tpu.vector_store %arg7[%c0_29, %c0_30], %54 {strides = array<i32>} : memref<1x1xf32, #tpu.memory_space<vmem>>, vector<1x1xf32>,
      %cst_31 = arith.constant 0.000000e+00 : f32
      %56 = vector.broadcast %cst_31 : f32 to vector<1x1xf32>
      %c0_32 = arith.constant 0 : index
      %c0_33 = arith.constant 0 : index
      %57 = vector.load %arg8[%c0_32, %c0_33] : memref<1x1xf32, #tpu.memory_space<vmem>>, vector<1x1xf32>
      tpu.vector_store %arg8[%c0_32, %c0_33], %56 {strides = array<i32>} : memref<1x1xf32, #tpu.memory_space<vmem>>, vector<1x1xf32>,
      %cst_34 = arith.constant 0.000000e+00 : f32
      %58 = vector.broadcast %cst_34 : f32 to vector<1x256xf32>
      %c0_35 = arith.constant 0 : index
      %c0_36 = arith.constant 0 : index
      %59 = vector.load %arg9[%c0_35, %c0_36] : memref<1x256xf32, #tpu.memory_space<vmem>>, vector<1x256xf32>
      tpu.vector_store %arg9[%c0_35, %c0_36], %58 {strides = array<i32>} : memref<1x256xf32, #tpu.memory_space<vmem>>, vector<1x256xf32>,
    } else {
    }
    %c0 = arith.constant 0 : index
    %c0_1 = arith.constant 0 : index
    %3 = vector.load %arg1[%c0, %c0_1] : memref<256x256xbf16, #tpu.memory_space<vmem>>, vector<256x256xbf16>
    %4 = arith.extf %3 : vector<256x256xbf16> to vector<256x256xf32>
    %c0_2 = arith.constant 0 : index
    %c0_3 = arith.constant 0 : index
    %5 = vector.load %arg2[%c0_2, %c0_3] : memref<1x256xf32, #tpu.memory_space<vmem>>, vector<1x256xf32>
    %6 = vector.broadcast %5 : vector<1x256xf32> to vector<256x256xf32>
    %7 = arith.mulf %4, %6 : vector<256x256xf32>
    %cst = arith.constant dense<0.000000e+00> : vector<256xf32>
    %8 = vector.multi_reduction <add>, %7, %cst [1] : vector<256x256xf32> to vector<256xf32>
    %9 = vector.shape_cast %8 : vector<256xf32> to vector<256x1xf32>
    %c0_4 = arith.constant 0 : index
    %c0_5 = arith.constant 0 : index
    %10 = vector.load %arg3[%c0_4, %c0_5] : memref<1x1xf32, #tpu.memory_space<vmem>>, vector<1x1xf32>
    %11 = vector.broadcast %10 : vector<1x1xf32> to vector<256x1xf32>
    %12 = arith.addf %9, %11 : vector<256x1xf32>
    %c256_i32 = arith.constant 256 : i32
    %13 = arith.muli %arg0, %c256_i32 : i32
    %14 = tpu.iota {dimensions = array<i32: 0>} : vector<256x1xi32>
    %15 = vector.broadcast %13 : i32 to vector<256x1xi32>
    %16 = arith.addi %15, %14 : vector<256x1xi32>
    %c2000_i32 = arith.constant 2000 : i32
    %17 = vector.broadcast %c2000_i32 : i32 to vector<256x1xi32>
    %18 = arith.cmpi slt, %16, %17 : vector<256x1xi32>
    %cst_6 = arith.constant 0xFF800000 : f32
    %19 = vector.broadcast %cst_6 : f32 to vector<256x1xf32>
    %20 = arith.select %18, %12, %19 : vector<256x1xi1>, vector<256x1xf32>
    %c0_7 = arith.constant 0 : index
    %c0_8 = arith.constant 0 : index
    %21 = vector.load %arg4[%c0_7, %c0_8] : memref<256x256xbf16, #tpu.memory_space<vmem>>, vector<256x256xbf16>
    %cst_9 = arith.constant dense<0.000000e+00> : vector<256x256xf32>
    %22 = tpu.matmul %3, %21, %cst_9 {dimension_numbers = #tpu.dot_dimension_numbers<[1], [0], [0], [1], [0, 0, 1, 1], [], []>} : vector<256x256xbf16>, vector<256x256xbf16>, vector<256x256xf32> -> vector<256x256xf32>
    %c0_10 = arith.constant 0 : index
    %c0_11 = arith.constant 0 : index
    %23 = vector.load %arg5[%c0_10, %c0_11] : memref<1x256xf32, #tpu.memory_space<vmem>>, vector<1x256xf32>
    %24 = vector.broadcast %23 : vector<1x256xf32> to vector<256x256xf32>
    %25 = arith.addf %22, %24 : vector<256x256xf32>
    %c0_12 = arith.constant 0 : index
    %c0_13 = arith.constant 0 : index
    %26 = vector.load %arg7[%c0_12, %c0_13] : memref<1x1xf32, #tpu.memory_space<vmem>>, vector<1x1xf32>
    %cst_14 = arith.constant dense<0xFF800000> : vector<1xf32>
    %27 = vector.multi_reduction <maximumf>, %20, %cst_14 [0] : vector<256x1xf32> to vector<1xf32>
    %28 = vector.shape_cast %27 : vector<1xf32> to vector<1x1xf32>
    %29 = arith.maximumf %26, %28 : vector<1x1xf32>
    %30 = arith.subf %26, %29 : vector<1x1xf32>
    %31 = math.exp %30 : vector<1x1xf32>
    %32 = vector.broadcast %29 : vector<1x1xf32> to vector<256x1xf32>
    %33 = arith.subf %20, %32 : vector<256x1xf32>
    %34 = math.exp %33 : vector<256x1xf32>
    %c0_15 = arith.constant 0 : index
    %c0_16 = arith.constant 0 : index
    %35 = vector.load %arg8[%c0_15, %c0_16] : memref<1x1xf32, #tpu.memory_space<vmem>>, vector<1x1xf32>
    %36 = arith.mulf %31, %35 : vector<1x1xf32>
    %cst_17 = arith.constant dense<0.000000e+00> : vector<1xf32>
    %37 = vector.multi_reduction <add>, %34, %cst_17 [0] : vector<256x1xf32> to vector<1xf32>
    %38 = vector.shape_cast %37 : vector<1xf32> to vector<1x1xf32>
    %39 = arith.addf %36, %38 : vector<1x1xf32>
    %c0_18 = arith.constant 0 : index
    %c0_19 = arith.constant 0 : index
    %40 = vector.load %arg8[%c0_18, %c0_19] : memref<1x1xf32, #tpu.memory_space<vmem>>, vector<1x1xf32>
    tpu.vector_store %arg8[%c0_18, %c0_19], %39 {strides = array<i32>} : memref<1x1xf32, #tpu.memory_space<vmem>>, vector<1x1xf32>,
    %c0_20 = arith.constant 0 : index
    %c0_21 = arith.constant 0 : index
    %41 = vector.load %arg9[%c0_20, %c0_21] : memref<1x256xf32, #tpu.memory_space<vmem>>, vector<1x256xf32>
    %42 = vector.broadcast %31 : vector<1x1xf32> to vector<1x256xf32>
    %43 = arith.mulf %42, %41 : vector<1x256xf32>
    %44 = vector.broadcast %34 : vector<256x1xf32> to vector<256x256xf32>
    %45 = arith.mulf %44, %25 : vector<256x256xf32>
    %cst_22 = arith.constant dense<0.000000e+00> : vector<256xf32>
    %46 = vector.multi_reduction <add>, %45, %cst_22 [0] : vector<256x256xf32> to vector<256xf32>
    %47 = vector.shape_cast %46 : vector<256xf32> to vector<1x256xf32>
    %48 = arith.addf %43, %47 : vector<1x256xf32>
    %c0_23 = arith.constant 0 : index
    %c0_24 = arith.constant 0 : index
    %49 = vector.load %arg9[%c0_23, %c0_24] : memref<1x256xf32, #tpu.memory_space<vmem>>, vector<1x256xf32>
    tpu.vector_store %arg9[%c0_23, %c0_24], %48 {strides = array<i32>} : memref<1x256xf32, #tpu.memory_space<vmem>>, vector<1x256xf32>,
    %c0_25 = arith.constant 0 : index
    %c0_26 = arith.constant 0 : index
    %50 = vector.load %arg7[%c0_25, %c0_26] : memref<1x1xf32, #tpu.memory_space<vmem>>, vector<1x1xf32>
    tpu.vector_store %arg7[%c0_25, %c0_26], %29 {strides = array<i32>} : memref<1x1xf32, #tpu.memory_space<vmem>>, vector<1x1xf32>,
    %c7_i32 = arith.constant 7 : i32
    %51 = arith.cmpi eq, %arg0, %c7_i32 : i32
    %52 = arith.extui %51 : i1 to i32
    %c0_i32_27 = arith.constant 0 : i32
    %53 = arith.cmpi ne, %52, %c0_i32_27 : i32
    scf.if %53 {
      %c0_28 = arith.constant 0 : index
      %c0_29 = arith.constant 0 : index
      %54 = vector.load %arg9[%c0_28, %c0_29] : memref<1x256xf32, #tpu.memory_space<vmem>>, vector<1x256xf32>
      %c0_30 = arith.constant 0 : index
      %c0_31 = arith.constant 0 : index
      %55 = vector.load %arg8[%c0_30, %c0_31] : memref<1x1xf32, #tpu.memory_space<vmem>>, vector<1x1xf32>
      %56 = vector.broadcast %55 : vector<1x1xf32> to vector<1x256xf32>
      %57 = arith.divf %54, %56 : vector<1x256xf32>
      %c0_32 = arith.constant 0 : index
      %c0_33 = arith.constant 0 : index
      %58 = vector.load %arg6[%c0_32, %c0_33] : memref<1x256xf32, #tpu.memory_space<vmem>>, vector<1x256xf32>
      tpu.vector_store %arg6[%c0_32, %c0_33], %57 {strides = array<i32>} : memref<1x256xf32, #tpu.memory_space<vmem>>, vector<1x256xf32>,
    } else {
    }
    return
  }
  func.func @transform_0(%arg0: i32) -> (i32, i32) {
    %c0_i32 = arith.constant 0 : i32
    %c0_i32_0 = arith.constant 0 : i32
    return %arg0, %c0_i32 : i32, i32
  }
  func.func @transform_1(%arg0: i32) -> (i32, i32) {
    %c0_i32 = arith.constant 0 : i32
    %c0_i32_0 = arith.constant 0 : i32
    %c0_i32_1 = arith.constant 0 : i32
    return %c0_i32, %c0_i32_0 : i32, i32
  }
  func.func @transform_2(%arg0: i32) -> (i32, i32) {
    %c0_i32 = arith.constant 0 : i32
    %c0_i32_0 = arith.constant 0 : i32
    %c0_i32_1 = arith.constant 0 : i32
    return %c0_i32, %c0_i32_0 : i32, i32
  }
  func.func @transform_3(%arg0: i32) -> (i32, i32) {
    %c0_i32 = arith.constant 0 : i32
    %c0_i32_0 = arith.constant 0 : i32
    %c0_i32_1 = arith.constant 0 : i32
    return %c0_i32, %c0_i32_0 : i32, i32
  }
  func.func @transform_4(%arg0: i32) -> (i32, i32) {
    %c0_i32 = arith.constant 0 : i32
    %c0_i32_0 = arith.constant 0 : i32
    %c0_i32_1 = arith.constant 0 : i32
    return %c0_i32, %c0_i32_0 : i32, i32
  }
  func.func @transform_5(%arg0: i32) -> (i32, i32) {
    %c0_i32 = arith.constant 0 : i32
    %c0_i32_0 = arith.constant 0 : i32
    %c0_i32_1 = arith.constant 0 : i32
    return %c0_i32, %c0_i32_0 : i32, i32
  }
}

module attributes {stable_mosaic.version = 11 : i64} {
  func.func @_output_kernel(%arg0: i32, %arg1: memref<256x256xbf16, #tpu.memory_space<vmem>>, %arg2: memref<1x256xf32, #tpu.memory_space<vmem>>, %arg3: memref<256x256xbf16, #tpu.memory_space<vmem>>, %arg4: memref<1x256xf32, #tpu.memory_space<vmem>>, %arg5: memref<256x256xbf16, #tpu.memory_space<vmem>>, %arg6: memref<1x256xf32, #tpu.memory_space<vmem>>, %arg7: memref<256x256xf32, #tpu.memory_space<vmem>>) attributes {dimension_semantics = [#tpu.dimension_semantics<parallel>], iteration_bounds = array<i64: 8>, scalar_prefetch = 0 : i64, scratch_operands = 0 : i64, tpu.core_type = #tpu.core_type<tc>, window_params = [{transform_indices = @transform_0, window_bounds = array<i64: 256, 256>}, {pipeline_mode = #tpu.pipeline_mode<synchronous>, transform_indices = @transform_1, window_bounds = array<i64: 1, 256>}, {pipeline_mode = #tpu.pipeline_mode<synchronous>, transform_indices = @transform_2, window_bounds = array<i64: 256, 256>}, {pipeline_mode = #tpu.pipeline_mode<synchronous>, transform_indices = @transform_3, window_bounds = array<i64: 1, 256>}, {pipeline_mode = #tpu.pipeline_mode<synchronous>, transform_indices = @transform_4, window_bounds = array<i64: 256, 256>}, {pipeline_mode = #tpu.pipeline_mode<synchronous>, transform_indices = @transform_5, window_bounds = array<i64: 1, 256>}, {transform_indices = @transform_6, window_bounds = array<i64: 256, 256>}]} {
    %c0 = arith.constant 0 : index
    %c0_0 = arith.constant 0 : index
    %0 = vector.load %arg1[%c0, %c0_0] : memref<256x256xbf16, #tpu.memory_space<vmem>>, vector<256x256xbf16>
    %c0_1 = arith.constant 0 : index
    %c0_2 = arith.constant 0 : index
    %1 = vector.load %arg3[%c0_1, %c0_2] : memref<256x256xbf16, #tpu.memory_space<vmem>>, vector<256x256xbf16>
    %cst = arith.constant dense<0.000000e+00> : vector<256x256xf32>
    %2 = tpu.matmul %0, %1, %cst {dimension_numbers = #tpu.dot_dimension_numbers<[1], [0], [0], [1], [0, 0, 1, 1], [], []>} : vector<256x256xbf16>, vector<256x256xbf16>, vector<256x256xf32> -> vector<256x256xf32>
    %c0_3 = arith.constant 0 : index
    %c0_4 = arith.constant 0 : index
    %3 = vector.load %arg4[%c0_3, %c0_4] : memref<1x256xf32, #tpu.memory_space<vmem>>, vector<1x256xf32>
    %4 = vector.broadcast %3 : vector<1x256xf32> to vector<256x256xf32>
    %5 = arith.addf %2, %4 : vector<256x256xf32>
    %c0_5 = arith.constant 0 : index
    %c0_6 = arith.constant 0 : index
    %6 = vector.load %arg2[%c0_5, %c0_6] : memref<1x256xf32, #tpu.memory_space<vmem>>, vector<1x256xf32>
    %7 = vector.broadcast %6 : vector<1x256xf32> to vector<256x256xf32>
    %8 = arith.mulf %5, %7 : vector<256x256xf32>
    %9 = arith.truncf %8 : vector<256x256xf32> to vector<256x256xbf16>
    %c0_7 = arith.constant 0 : index
    %c0_8 = arith.constant 0 : index
    %10 = vector.load %arg5[%c0_7, %c0_8] : memref<256x256xbf16, #tpu.memory_space<vmem>>, vector<256x256xbf16>
    %cst_9 = arith.constant dense<0.000000e+00> : vector<256x256xf32>
    %11 = tpu.matmul %9, %10, %cst_9 {dimension_numbers = #tpu.dot_dimension_numbers<[1], [0], [0], [1], [0, 0, 1, 1], [], []>} : vector<256x256xbf16>, vector<256x256xbf16>, vector<256x256xf32> -> vector<256x256xf32>
    %c0_10 = arith.constant 0 : index
    %c0_11 = arith.constant 0 : index
    %12 = vector.load %arg6[%c0_10, %c0_11] : memref<1x256xf32, #tpu.memory_space<vmem>>, vector<1x256xf32>
    %13 = vector.broadcast %12 : vector<1x256xf32> to vector<256x256xf32>
    %14 = arith.addf %11, %13 : vector<256x256xf32>
    %c0_12 = arith.constant 0 : index
    %c0_13 = arith.constant 0 : index
    %15 = vector.load %arg7[%c0_12, %c0_13] : memref<256x256xf32, #tpu.memory_space<vmem>>, vector<256x256xf32>
    tpu.vector_store %arg7[%c0_12, %c0_13], %14 {strides = array<i32>} : memref<256x256xf32, #tpu.memory_space<vmem>>, vector<256x256xf32>,
    return
  }
  func.func @transform_0(%arg0: i32) -> (i32, i32) {
    %c0_i32 = arith.constant 0 : i32
    %c0_i32_0 = arith.constant 0 : i32
    return %arg0, %c0_i32 : i32, i32
  }
  func.func @transform_1(%arg0: i32) -> (i32, i32) {
    %c0_i32 = arith.constant 0 : i32
    %c0_i32_0 = arith.constant 0 : i32
    %c0_i32_1 = arith.constant 0 : i32
    return %c0_i32, %c0_i32_0 : i32, i32
  }
  func.func @transform_2(%arg0: i32) -> (i32, i32) {
    %c0_i32 = arith.constant 0 : i32
    %c0_i32_0 = arith.constant 0 : i32
    %c0_i32_1 = arith.constant 0 : i32
    return %c0_i32, %c0_i32_0 : i32, i32
  }
  func.func @transform_3(%arg0: i32) -> (i32, i32) {
    %c0_i32 = arith.constant 0 : i32
    %c0_i32_0 = arith.constant 0 : i32
    %c0_i32_1 = arith.constant 0 : i32
    return %c0_i32, %c0_i32_0 : i32, i32
  }
  func.func @transform_4(%arg0: i32) -> (i32, i32) {
    %c0_i32 = arith.constant 0 : i32
    %c0_i32_0 = arith.constant 0 : i32
    %c0_i32_1 = arith.constant 0 : i32
    return %c0_i32, %c0_i32_0 : i32, i32
  }
  func.func @transform_5(%arg0: i32) -> (i32, i32) {
    %c0_i32 = arith.constant 0 : i32
    %c0_i32_0 = arith.constant 0 : i32
    %c0_i32_1 = arith.constant 0 : i32
    return %c0_i32, %c0_i32_0 : i32, i32
  }
  func.func @transform_6(%arg0: i32) -> (i32, i32) {
    %c0_i32 = arith.constant 0 : i32
    %c0_i32_0 = arith.constant 0 : i32
    return %arg0, %c0_i32 : i32, i32
  }
}

</mosaic_0001>

<llo_original>
// kernel: mobilevitv2_attention.2
$region0: #{mobilevitv2_attention.2}
  #allocation0 [shape = 'u32[]', space=smem, size = 0x4, offset = 0x4, fixed_abs, tag = 'smem constant byte address 0x4 - core index']
  #allocation1 [shape = 'u32[144,128]{1,0:T(1,128)}', space=vmem, size = 0x12000, scoped, tag = 'internal scratch']
  #allocation2 [shape = 'f32[1,1]{1,0:T(1,128)}', space=vmem, size = 0x200, scoped, tag = 'scratch operand']
  #allocation3 [shape = 'f32[1,1]{1,0:T(1,128)}', space=vmem, size = 0x200, scoped, tag = 'scratch operand']
  #allocation4 [shape = 'f32[1,256]{1,0:T(1,128)}', space=vmem, size = 0x400, scoped, tag = 'scratch operand']
  #allocation5 [shape = 'f32[1,1]{1,0:T(1,128)S(1)}', space=vmem, size = 0x200, scoped, tag = 'scoped memory for mobilevitv2_attention.2']
  %s0 = inlined_call_operand.vmem [shape: bf16[2048,256], index: 0, kind: input, shape index: {}]
  %s1 = inlined_call_operand.vmem [shape: f32[1,256], index: 1, kind: input, shape index: {}]
  %s2 = inlined_call_operand.<no memory space> [shape: f32[1,1], index: 2, kind: input, shape index: {}]
  %s3 = inlined_call_operand.vmem [shape: bf16[256,256], index: 3, kind: input, shape index: {}]
  %s4 = inlined_call_operand.vmem [shape: f32[1,256], index: 4, kind: input, shape index: {}]
  %s5 = inlined_call_operand.vmem [shape: f32[1,256], index: 5, kind: output, shape index: {}]
  %s6 = sld [smem:[#allocation0]]
  $region61: #{mobilevitv2_attention.2} parent=0
    _
  %s8 = ssub.s32 1, %s6
  %s9 = scalar_select 0, %s8, %s6
  %v10 = vstv %s2
  %11 = vst [vmem:[#allocation5] sm:$0x1] %v10
  loop: start=0, step=1, limit=10
  $region2: #{mobilevitv2_attention.2} parent=0 // loop_pre_header
    _
  $region3: #{mobilevitv2_attention.2} parent=0 // loop_header
    %s13 = sphi 0, %s17
    %p14 = scmp.ge.s32.totalorder %s13, 10
    %s23 = sphi 0, %s25
    %s26 = sphi 0, %s23
    %s27 = sphi 0, %s26
    %s43 = sphi 0, %s27
    %s47 = sphi 0, %s47
    %s49 = sphi 0, %s47
    %s50 = sphi 0, %s49
    %s64 = sphi 0, %s50
    %s68 = sphi 0, %s68
    %s70 = sphi 0, %s68
    %s71 = sphi 0, %s70
    %s85 = sphi 0, %s71
    %s89 = sphi 0, %s89
    %s91 = sphi 0, %s89
    %s92 = sphi 0, %s91
    %s106 = sphi 0, %s92
    %s110 = sphi 0, %s110
    %s112 = sphi 0, %s110
    %s113 = sphi 0, %s112
    %s127 = sphi 0, %s113
    %s131 = sphi 0, %s131
    %s133 = sphi 0, %s131
    %s134 = sphi 0, %s133
    %s148 = sphi 0, %s134
  $region4: #{mobilevitv2_attention.2} parent=0 // loop_header_branch
    %16 = sbr.rel (%p14) target = $region8
  $region5: #{mobilevitv2_attention.2} parent=0 // loop_body
    %s18 = ssub.s32 %s13, 1
    %s19 = ssub.s32 %s13, 2
    %s20 = sadd.s32 %s13, 1
    %s21 = ssub.s32 %s13, %s20
    %p22 = scmp.eq.s32.totalorder %s21, 0
    %s24 = sadd.s32 %s23, 1
    %s25 = scalar_select %p22, %s23, %s24
    %p28 = pneg %p22
    %p29 = scmp.eq.s32.totalorder %s13, 7
    %p30 = por %p28, %p29
    %p31 = scmp.ne.s32.totalorder %s23, %s26
    %p32 = scmp.eq.s32.totalorder %s13, 0
    %p33 = por %p31, %p32
    %p34 = scmp.ne.s32.totalorder %s23, %s26
    %p35 = scmp.eq.s32.totalorder %s18, 7
    %p36 = por %p34, %p35
    %p37 = scmp.ne.s32.totalorder %s26, %s27
    %p38 = scmp.eq.s32.totalorder %s18, 0
    %p39 = por %p37, %p38
    %p40 = scmp.ne.s32.totalorder %s26, %s27
    %p41 = scmp.eq.s32.totalorder %s19, 7
    %p42 = por %p40, %p41
    %p44 = scmp.ne.s32.totalorder %s27, %s43
    %p45 = scmp.eq.s32.totalorder %s19, 0
    %p46 = por %p44, %p45
    %s48 = sadd.s32 %s47, 1
    %p51 = scmp.eq.s32.totalorder %s13, 7
    %p52 = scmp.ne.s32.totalorder %s47, %s49
    %p53 = scmp.eq.s32.totalorder %s13, 0
    %p54 = por %p52, %p53
    %p55 = scmp.ne.s32.totalorder %s47, %s49
    %p56 = scmp.eq.s32.totalorder %s18, 7
    %p57 = por %p55, %p56
    %p58 = scmp.ne.s32.totalorder %s49, %s50
    %p59 = scmp.eq.s32.totalorder %s18, 0
    %p60 = por %p58, %p59
    %p61 = scmp.ne.s32.totalorder %s49, %s50
    %p62 = scmp.eq.s32.totalorder %s19, 7
    %p63 = por %p61, %p62
    %p65 = scmp.ne.s32.totalorder %s50, %s64
    %p66 = scmp.eq.s32.totalorder %s19, 0
    %p67 = por %p65, %p66
    %s69 = sadd.s32 %s68, 1
    %p72 = scmp.eq.s32.totalorder %s13, 7
    %p73 = scmp.ne.s32.totalorder %s68, %s70
    %p74 = scmp.eq.s32.totalorder %s13, 0
    %p75 = por %p73, %p74
    %p76 = scmp.ne.s32.totalorder %s68, %s70
    %p77 = scmp.eq.s32.totalorder %s18, 7
    %p78 = por %p76, %p77
    %p79 = scmp.ne.s32.totalorder %s70, %s71
    %p80 = scmp.eq.s32.totalorder %s18, 0
    %p81 = por %p79, %p80
    %p82 = scmp.ne.s32.totalorder %s70, %s71
    %p83 = scmp.eq.s32.totalorder %s19, 7
    %p84 = por %p82, %p83
    %p86 = scmp.ne.s32.totalorder %s71, %s85
    %p87 = scmp.eq.s32.totalorder %s19, 0
    %p88 = por %p86, %p87
    %s90 = sadd.s32 %s89, 1
    %p93 = scmp.eq.s32.totalorder %s13, 7
    %p94 = scmp.ne.s32.totalorder %s89, %s91
    %p95 = scmp.eq.s32.totalorder %s13, 0
    %p96 = por %p94, %p95
    %p97 = scmp.ne.s32.totalorder %s89, %s91
    %p98 = scmp.eq.s32.totalorder %s18, 7
    %p99 = por %p97, %p98
    %p100 = scmp.ne.s32.totalorder %s91, %s92
    %p101 = scmp.eq.s32.totalorder %s18, 0
    %p102 = por %p100, %p101
    %p103 = scmp.ne.s32.totalorder %s91, %s92
    %p104 = scmp.eq.s32.totalorder %s19, 7
    %p105 = por %p103, %p104
    %p107 = scmp.ne.s32.totalorder %s92, %s106
    %p108 = scmp.eq.s32.totalorder %s19, 0
    %p109 = por %p107, %p108
    %s111 = sadd.s32 %s110, 1
    %p114 = scmp.eq.s32.totalorder %s13, 7
    %p115 = scmp.ne.s32.totalorder %s110, %s112
    %p116 = scmp.eq.s32.totalorder %s13, 0
    %p117 = por %p115, %p116
    %p118 = scmp.ne.s32.totalorder %s110, %s112
    %p119 = scmp.eq.s32.totalorder %s18, 7
    %p120 = por %p118, %p119
    %p121 = scmp.ne.s32.totalorder %s112, %s113
    %p122 = scmp.eq.s32.totalorder %s18, 0
    %p123 = por %p121, %p122
    %p124 = scmp.ne.s32.totalorder %s112, %s113
    %p125 = scmp.eq.s32.totalorder %s19, 7
    %p126 = por %p124, %p125
    %p128 = scmp.ne.s32.totalorder %s113, %s127
    %p129 = scmp.eq.s32.totalorder %s19, 0
    %p130 = por %p128, %p129
    %s132 = sadd.s32 %s131, 1
    %p135 = scmp.eq.s32.totalorder %s13, 7
    %p136 = scmp.ne.s32.totalorder %s131, %s133
    %p137 = scmp.eq.s32.totalorder %s13, 0
    %p138 = por %p136, %p137
    %p139 = scmp.ne.s32.totalorder %s131, %s133
    %p140 = scmp.eq.s32.totalorder %s18, 7
    %p141 = por %p139, %p140
    %p142 = scmp.ne.s32.totalorder %s133, %s134
    %p143 = scmp.eq.s32.totalorder %s18, 0
    %p144 = por %p142, %p143
    %p145 = scmp.ne.s32.totalorder %s133, %s134
    %p146 = scmp.eq.s32.totalorder %s19, 7
    %p147 = por %p145, %p146
    %p149 = scmp.ne.s32.totalorder %s134, %s148
    %p150 = scmp.eq.s32.totalorder %s19, 0
    %p151 = por %p149, %p150
    %p152 = scmp.le.s32.totalorder 1, %s13
    %p153 = scmp.lt.s32.totalorder %s13, 9
    %p154 = pnand %p152, %p153
    %p155 = pneg %p154
    // Predicated region
    $region9: #{mobilevitv2_attention.2} parent=5 // pred_check
      _
    $region10: #{mobilevitv2_attention.2} parent=5 // pred_check_branch
      %157 = sbr.rel (%p154) target = $region12
    $region11: #{mobilevitv2_attention.2} parent=5 // pred_region
      %s158 = ssub.s32 %s13, 1
      // Predicated region
      $region13: #{mobilevitv2_attention.2} parent=11 // pred_check
        %p159 = pneg %p60
      $region14: #{mobilevitv2_attention.2} parent=11 // pred_check_branch
        %161 = sbr.rel (%p159) target = $region16
      $region15: #{mobilevitv2_attention.2} parent=11 // pred_region
        _
      $region16: #{mobilevitv2_attention.2} parent=11 // pred_fallthru
        _
      // Predicated region
      $region17: #{mobilevitv2_attention.2} parent=11 // pred_check
        %p162 = pneg %p81
      $region18: #{mobilevitv2_attention.2} parent=11 // pred_check_branch
        %164 = sbr.rel (%p162) target = $region20
      $region19: #{mobilevitv2_attention.2} parent=11 // pred_region
        _
      $region20: #{mobilevitv2_attention.2} parent=11 // pred_fallthru
        _
      // Predicated region
      $region21: #{mobilevitv2_attention.2} parent=11 // pred_check
        %p165 = pneg %p102
      $region22: #{mobilevitv2_attention.2} parent=11 // pred_check_branch
        %167 = sbr.rel (%p165) target = $region24
      $region23: #{mobilevitv2_attention.2} parent=11 // pred_region
        _
      $region24: #{mobilevitv2_attention.2} parent=11 // pred_fallthru
        _
      // Predicated region
      $region25: #{mobilevitv2_attention.2} parent=11 // pred_check
        %p168 = pneg %p123
      $region26: #{mobilevitv2_attention.2} parent=11 // pred_check_branch
        %170 = sbr.rel (%p168) target = $region28
      $region27: #{mobilevitv2_attention.2} parent=11 // pred_region
        _
      $region28: #{mobilevitv2_attention.2} parent=11 // pred_fallthru
        _
    $region12: #{mobilevitv2_attention.2} parent=5 // pred_fallthru
      _
    %p171 = scmp.lt.s32.totalorder %s13, 8
    // Predicated region
    $region29: #{mobilevitv2_attention.2} parent=5 // pred_check
      %p172 = pneg %p171
    $region30: #{mobilevitv2_attention.2} parent=5 // pred_check_branch
      %174 = sbr.rel (%p172) target = $region32
    $region31: #{mobilevitv2_attention.2} parent=5 // pred_region
      // Predicated region
      $region33: #{mobilevitv2_attention.2} parent=31 // pred_check
        %p175 = pneg %p33
      $region34: #{mobilevitv2_attention.2} parent=31 // pred_check_branch
        %177 = sbr.rel (%p175) target = $region36
      $region35: #{mobilevitv2_attention.2} parent=31 // pred_region
        %s178 = smul.u32 32, %s13
        %p179 = scmp.lt.s32.totalorder %s178, 255
        %s180 = scalar_select %p179, %s178, 255
        %s181 = smul.addr %s180, 2
        %s182 = smul.addr %s181, 4
        %s183 = scalar_lea.vmem %s0, %s182
        %s184 = smul.u32 32, %s13
      $region36: #{mobilevitv2_attention.2} parent=31 // pred_fallthru
        _
    $region32: #{mobilevitv2_attention.2} parent=5 // pred_fallthru
      _
    %p185 = scmp.le.s32.totalorder 1, %s13
    %p186 = scmp.lt.s32.totalorder %s13, 9
    %p187 = pnand %p185, %p186
    %p188 = pneg %p187
    // Predicated region
    $region37: #{mobilevitv2_attention.2} parent=5 // pred_check
      _
    $region38: #{mobilevitv2_attention.2} parent=5 // pred_check_branch
      %190 = sbr.rel (%p187) target = $region40
    $region39: #{mobilevitv2_attention.2} parent=5 // pred_region
      %s191 = ssub.s32 %s13, 1
      %s192 = smul.u32 32, %s18
      %p193 = scmp.lt.s32.totalorder %s192, 255
      %s194 = scalar_select %p193, %s192, 255
      %s195 = smul.addr %s194, 2
      %s196 = smul.addr %s195, 4
      %s197 = scalar_lea.vmem %s0, %s196
      %p198 = pneg %p39
      %p199 = pneg %p36
      %p200 = pneg %p60
      %p201 = pneg %p57
      %p202 = pneg %p81
      %p203 = pneg %p78
      %p204 = pneg %p102
      %p205 = pneg %p99
      %p206 = pneg %p123
      %p207 = pneg %p120
      %p208 = pneg %p144
      %p209 = pneg %p141
      %s210 = smul.u32 32, %s18
      %p211 = scmp.lt.s32.totalorder %s210, 255
      %s212 = scalar_select %p211, %s210, 255
      %s213 = smul.addr %s212, 2
      %s214 = smul.addr %s213, 4
      %s215 = scalar_lea.vmem %s0, %s214
      %s216 = smul.u32 32, %s18
      %p217 = scmp.eq.s32.totalorder %s18, 0
      // Predicated region
      $region41: #{mobilevitv2_attention.2} parent=39 // pred_check
        %p218 = pneg %p217
      $region42: #{mobilevitv2_attention.2} parent=39 // pred_check_branch
        %220 = sbr.rel (%p218) target = $region44
      $region43: #{mobilevitv2_attention.2} parent=39 // pred_region
        %vm221 = vcmask 0
        %222 = vst.msk [vmem:[#allocation2] sm:$0x1] %vm221, -inf
        %223 = vst.msk [vmem:[#allocation3] sm:$0x1] %vm221, 0.0
        %v224 = vlaneseq
        %vm225 = vcmp.ge.s32.totalorder %v224, 0
        %vm226 = vcmp.lt.s32.totalorder %v224, 256
        %vm227 = vmand %vm225, %vm226
        %228 = vst.msk [vmem:[#allocation4] sm:$0x3] %vm227, 0.0
      $region44: #{mobilevitv2_attention.2} parent=39 // pred_fallthru
        _
      %v229 = vld [vmem:[%s215] sm:$0xff]
      %v230 = vld [vmem:[%s215 + $0x8] sm:$0xff]
      %v231 = vld [vmem:[%s215 + $0x10] sm:$0xff]
      %v232 = vld [vmem:[%s215 + $0x18] sm:$0xff]
      %v233 = vld [vmem:[%s215 + $0x20] sm:$0xff]
      %v234 = vld [vmem:[%s215 + $0x28] sm:$0xff]
      %v235 = vld [vmem:[%s215 + $0x30] sm:$0xff]
      %v236 = vld [vmem:[%s215 + $0x38] sm:$0xff]
      %v237 = vld [vmem:[%s215 + $0x40] sm:$0xff]
      %v238 = vld [vmem:[%s215 + $0x48] sm:$0xff]
      %v239 = vld [vmem:[%s215 + $0x50] sm:$0xff]
      %v240 = vld [vmem:[%s215 + $0x58] sm:$0xff]
      %v241 = vld [vmem:[%s215 + $0x60] sm:$0xff]
      %v242 = vld [vmem:[%s215 + $0x68] sm:$0xff]
      %v243 = vld [vmem:[%s215 + $0x70] sm:$0xff]
      %v244 = vld [vmem:[%s215 + $0x78] sm:$0xff]
      %v245 = vld [vmem:[%s215 + $0x80] sm:$0xff]
      %v246 = vld [vmem:[%s215 + $0x88] sm:$0xff]
      %v247 = vld [vmem:[%s215 + $0x90] sm:$0xff]
      %v248 = vld [vmem:[%s215 + $0x98] sm:$0xff]
      %v249 = vld [vmem:[%s215 + $0xa0] sm:$0xff]
      %v250 = vld [vmem:[%s215 + $0xa8] sm:$0xff]
      %v251 = vld [vmem:[%s215 + $0xb0] sm:$0xff]
      %v252 = vld [vmem:[%s215 + $0xb8] sm:$0xff]
      %v253 = vld [vmem:[%s215 + $0xc0] sm:$0xff]
      %v254 = vld [vmem:[%s215 + $0xc8] sm:$0xff]
      %v255 = vld [vmem:[%s215 + $0xd0] sm:$0xff]
      %v256 = vld [vmem:[%s215 + $0xd8] sm:$0xff]
      %v257 = vld [vmem:[%s215 + $0xe0] sm:$0xff]
      %v258 = vld [vmem:[%s215 + $0xe8] sm:$0xff]
      %v259 = vld [vmem:[%s215 + $0xf0] sm:$0xff]
      %v260 = vld [vmem:[%s215 + $0xf8] sm:$0xff]
      %v261 = vunpack.c.l.bf16 %v229
      %v262 = vunpack.c.h.bf16 %v229
      %v263 = vunpack.c.l.bf16 %v230
      %v264 = vunpack.c.h.bf16 %v230
      %v265 = vunpack.c.l.bf16 %v231
      %v266 = vunpack.c.h.bf16 %v231
      %v267 = vunpack.c.l.bf16 %v232
      %v268 = vunpack.c.h.bf16 %v232
      %v269 = vunpack.c.l.bf16 %v233
      %v270 = vunpack.c.h.bf16 %v233
      %v271 = vunpack.c.l.bf16 %v234
      %v272 = vunpack.c.h.bf16 %v234
      %v273 = vunpack.c.l.bf16 %v235
      %v274 = vunpack.c.h.bf16 %v235
      %v275 = vunpack.c.l.bf16 %v236
      %v276 = vunpack.c.h.bf16 %v236
      %v277 = vunpack.c.l.bf16 %v237
      %v278 = vunpack.c.h.bf16 %v237
      %v279 = vunpack.c.l.bf16 %v238
      %v280 = vunpack.c.h.bf16 %v238
      %v281 = vunpack.c.l.bf16 %v239
      %v282 = vunpack.c.h.bf16 %v239
      %v283 = vunpack.c.l.bf16 %v240
      %v284 = vunpack.c.h.bf16 %v240
      %v285 = vunpack.c.l.bf16 %v241
      %v286 = vunpack.c.h.bf16 %v241
      %v287 = vunpack.c.l.bf16 %v242
      %v288 = vunpack.c.h.bf16 %v242
      %v289 = vunpack.c.l.bf16 %v243
      %v290 = vunpack.c.h.bf16 %v243
      %v291 = vunpack.c.l.bf16 %v244
      %v292 = vunpack.c.h.bf16 %v244
      %v293 = vunpack.c.l.bf16 %v245
      %v294 = vunpack.c.h.bf16 %v245
      %v295 = vunpack.c.l.bf16 %v246
      %v296 = vunpack.c.h.bf16 %v246
      %v297 = vunpack.c.l.bf16 %v247
      %v298 = vunpack.c.h.bf16 %v247
      %v299 = vunpack.c.l.bf16 %v248
      %v300 = vunpack.c.h.bf16 %v248
      %v301 = vunpack.c.l.bf16 %v249
      %v302 = vunpack.c.h.bf16 %v249
      %v303 = vunpack.c.l.bf16 %v250
      %v304 = vunpack.c.h.bf16 %v250
      %v305 = vunpack.c.l.bf16 %v251
      %v306 = vunpack.c.h.bf16 %v251
      %v307 = vunpack.c.l.bf16 %v252
      %v308 = vunpack.c.h.bf16 %v252
      %v309 = vunpack.c.l.bf16 %v253
      %v310 = vunpack.c.h.bf16 %v253
      %v311 = vunpack.c.l.bf16 %v254
      %v312 = vunpack.c.h.bf16 %v254
      %v313 = vunpack.c.l.bf16 %v255
      %v314 = vunpack.c.h.bf16 %v255
      %v315 = vunpack.c.l.bf16 %v256
      %v316 = vunpack.c.h.bf16 %v256
      %v317 = vunpack.c.l.bf16 %v257
      %v318 = vunpack.c.h.bf16 %v257
      %v319 = vunpack.c.l.bf16 %v258
      %v320 = vunpack.c.h.bf16 %v258
      %v321 = vunpack.c.l.bf16 %v259
      %v322 = vunpack.c.h.bf16 %v259
      %v323 = vunpack.c.l.bf16 %v260
      %v324 = vunpack.c.h.bf16 %v260
      %v325 = vld [vmem:[%s1] sm:$0x3]
      %v327 = vlaneseq
      %v328 = vshrl.u32 %v327, 7
      %v329 = vsub.s32 0, %v328
      %v330 = vrot.slane %v325, %v329
      %v331 = vlaneseq
      %v332 = vshrl.u32 %v331, 7
      %v333 = vsub.s32 1, %v332
      %v334 = vrot.slane %v325, %v333
      %v337 = vmul.f32 %v261, %v330
      %v338 = vmul.f32 %v262, %v334
      %v339 = vmul.f32 %v263, %v330
      %v340 = vmul.f32 %v264, %v334
      %v341 = vmul.f32 %v265, %v330
      %v342 = vmul.f32 %v266, %v334
      %v343 = vmul.f32 %v267, %v330
      %v344 = vmul.f32 %v268, %v334
      %v345 = vmul.f32 %v269, %v330
      %v346 = vmul.f32 %v270, %v334
      %v347 = vmul.f32 %v271, %v330
      %v348 = vmul.f32 %v272, %v334
      %v349 = vmul.f32 %v273, %v330
      %v350 = vmul.f32 %v274, %v334
      %v351 = vmul.f32 %v275, %v330
      %v352 = vmul.f32 %v276, %v334
      %v353 = vmul.f32 %v277, %v330
      %v354 = vmul.f32 %v278, %v334
      %v355 = vmul.f32 %v279, %v330
      %v356 = vmul.f32 %v280, %v334
      %v357 = vmul.f32 %v281, %v330
      %v358 = vmul.f32 %v282, %v334
      %v359 = vmul.f32 %v283, %v330
      %v360 = vmul.f32 %v284, %v334
      %v361 = vmul.f32 %v285, %v330
      %v362 = vmul.f32 %v286, %v334
      %v363 = vmul.f32 %v287, %v330
      %v364 = vmul.f32 %v288, %v334
      %v365 = vmul.f32 %v289, %v330
      %v366 = vmul.f32 %v290, %v334
      %v367 = vmul.f32 %v291, %v330
      %v368 = vmul.f32 %v292, %v334
      %v369 = vmul.f32 %v293, %v330
      %v370 = vmul.f32 %v294, %v334
      %v371 = vmul.f32 %v295, %v330
      %v372 = vmul.f32 %v296, %v334
      %v373 = vmul.f32 %v297, %v330
      %v374 = vmul.f32 %v298, %v334
      %v375 = vmul.f32 %v299, %v330
      %v376 = vmul.f32 %v300, %v334
      %v377 = vmul.f32 %v301, %v330
      %v378 = vmul.f32 %v302, %v334
      %v379 = vmul.f32 %v303, %v330
      %v380 = vmul.f32 %v304, %v334
      %v381 = vmul.f32 %v305, %v330
      %v382 = vmul.f32 %v306, %v334
      %v383 = vmul.f32 %v307, %v330
      %v384 = vmul.f32 %v308, %v334
      %v385 = vmul.f32 %v309, %v330
      %v386 = vmul.f32 %v310, %v334
      %v387 = vmul.f32 %v311, %v330
      %v388 = vmul.f32 %v312, %v334
      %v389 = vmul.f32 %v313, %v330
      %v390 = vmul.f32 %v314, %v334
      %v391 = vmul.f32 %v315, %v330
      %v392 = vmul.f32 %v316, %v334
      %v393 = vmul.f32 %v317, %v330
      %v394 = vmul.f32 %v318, %v334
      %v395 = vmul.f32 %v319, %v330
      %v396 = vmul.f32 %v320, %v334
      %v397 = vmul.f32 %v321, %v330
      %v398 = vmul.f32 %v322, %v334
      %v399 = vmul.f32 %v323, %v330
      %v400 = vmul.f32 %v324, %v334
      %v401 = vadd.f32 %v337, %v338
      %402 = vadd.xlane.f32.xlu0 %v401
      %v403 = vpop.xlane.xlu0 %402
      %v404 = vadd.f32 %v339, %v340
      %405 = vadd.xlane.f32.xlu0 %v404
      %v406 = vpop.xlane.xlu0 %405
      %v407 = vadd.f32 %v341, %v342
      %408 = vadd.xlane.f32.xlu0 %v407
      %v409 = vpop.xlane.xlu0 %408
      %v410 = vadd.f32 %v343, %v344
      %411 = vadd.xlane.f32.xlu0 %v410
      %v412 = vpop.xlane.xlu0 %411
      %v413 = vadd.f32 %v345, %v346
      %414 = vadd.xlane.f32.xlu0 %v413
      %v415 = vpop.xlane.xlu0 %414
      %v416 = vadd.f32 %v347, %v348
      %417 = vadd.xlane.f32.xlu0 %v416
      %v418 = vpop.xlane.xlu0 %417
      %v419 = vadd.f32 %v349, %v350
      %420 = vadd.xlane.f32.xlu0 %v419
      %v421 = vpop.xlane.xlu0 %420
      %v422 = vadd.f32 %v351, %v352
      %423 = vadd.xlane.f32.xlu0 %v422
      %v424 = vpop.xlane.xlu0 %423
      %v425 = vadd.f32 %v353, %v354
      %426 = vadd.xlane.f32.xlu0 %v425
      %v427 = vpop.xlane.xlu0 %426
      %v428 = vadd.f32 %v355, %v356
      %429 = vadd.xlane.f32.xlu0 %v428
      %v430 = vpop.xlane.xlu0 %429
      %v431 = vadd.f32 %v357, %v358
      %432 = vadd.xlane.f32.xlu0 %v431
      %v433 = vpop.xlane.xlu0 %432
      %v434 = vadd.f32 %v359, %v360
      %435 = vadd.xlane.f32.xlu0 %v434
      %v436 = vpop.xlane.xlu0 %435
      %v437 = vadd.f32 %v361, %v362
      %438 = vadd.xlane.f32.xlu0 %v437
      %v439 = vpop.xlane.xlu0 %438
      %v440 = vadd.f32 %v363, %v364
      %441 = vadd.xlane.f32.xlu0 %v440
      %v442 = vpop.xlane.xlu0 %441
      %v443 = vadd.f32 %v365, %v366
      %444 = vadd.xlane.f32.xlu0 %v443
      %v445 = vpop.xlane.xlu0 %444
      %v446 = vadd.f32 %v367, %v368
      %447 = vadd.xlane.f32.xlu0 %v446
      %v448 = vpop.xlane.xlu0 %447
      %v449 = vadd.f32 %v369, %v370
      %450 = vadd.xlane.f32.xlu0 %v449
      %v451 = vpop.xlane.xlu0 %450
      %v452 = vadd.f32 %v371, %v372
      %453 = vadd.xlane.f32.xlu0 %v452
      %v454 = vpop.xlane.xlu0 %453
      %v455 = vadd.f32 %v373, %v374
      %456 = vadd.xlane.f32.xlu0 %v455
      %v457 = vpop.xlane.xlu0 %456
      %v458 = vadd.f32 %v375, %v376
      %459 = vadd.xlane.f32.xlu0 %v458
      %v460 = vpop.xlane.xlu0 %459
      %v461 = vadd.f32 %v377, %v378
      %462 = vadd.xlane.f32.xlu0 %v461
      %v463 = vpop.xlane.xlu0 %462
      %v464 = vadd.f32 %v379, %v380
      %465 = vadd.xlane.f32.xlu0 %v464
      %v466 = vpop.xlane.xlu0 %465
      %v467 = vadd.f32 %v381, %v382
      %468 = vadd.xlane.f32.xlu0 %v467
      %v469 = vpop.xlane.xlu0 %468
      %v470 = vadd.f32 %v383, %v384
      %471 = vadd.xlane.f32.xlu0 %v470
      %v472 = vpop.xlane.xlu0 %471
      %v473 = vadd.f32 %v385, %v386
      %474 = vadd.xlane.f32.xlu0 %v473
      %v475 = vpop.xlane.xlu0 %474
      %v476 = vadd.f32 %v387, %v388
      %477 = vadd.xlane.f32.xlu0 %v476
      %v478 = vpop.xlane.xlu0 %477
      %v479 = vadd.f32 %v389, %v390
      %480 = vadd.xlane.f32.xlu0 %v479
      %v481 = vpop.xlane.xlu0 %480
      %v482 = vadd.f32 %v391, %v392
      %483 = vadd.xlane.f32.xlu0 %v482
      %v484 = vpop.xlane.xlu0 %483
      %v485 = vadd.f32 %v393, %v394
      %486 = vadd.xlane.f32.xlu0 %v485
      %v487 = vpop.xlane.xlu0 %486
      %v488 = vadd.f32 %v395, %v396
      %489 = vadd.xlane.f32.xlu0 %v488
      %v490 = vpop.xlane.xlu0 %489
      %v491 = vadd.f32 %v397, %v398
      %492 = vadd.xlane.f32.xlu0 %v491
      %v493 = vpop.xlane.xlu0 %492
      %v494 = vadd.f32 %v399, %v400
      %495 = vadd.xlane.f32.xlu0 %v494
      %v496 = vpop.xlane.xlu0 %495
      %v497 = vld [vmem:[#allocation5] sm:$0x1]
      %v499 = vlaneseq
      %v500 = vshrl.u32 %v499, 7
      %v501 = vsub.s32 0, %v500
      %v502 = vrot.slane %v497, %v501
      %v504 = vadd.f32 %v403, %v502
      %v505 = vadd.f32 %v406, %v502
      %v506 = vadd.f32 %v409, %v502
      %v507 = vadd.f32 %v412, %v502
      %v508 = vadd.f32 %v415, %v502
      %v509 = vadd.f32 %v418, %v502
      %v510 = vadd.f32 %v421, %v502
      %v511 = vadd.f32 %v424, %v502
      %v512 = vadd.f32 %v427, %v502
      %v513 = vadd.f32 %v430, %v502
      %v514 = vadd.f32 %v433, %v502
      %v515 = vadd.f32 %v436, %v502
      %v516 = vadd.f32 %v439, %v502
      %v517 = vadd.f32 %v442, %v502
      %v518 = vadd.f32 %v445, %v502
      %v519 = vadd.f32 %v448, %v502
      %v520 = vadd.f32 %v451, %v502
      %v521 = vadd.f32 %v454, %v502
      %v522 = vadd.f32 %v457, %v502
      %v523 = vadd.f32 %v460, %v502
      %v524 = vadd.f32 %v463, %v502
      %v525 = vadd.f32 %v466, %v502
      %v526 = vadd.f32 %v469, %v502
      %v527 = vadd.f32 %v472, %v502
      %v528 = vadd.f32 %v475, %v502
      %v529 = vadd.f32 %v478, %v502
      %v530 = vadd.f32 %v481, %v502
      %v531 = vadd.f32 %v484, %v502
      %v532 = vadd.f32 %v487, %v502
      %v533 = vadd.f32 %v490, %v502
      %v534 = vadd.f32 %v493, %v502
      %v535 = vadd.f32 %v496, %v502
      %s536 = smul.u32 %s18, 256
      %v537 = vlaneseq
      %v538 = vshrl.u32 %v537, 7
      %v539 = vadd.s32 %v538, 8
      %v540 = vadd.s32 %v538, 16
      %v541 = vadd.s32 %v538, 24
      %v542 = vadd.s32 %v538, 32
      %v543 = vadd.s32 %v538, 40
      %v544 = vadd.s32 %v538, 48
      %v545 = vadd.s32 %v538, 56
      %v546 = vadd.s32 %v538, 64
      %v547 = vadd.s32 %v538, 72
      %v548 = vadd.s32 %v538, 80
      %v549 = vadd.s32 %v538, 88
      %v550 = vadd.s32 %v538, 96
      %v551 = vadd.s32 %v538, 104
      %v552 = vadd.s32 %v538, 112
      %v553 = vadd.s32 %v538, 120
      %v554 = vadd.s32 %v538, 128
      %v555 = vadd.s32 %v538, 136
      %v556 = vadd.s32 %v538, 144
      %v557 = vadd.s32 %v538, 152
      %v558 = vadd.s32 %v538, 160
      %v559 = vadd.s32 %v538, 168
      %v560 = vadd.s32 %v538, 176
      %v561 = vadd.s32 %v538, 184
      %v562 = vadd.s32 %v538, 192
      %v563 = vadd.s32 %v538, 200
      %v564 = vadd.s32 %v538, 208
      %v565 = vadd.s32 %v538, 216
      %v566 = vadd.s32 %v538, 224
      %v567 = vadd.s32 %v538, 232
      %v568 = vadd.s32 %v538, 240
      %v569 = vadd.s32 %v538, 248
      %v570 = vstv %s536
      %v571 = vadd.s32 %v570, %v538
      %v572 = vadd.s32 %v570, %v539
      %v573 = vadd.s32 %v570, %v540
      %v574 = vadd.s32 %v570, %v541
      %v575 = vadd.s32 %v570, %v542
      %v576 = vadd.s32 %v570, %v543
      %v577 = vadd.s32 %v570, %v544
      %v578 = vadd.s32 %v570, %v545
      %v579 = vadd.s32 %v570, %v546
      %v580 = vadd.s32 %v570, %v547
      %v581 = vadd.s32 %v570, %v548
      %v582 = vadd.s32 %v570, %v549
      %v583 = vadd.s32 %v570, %v550
      %v584 = vadd.s32 %v570, %v551
      %v585 = vadd.s32 %v570, %v552
      %v586 = vadd.s32 %v570, %v553
      %v587 = vadd.s32 %v570, %v554
      %v588 = vadd.s32 %v570, %v555
      %v589 = vadd.s32 %v570, %v556
      %v590 = vadd.s32 %v570, %v557
      %v591 = vadd.s32 %v570, %v558
      %v592 = vadd.s32 %v570, %v559
      %v593 = vadd.s32 %v570, %v560
      %v594 = vadd.s32 %v570, %v561
      %v595 = vadd.s32 %v570, %v562
      %v596 = vadd.s32 %v570, %v563
      %v597 = vadd.s32 %v570, %v564
      %v598 = vadd.s32 %v570, %v565
      %v599 = vadd.s32 %v570, %v566
      %v600 = vadd.s32 %v570, %v567
      %v601 = vadd.s32 %v570, %v568
      %v602 = vadd.s32 %v570, %v569
      %vm603 = vcmp.lt.s32.totalorder %v571, 2000
      %vm604 = vcmp.lt.s32.totalorder %v572, 2000
      %vm605 = vcmp.lt.s32.totalorder %v573, 2000
      %vm606 = vcmp.lt.s32.totalorder %v574, 2000
      %vm607 = vcmp.lt.s32.totalorder %v575, 2000
      %vm608 = vcmp.lt.s32.totalorder %v576, 2000
      %vm609 = vcmp.lt.s32.totalorder %v577, 2000
      %vm610 = vcmp.lt.s32.totalorder %v578, 2000
      %vm611 = vcmp.lt.s32.totalorder %v579, 2000
      %vm612 = vcmp.lt.s32.totalorder %v580, 2000
      %vm613 = vcmp.lt.s32.totalorder %v581, 2000
      %vm614 = vcmp.lt.s32.totalorder %v582, 2000
      %vm615 = vcmp.lt.s32.totalorder %v583, 2000
      %vm616 = vcmp.lt.s32.totalorder %v584, 2000
      %vm617 = vcmp.lt.s32.totalorder %v585, 2000
      %vm618 = vcmp.lt.s32.totalorder %v586, 2000
      %vm619 = vcmp.lt.s32.totalorder %v587, 2000
      %vm620 = vcmp.lt.s32.totalorder %v588, 2000
      %vm621 = vcmp.lt.s32.totalorder %v589, 2000
      %vm622 = vcmp.lt.s32.totalorder %v590, 2000
      %vm623 = vcmp.lt.s32.totalorder %v591, 2000
      %vm624 = vcmp.lt.s32.totalorder %v592, 2000
      %vm625 = vcmp.lt.s32.totalorder %v593, 2000
      %vm626 = vcmp.lt.s32.totalorder %v594, 2000
      %vm627 = vcmp.lt.s32.totalorder %v595, 2000
      %vm628 = vcmp.lt.s32.totalorder %v596, 2000
      %vm629 = vcmp.lt.s32.totalorder %v597, 2000
      %vm630 = vcmp.lt.s32.totalorder %v598, 2000
      %vm631 = vcmp.lt.s32.totalorder %v599, 2000
      %vm632 = vcmp.lt.s32.totalorder %v600, 2000
      %vm633 = vcmp.lt.s32.totalorder %v601, 2000
      %vm634 = vcmp.lt.s32.totalorder %v602, 2000
      %v635 = vsel %vm603, %v504, -inf
      %v636 = vsel %vm604, %v505, -inf
      %v637 = vsel %vm605, %v506, -inf
      %v638 = vsel %vm606, %v507, -inf
      %v639 = vsel %vm607, %v508, -inf
      %v640 = vsel %vm608, %v509, -inf
      %v641 = vsel %vm609, %v510, -inf
      %v642 = vsel %vm610, %v511, -inf
      %v643 = vsel %vm611, %v512, -inf
      %v644 = vsel %vm612, %v513, -inf
      %v645 = vsel %vm613, %v514, -inf
      %v646 = vsel %vm614, %v515, -inf
      %v647 = vsel %vm615, %v516, -inf
      %v648 = vsel %vm616, %v517, -inf
      %v649 = vsel %vm617, %v518, -inf
      %v650 = vsel %vm618, %v519, -inf
      %v651 = vsel %vm619, %v520, -inf
      %v652 = vsel %vm620, %v521, -inf
      %v653 = vsel %vm621, %v522, -inf
      %v654 = vsel %vm622, %v523, -inf
      %v655 = vsel %vm623, %v524, -inf
      %v656 = vsel %vm624, %v525, -inf
      %v657 = vsel %vm625, %v526, -inf
      %v658 = vsel %vm626, %v527, -inf
      %v659 = vsel %vm627, %v528, -inf
      %v660 = vsel %vm628, %v529, -inf
      %v661 = vsel %vm629, %v530, -inf
      %v662 = vsel %vm630, %v531, -inf
      %v663 = vsel %vm631, %v532, -inf
      %v664 = vsel %vm632, %v533, -inf
      %v665 = vsel %vm633, %v534, -inf
      %v666 = vsel %vm634, %v535, -inf
      %v667 = vld [vmem:[%s3] sm:$0xff]
      %v668 = vld [vmem:[%s3 + $0x8] sm:$0xff]
      %v669 = vld [vmem:[%s3 + $0x10] sm:$0xff]
      %v670 = vld [vmem:[%s3 + $0x18] sm:$0xff]
      %v671 = vld [vmem:[%s3 + $0x20] sm:$0xff]
      %v672 = vld [vmem:[%s3 + $0x28] sm:$0xff]
      %v673 = vld [vmem:[%s3 + $0x30] sm:$0xff]
      %v674 = vld [vmem:[%s3 + $0x38] sm:$0xff]
      %v675 = vld [vmem:[%s3 + $0x40] sm:$0xff]
      %v676 = vld [vmem:[%s3 + $0x48] sm:$0xff]
      %v677 = vld [vmem:[%s3 + $0x50] sm:$0xff]
      %v678 = vld [vmem:[%s3 + $0x58] sm:$0xff]
      %v679 = vld [vmem:[%s3 + $0x60] sm:$0xff]
      %v680 = vld [vmem:[%s3 + $0x68] sm:$0xff]
      %v681 = vld [vmem:[%s3 + $0x70] sm:$0xff]
      %v682 = vld [vmem:[%s3 + $0x78] sm:$0xff]
      %v683 = vld [vmem:[%s3 + $0x80] sm:$0xff]
      %v684 = vld [vmem:[%s3 + $0x88] sm:$0xff]
      %v685 = vld [vmem:[%s3 + $0x90] sm:$0xff]
      %v686 = vld [vmem:[%s3 + $0x98] sm:$0xff]
      %v687 = vld [vmem:[%s3 + $0xa0] sm:$0xff]
      %v688 = vld [vmem:[%s3 + $0xa8] sm:$0xff]
      %v689 = vld [vmem:[%s3 + $0xb0] sm:$0xff]
      %v690 = vld [vmem:[%s3 + $0xb8] sm:$0xff]
      %v691 = vld [vmem:[%s3 + $0xc0] sm:$0xff]
      %v692 = vld [vmem:[%s3 + $0xc8] sm:$0xff]
      %v693 = vld [vmem:[%s3 + $0xd0] sm:$0xff]
      %v694 = vld [vmem:[%s3 + $0xd8] sm:$0xff]
      %v695 = vld [vmem:[%s3 + $0xe0] sm:$0xff]
      %v696 = vld [vmem:[%s3 + $0xe8] sm:$0xff]
      %v697 = vld [vmem:[%s3 + $0xf0] sm:$0xff]
      %v698 = vld [vmem:[%s3 + $0xf8] sm:$0xff]
      %v699 = vld [vmem:[%s4] sm:$0x3]
      %v701 = vlaneseq
      %v702 = vshrl.u32 %v701, 7
      %v703 = vsub.s32 0, %v702
      %v704 = vrot.slane %v699, %v703
      %v705 = vlaneseq
      %v706 = vshrl.u32 %v705, 7
      %v707 = vsub.s32 1, %v706
      %v708 = vrot.slane %v699, %v707
      %v743 = vunpack.c.l.b16 %v229
      %v744 = vunpack.c.h.b16 %v229
      %v745 = vunpack.c.l.b16 %v230
      %v746 = vunpack.c.h.b16 %v230
      %v747 = vunpack.c.l.b16 %v231
      %v748 = vunpack.c.h.b16 %v231
      %v749 = vunpack.c.l.b16 %v232
      %v750 = vunpack.c.h.b16 %v232
      %v751 = vunpack.c.l.b16 %v233
      %v752 = vunpack.c.h.b16 %v233
      %v753 = vunpack.c.l.b16 %v234
      %v754 = vunpack.c.h.b16 %v234
      %v755 = vunpack.c.l.b16 %v235
      %v756 = vunpack.c.h.b16 %v235
      %v757 = vunpack.c.l.b16 %v236
      %v758 = vunpack.c.h.b16 %v236
      %v759 = vunpack.c.l.b16 %v237
      %v760 = vunpack.c.h.b16 %v237
      %v761 = vunpack.c.l.b16 %v238
      %v762 = vunpack.c.h.b16 %v238
      %v763 = vunpack.c.l.b16 %v239
      %v764 = vunpack.c.h.b16 %v239
      %v765 = vunpack.c.l.b16 %v240
      %v766 = vunpack.c.h.b16 %v240
      %v767 = vunpack.c.l.b16 %v241
      %v768 = vunpack.c.h.b16 %v241
      %v769 = vunpack.c.l.b16 %v242
      %v770 = vunpack.c.h.b16 %v242
      %v771 = vunpack.c.l.b16 %v243
      %v772 = vunpack.c.h.b16 %v243
      %v773 = vunpack.c.l.b16 %v244
      %v774 = vunpack.c.h.b16 %v244
      %v775 = vunpack.c.l.b16 %v245
      %v776 = vunpack.c.h.b16 %v245
      %v777 = vunpack.c.l.b16 %v246
      %v778 = vunpack.c.h.b16 %v246
      %v779 = vunpack.c.l.b16 %v247
      %v780 = vunpack.c.h.b16 %v247
      %v781 = vunpack.c.l.b16 %v248
      %v782 = vunpack.c.h.b16 %v248
      %v783 = vunpack.c.l.b16 %v249
      %v784 = vunpack.c.h.b16 %v249
      %v785 = vunpack.c.l.b16 %v250
      %v786 = vunpack.c.h.b16 %v250
      %v787 = vunpack.c.l.b16 %v251
      %v788 = vunpack.c.h.b16 %v251
      %v789 = vunpack.c.l.b16 %v252
      %v790 = vunpack.c.h.b16 %v252
      %v791 = vunpack.c.l.b16 %v253
      %v792 = vunpack.c.h.b16 %v253
      %v793 = vunpack.c.l.b16 %v254
      %v794 = vunpack.c.h.b16 %v254
      %v795 = vunpack.c.l.b16 %v255
      %v796 = vunpack.c.h.b16 %v255
      %v797 = vunpack.c.l.b16 %v256
      %v798 = vunpack.c.h.b16 %v256
      %v799 = vunpack.c.l.b16 %v257
      %v800 = vunpack.c.h.b16 %v257
      %v801 = vunpack.c.l.b16 %v258
      %v802 = vunpack.c.h.b16 %v258
      %v803 = vunpack.c.l.b16 %v259
      %v804 = vunpack.c.h.b16 %v259
      %v805 = vunpack.c.l.b16 %v260
      %v806 = vunpack.c.h.b16 %v260
      %v807 = vpack.c.b16 %v745, %v743
      %v808 = vpack.c.b16 %v746, %v744
      %v809 = vpack.c.b16 %v749, %v747
      %v810 = vpack.c.b16 %v750, %v748
      %v811 = vpack.c.b16 %v753, %v751
      %v812 = vpack.c.b16 %v754, %v752
      %v813 = vpack.c.b16 %v757, %v755
      %v814 = vpack.c.b16 %v758, %v756
      %v815 = vpack.c.b16 %v761, %v759
      %v816 = vpack.c.b16 %v762, %v760
      %v817 = vpack.c.b16 %v765, %v763
      %v818 = vpack.c.b16 %v766, %v764
      %v819 = vpack.c.b16 %v769, %v767
      %v820 = vpack.c.b16 %v770, %v768
      %v821 = vpack.c.b16 %v773, %v771
      %v822 = vpack.c.b16 %v774, %v772
      %v823 = vpack.c.b16 %v777, %v775
      %v824 = vpack.c.b16 %v778, %v776
      %v825 = vpack.c.b16 %v781, %v779
      %v826 = vpack.c.b16 %v782, %v780
      %v827 = vpack.c.b16 %v785, %v783
      %v828 = vpack.c.b16 %v786, %v784
      %v829 = vpack.c.b16 %v789, %v787
      %v830 = vpack.c.b16 %v790, %v788
      %v831 = vpack.c.b16 %v793, %v791
      %v832 = vpack.c.b16 %v794, %v792
      %v833 = vpack.c.b16 %v797, %v795
      %v834 = vpack.c.b16 %v798, %v796
      %v835 = vpack.c.b16 %v801, %v799
      %v836 = vpack.c.b16 %v802, %v800
      %v837 = vpack.c.b16 %v805, %v803
      %v838 = vpack.c.b16 %v806, %v804
      %v903 = vunpack.c.l.b16 %v667
      %v904 = vunpack.c.h.b16 %v667
      %v905 = vunpack.c.l.b16 %v668
      %v906 = vunpack.c.h.b16 %v668
      %v907 = vunpack.c.l.b16 %v669
      %v908 = vunpack.c.h.b16 %v669
      %v909 = vunpack.c.l.b16 %v670
      %v910 = vunpack.c.h.b16 %v670
      %v911 = vunpack.c.l.b16 %v671
      %v912 = vunpack.c.h.b16 %v671
      %v913 = vunpack.c.l.b16 %v672
      %v914 = vunpack.c.h.b16 %v672
      %v915 = vunpack.c.l.b16 %v673
      %v916 = vunpack.c.h.b16 %v673
      %v917 = vunpack.c.l.b16 %v674
      %v918 = vunpack.c.h.b16 %v674
      %v919 = vunpack.c.l.b16 %v675
      %v920 = vunpack.c.h.b16 %v675
      %v921 = vunpack.c.l.b16 %v676
      %v922 = vunpack.c.h.b16 %v676
      %v923 = vunpack.c.l.b16 %v677
      %v924 = vunpack.c.h.b16 %v677
      %v925 = vunpack.c.l.b16 %v678
      %v926 = vunpack.c.h.b16 %v678
      %v927 = vunpack.c.l.b16 %v679
      %v928 = vunpack.c.h.b16 %v679
      %v929 = vunpack.c.l.b16 %v680
      %v930 = vunpack.c.h.b16 %v680
      %v931 = vunpack.c.l.b16 %v681
      %v932 = vunpack.c.h.b16 %v681
      %v933 = vunpack.c.l.b16 %v682
      %v934 = vunpack.c.h.b16 %v682
      %v935 = vunpack.c.l.b16 %v683
      %v936 = vunpack.c.h.b16 %v683
      %v937 = vunpack.c.l.b16 %v684
      %v938 = vunpack.c.h.b16 %v684
      %v939 = vunpack.c.l.b16 %v685
      %v940 = vunpack.c.h.b16 %v685
      %v941 = vunpack.c.l.b16 %v686
      %v942 = vunpack.c.h.b16 %v686
      %v943 = vunpack.c.l.b16 %v687
      %v944 = vunpack.c.h.b16 %v687
      %v945 = vunpack.c.l.b16 %v688
      %v946 = vunpack.c.h.b16 %v688
      %v947 = vunpack.c.l.b16 %v689
      %v948 = vunpack.c.h.b16 %v689
      %v949 = vunpack.c.l.b16 %v690
      %v950 = vunpack.c.h.b16 %v690
      %v951 = vunpack.c.l.b16 %v691
      %v952 = vunpack.c.h.b16 %v691
      %v953 = vunpack.c.l.b16 %v692
      %v954 = vunpack.c.h.b16 %v692
      %v955 = vunpack.c.l.b16 %v693
      %v956 = vunpack.c.h.b16 %v693
      %v957 = vunpack.c.l.b16 %v694
      %v958 = vunpack.c.h.b16 %v694
      %v959 = vunpack.c.l.b16 %v695
      %v960 = vunpack.c.h.b16 %v695
      %v961 = vunpack.c.l.b16 %v696
      %v962 = vunpack.c.h.b16 %v696
      %v963 = vunpack.c.l.b16 %v697
      %v964 = vunpack.c.h.b16 %v697
      %v965 = vunpack.c.l.b16 %v698
      %v966 = vunpack.c.h.b16 %v698
      %v967 = vpack.c.b16 %v905, %v903
      %v968 = vpack.c.b16 %v906, %v904
      %v969 = vpack.c.b16 %v909, %v907
      %v970 = vpack.c.b16 %v910, %v908
      %v971 = vpack.c.b16 %v913, %v911
      %v972 = vpack.c.b16 %v914, %v912
      %v973 = vpack.c.b16 %v917, %v915
      %v974 = vpack.c.b16 %v918, %v916
      %v975 = vpack.c.b16 %v921, %v919
      %v976 = vpack.c.b16 %v922, %v920
      %v977 = vpack.c.b16 %v925, %v923
      %v978 = vpack.c.b16 %v926, %v924
      %v979 = vpack.c.b16 %v929, %v927
      %v980 = vpack.c.b16 %v930, %v928
      %v981 = vpack.c.b16 %v933, %v931
      %v982 = vpack.c.b16 %v934, %v932
      %v983 = vpack.c.b16 %v937, %v935
      %v984 = vpack.c.b16 %v938, %v936
      %v985 = vpack.c.b16 %v941, %v939
      %v986 = vpack.c.b16 %v942, %v940
      %v987 = vpack.c.b16 %v945, %v943
      %v988 = vpack.c.b16 %v946, %v944
      %v989 = vpack.c.b16 %v949, %v947
      %v990 = vpack.c.b16 %v950, %v948
      %v991 = vpack.c.b16 %v953, %v951
      %v992 = vpack.c.b16 %v954, %v952
      %v993 = vpack.c.b16 %v957, %v955
      %v994 = vpack.c.b16 %v958, %v956
      %v995 = vpack.c.b16 %v961, %v959
      %v996 = vpack.c.b16 %v962, %v960
      %v997 = vpack.c.b16 %v965, %v963
      %v998 = vpack.c.b16 %v966, %v964
      %1031 = vmatprep.subr.bf16.mxu0 %v968
      %1032 = vmatpush1.bf16.msra.mxu0 %v967
      %1033 = vmatprep.subr.bf16.mxu0 %v970
      %1034 = vmatpush1.bf16.msra.mxu0 %v969
      %1035 = vmatprep.subr.bf16.mxu0 %v972
      %1036 = vmatpush1.bf16.msra.mxu0 %v971
      %1037 = vmatprep.subr.bf16.mxu0 %v974
      %1038 = vmatpush1.bf16.msra.mxu0 %v973
      %1039 = vmatprep.subr.bf16.mxu0 %v976
      %1040 = vmatpush1.bf16.msra.mxu0 %v975
      %1041 = vmatprep.subr.bf16.mxu0 %v978
      %1042 = vmatpush1.bf16.msra.mxu0 %v977
      %1043 = vmatprep.subr.bf16.mxu0 %v980
      %1044 = vmatpush1.bf16.msra.mxu0 %v979
      %1045 = vmatprep.subr.bf16.mxu0 %v982
      %1046 = vmatpush1.bf16.msra.mxu0 %v981
      %1047 = vmatprep.subr.bf16.mxu0 %v984
      %1048 = vmatpush1.bf16.msra.mxu0 %v983
      %1049 = vmatprep.subr.bf16.mxu0 %v986
      %1050 = vmatpush1.bf16.msra.mxu0 %v985
      %1051 = vmatprep.subr.bf16.mxu0 %v988
      %1052 = vmatpush1.bf16.msra.mxu0 %v987
      %1053 = vmatprep.subr.bf16.mxu0 %v990
      %1054 = vmatpush1.bf16.msra.mxu0 %v989
      %1055 = vmatprep.subr.bf16.mxu0 %v992
      %1056 = vmatpush1.bf16.msra.mxu0 %v991
      %1057 = vmatprep.subr.bf16.mxu0 %v994
      %1058 = vmatpush1.bf16.msra.mxu0 %v993
      %1059 = vmatprep.subr.bf16.mxu0 %v996
      %1060 = vmatpush1.bf16.msra.mxu0 %v995
      %1061 = vmatprep.subr.bf16.mxu0 %v998
      %1062 = vmatpush1.bf16.msra.mxu0 %v997
      %1063 = vmatprep.mubr.bf16.mxu0 %v808
      %1064 = vmatmul.mubr.bf16.gmra.mrb[0].mxu0 %v807
      %v1065 = vpop.f32.mrb[0].mxu0
      %v1066 = vadd.f32 %v704, %v1065
      %v1067 = vpop.f32.mrb[0].mxu0
      %v1068 = vadd.f32 %v708, %v1067
      %v1069 = vpop.f32.mrb[0].mxu0
      %v1070 = vadd.f32 %v704, %v1069
      %v1071 = vpop.f32.mrb[0].mxu0
      %v1072 = vadd.f32 %v708, %v1071
      %1073 = vmatprep.mubr.bf16.mxu0 %v810
      %1074 = vmatmul.mubr.bf16.gmra.mrb[0].mxu0 %v809
      %v1075 = vpop.f32.mrb[0].mxu0
      %v1076 = vadd.f32 %v704, %v1075
      %v1077 = vpop.f32.mrb[0].mxu0
      %v1078 = vadd.f32 %v708, %v1077
      %v1079 = vpop.f32.mrb[0].mxu0
      %v1080 = vadd.f32 %v704, %v1079
      %v1081 = vpop.f32.mrb[0].mxu0
      %v1082 = vadd.f32 %v708, %v1081
      %1083 = vmatprep.mubr.bf16.mxu0 %v812
      %1084 = vmatmul.mubr.bf16.gmra.mrb[0].mxu0 %v811
      %v1085 = vpop.f32.mrb[0].mxu0
      %v1086 = vadd.f32 %v704, %v1085
      %v1087 = vpop.f32.mrb[0].mxu0
      %v1088 = vadd.f32 %v708, %v1087
      %v1089 = vpop.f32.mrb[0].mxu0
      %v1090 = vadd.f32 %v704, %v1089
      %v1091 = vpop.f32.mrb[0].mxu0
      %v1092 = vadd.f32 %v708, %v1091
      %1093 = vmatprep.mubr.bf16.mxu0 %v814
      %1094 = vmatmul.mubr.bf16.gmra.mrb[0].mxu0 %v813
      %v1095 = vpop.f32.mrb[0].mxu0
      %v1096 = vadd.f32 %v704, %v1095
      %v1097 = vpop.f32.mrb[0].mxu0
      %v1098 = vadd.f32 %v708, %v1097
      %v1099 = vpop.f32.mrb[0].mxu0
      %v1100 = vadd.f32 %v704, %v1099
      %v1101 = vpop.f32.mrb[0].mxu0
      %v1102 = vadd.f32 %v708, %v1101
      %1103 = vmatprep.mubr.bf16.mxu0 %v816
      %1104 = vmatmul.mubr.bf16.gmra.mrb[0].mxu0 %v815
      %v1105 = vpop.f32.mrb[0].mxu0
      %v1106 = vadd.f32 %v704, %v1105
      %v1107 = vpop.f32.mrb[0].mxu0
      %v1108 = vadd.f32 %v708, %v1107
      %v1109 = vpop.f32.mrb[0].mxu0
      %v1110 = vadd.f32 %v704, %v1109
      %v1111 = vpop.f32.mrb[0].mxu0
      %v1112 = vadd.f32 %v708, %v1111
      %1113 = vmatprep.mubr.bf16.mxu0 %v818
      %1114 = vmatmul.mubr.bf16.gmra.mrb[0].mxu0 %v817
      %v1115 = vpop.f32.mrb[0].mxu0
      %v1116 = vadd.f32 %v704, %v1115
      %v1117 = vpop.f32.mrb[0].mxu0
      %v1118 = vadd.f32 %v708, %v1117
      %v1119 = vpop.f32.mrb[0].mxu0
      %v1120 = vadd.f32 %v704, %v1119
      %v1121 = vpop.f32.mrb[0].mxu0
      %v1122 = vadd.f32 %v708, %v1121
      %1123 = vmatprep.mubr.bf16.mxu0 %v820
      %1124 = vmatmul.mubr.bf16.gmra.mrb[0].mxu0 %v819
      %v1125 = vpop.f32.mrb[0].mxu0
      %v1126 = vadd.f32 %v704, %v1125
      %v1127 = vpop.f32.mrb[0].mxu0
      %v1128 = vadd.f32 %v708, %v1127
      %v1129 = vpop.f32.mrb[0].mxu0
      %v1130 = vadd.f32 %v704, %v1129
      %v1131 = vpop.f32.mrb[0].mxu0
      %v1132 = vadd.f32 %v708, %v1131
      %1133 = vmatprep.mubr.bf16.mxu0 %v822
      %1134 = vmatmul.mubr.bf16.gmra.mrb[0].mxu0 %v821
      %v1135 = vpop.f32.mrb[0].mxu0
      %v1136 = vadd.f32 %v704, %v1135
      %v1137 = vpop.f32.mrb[0].mxu0
      %v1138 = vadd.f32 %v708, %v1137
      %v1139 = vpop.f32.mrb[0].mxu0
      %v1140 = vadd.f32 %v704, %v1139
      %v1141 = vpop.f32.mrb[0].mxu0
      %v1142 = vadd.f32 %v708, %v1141
      %1143 = vmatprep.mubr.bf16.mxu0 %v824
      %1144 = vmatmul.mubr.bf16.gmra.mrb[0].mxu0 %v823
      %v1145 = vpop.f32.mrb[0].mxu0
      %v1146 = vadd.f32 %v704, %v1145
      %v1147 = vpop.f32.mrb[0].mxu0
      %v1148 = vadd.f32 %v708, %v1147
      %v1149 = vpop.f32.mrb[0].mxu0
      %v1150 = vadd.f32 %v704, %v1149
      %v1151 = vpop.f32.mrb[0].mxu0
      %v1152 = vadd.f32 %v708, %v1151
      %1153 = vmatprep.mubr.bf16.mxu0 %v826
      %1154 = vmatmul.mubr.bf16.gmra.mrb[0].mxu0 %v825
      %v1155 = vpop.f32.mrb[0].mxu0
      %v1156 = vadd.f32 %v704, %v1155
      %v1157 = vpop.f32.mrb[0].mxu0
      %v1158 = vadd.f32 %v708, %v1157
      %v1159 = vpop.f32.mrb[0].mxu0
      %v1160 = vadd.f32 %v704, %v1159
      %v1161 = vpop.f32.mrb[0].mxu0
      %v1162 = vadd.f32 %v708, %v1161
      %1163 = vmatprep.mubr.bf16.mxu0 %v828
      %1164 = vmatmul.mubr.bf16.gmra.mrb[0].mxu0 %v827
      %v1165 = vpop.f32.mrb[0].mxu0
      %v1166 = vadd.f32 %v704, %v1165
      %v1167 = vpop.f32.mrb[0].mxu0
      %v1168 = vadd.f32 %v708, %v1167
      %v1169 = vpop.f32.mrb[0].mxu0
      %v1170 = vadd.f32 %v704, %v1169
      %v1171 = vpop.f32.mrb[0].mxu0
      %v1172 = vadd.f32 %v708, %v1171
      %1173 = vmatprep.mubr.bf16.mxu0 %v830
      %1174 = vmatmul.mubr.bf16.gmra.mrb[0].mxu0 %v829
      %v1175 = vpop.f32.mrb[0].mxu0
      %v1176 = vadd.f32 %v704, %v1175
      %v1177 = vpop.f32.mrb[0].mxu0
      %v1178 = vadd.f32 %v708, %v1177
      %v1179 = vpop.f32.mrb[0].mxu0
      %v1180 = vadd.f32 %v704, %v1179
      %v1181 = vpop.f32.mrb[0].mxu0
      %v1182 = vadd.f32 %v708, %v1181
      %1183 = vmatprep.mubr.bf16.mxu0 %v832
      %1184 = vmatmul.mubr.bf16.gmra.mrb[0].mxu0 %v831
      %v1185 = vpop.f32.mrb[0].mxu0
      %v1186 = vadd.f32 %v704, %v1185
      %v1187 = vpop.f32.mrb[0].mxu0
      %v1188 = vadd.f32 %v708, %v1187
      %v1189 = vpop.f32.mrb[0].mxu0
      %v1190 = vadd.f32 %v704, %v1189
      %v1191 = vpop.f32.mrb[0].mxu0
      %v1192 = vadd.f32 %v708, %v1191
      %1193 = vmatprep.mubr.bf16.mxu0 %v834
      %1194 = vmatmul.mubr.bf16.gmra.mrb[0].mxu0 %v833
      %v1195 = vpop.f32.mrb[0].mxu0
      %v1196 = vadd.f32 %v704, %v1195
      %v1197 = vpop.f32.mrb[0].mxu0
      %v1198 = vadd.f32 %v708, %v1197
      %v1199 = vpop.f32.mrb[0].mxu0
      %v1200 = vadd.f32 %v704, %v1199
      %v1201 = vpop.f32.mrb[0].mxu0
      %v1202 = vadd.f32 %v708, %v1201
      %1203 = vmatprep.mubr.bf16.mxu0 %v836
      %1204 = vmatmul.mubr.bf16.gmra.mrb[0].mxu0 %v835
      %v1205 = vpop.f32.mrb[0].mxu0
      %v1206 = vadd.f32 %v704, %v1205
      %v1207 = vpop.f32.mrb[0].mxu0
      %v1208 = vadd.f32 %v708, %v1207
      %v1209 = vpop.f32.mrb[0].mxu0
      %v1210 = vadd.f32 %v704, %v1209
      %v1211 = vpop.f32.mrb[0].mxu0
      %v1212 = vadd.f32 %v708, %v1211
      %1213 = vmatprep.mubr.bf16.mxu0 %v838
      %1214 = vmatmul.mubr.bf16.gmra.mrb[0].mxu0 %v837
      %v1215 = vpop.f32.mrb[0].mxu0
      %v1216 = vadd.f32 %v704, %v1215
      %v1217 = vpop.f32.mrb[0].mxu0
      %v1218 = vadd.f32 %v708, %v1217
      %v1219 = vpop.f32.mrb[0].mxu0
      %v1220 = vadd.f32 %v704, %v1219
      %v1221 = vpop.f32.mrb[0].mxu0
      %v1222 = vadd.f32 %v708, %v1221
      %1223 = vdwg.mxu0
      %v1224 = vld [vmem:[#allocation2] sm:$0x1]
      %vm1225 = vcmask 7168
      %v1226 = vsel %vm1225, %v635, -inf
      %v1227 = vsel %vm1225, %v636, -inf
      %v1228 = vsel %vm1225, %v637, -inf
      %v1229 = vsel %vm1225, %v638, -inf
      %v1230 = vsel %vm1225, %v639, -inf
      %v1231 = vmax.f32 %v1226, %v1230
      %v1232 = vsel %vm1225, %v640, -inf
      %v1233 = vmax.f32 %v1227, %v1232
      %v1234 = vsel %vm1225, %v641, -inf
      %v1235 = vmax.f32 %v1228, %v1234
      %v1236 = vsel %vm1225, %v642, -inf
      %v1237 = vmax.f32 %v1229, %v1236
      %v1238 = vsel %vm1225, %v643, -inf
      %v1239 = vmax.f32 %v1231, %v1238
      %v1240 = vsel %vm1225, %v644, -inf
      %v1241 = vmax.f32 %v1233, %v1240
      %v1242 = vsel %vm1225, %v645, -inf
      %v1243 = vmax.f32 %v1235, %v1242
      %v1244 = vsel %vm1225, %v646, -inf
      %v1245 = vmax.f32 %v1237, %v1244
      %v1246 = vsel %vm1225, %v647, -inf
      %v1247 = vmax.f32 %v1239, %v1246
      %v1248 = vsel %vm1225, %v648, -inf
      %v1249 = vmax.f32 %v1241, %v1248
      %v1250 = vsel %vm1225, %v649, -inf
      %v1251 = vmax.f32 %v1243, %v1250
      %v1252 = vsel %vm1225, %v650, -inf
      %v1253 = vmax.f32 %v1245, %v1252
      %v1254 = vsel %vm1225, %v651, -inf
      %v1255 = vmax.f32 %v1247, %v1254
      %v1256 = vsel %vm1225, %v652, -inf
      %v1257 = vmax.f32 %v1249, %v1256
      %v1258 = vsel %vm1225, %v653, -inf
      %v1259 = vmax.f32 %v1251, %v1258
      %v1260 = vsel %vm1225, %v654, -inf
      %v1261 = vmax.f32 %v1253, %v1260
      %v1262 = vsel %vm1225, %v655, -inf
      %v1263 = vmax.f32 %v1255, %v1262
      %v1264 = vsel %vm1225, %v656, -inf
      %v1265 = vmax.f32 %v1257, %v1264
      %v1266 = vsel %vm1225, %v657, -inf
      %v1267 = vmax.f32 %v1259, %v1266
      %v1268 = vsel %vm1225, %v658, -inf
      %v1269 = vmax.f32 %v1261, %v1268
      %v1270 = vsel %vm1225, %v659, -inf
      %v1271 = vmax.f32 %v1263, %v1270
      %v1272 = vsel %vm1225, %v660, -inf
      %v1273 = vmax.f32 %v1265, %v1272
      %v1274 = vsel %vm1225, %v661, -inf
      %v1275 = vmax.f32 %v1267, %v1274
      %v1276 = vsel %vm1225, %v662, -inf
      %v1277 = vmax.f32 %v1269, %v1276
      %v1278 = vsel %vm1225, %v663, -inf
      %v1279 = vmax.f32 %v1271, %v1278
      %v1280 = vsel %vm1225, %v664, -inf
      %v1281 = vmax.f32 %v1273, %v1280
      %v1282 = vsel %vm1225, %v665, -inf
      %v1283 = vmax.f32 %v1275, %v1282
      %v1284 = vsel %vm1225, %v666, -inf
      %v1285 = vmax.f32 %v1277, %v1284
      %v1286 = vmax.f32 %v1279, %v1281
      %v1287 = vmax.f32 %v1283, %v1285
      %v1288 = vmax.f32 %v1286, %v1287
      %v1289 = vrot.slane %v1288, 4
      %v1290 = vmax.f32 %v1288, %v1289
      %v1291 = vrot.slane %v1290, 2
      %v1292 = vmax.f32 %v1290, %v1291
      %v1293 = vrot.slane %v1292, 1
      %v1294 = vmax.f32 %v1292, %v1293
      %v1295 = vmax.f32 %v1224, %v1294
      %v1296 = vsub.f32 %v1224, %v1295
      %v1297 = vmul.f32 %v1296, 1.442695
      %v1298 = vpow.pop %v1297
      %v1300 = vlaneseq
      %v1301 = vshrl.u32 %v1300, 7
      %v1302 = vsub.s32 0, %v1301
      %v1303 = vrot.slane %v1295, %v1302
      %v1305 = vsub.f32 %v635, %v1303
      %v1306 = vsub.f32 %v636, %v1303
      %v1307 = vsub.f32 %v637, %v1303
      %v1308 = vsub.f32 %v638, %v1303
      %v1309 = vsub.f32 %v639, %v1303
      %v1310 = vsub.f32 %v640, %v1303
      %v1311 = vsub.f32 %v641, %v1303
      %v1312 = vsub.f32 %v642, %v1303
      %v1313 = vsub.f32 %v643, %v1303
      %v1314 = vsub.f32 %v644, %v1303
      %v1315 = vsub.f32 %v645, %v1303
      %v1316 = vsub.f32 %v646, %v1303
      %v1317 = vsub.f32 %v647, %v1303
      %v1318 = vsub.f32 %v648, %v1303
      %v1319 = vsub.f32 %v649, %v1303
      %v1320 = vsub.f32 %v650, %v1303
      %v1321 = vsub.f32 %v651, %v1303
      %v1322 = vsub.f32 %v652, %v1303
      %v1323 = vsub.f32 %v653, %v1303
      %v1324 = vsub.f32 %v654, %v1303
      %v1325 = vsub.f32 %v655, %v1303
      %v1326 = vsub.f32 %v656, %v1303
      %v1327 = vsub.f32 %v657, %v1303
      %v1328 = vsub.f32 %v658, %v1303
      %v1329 = vsub.f32 %v659, %v1303
      %v1330 = vsub.f32 %v660, %v1303
      %v1331 = vsub.f32 %v661, %v1303
      %v1332 = vsub.f32 %v662, %v1303
      %v1333 = vsub.f32 %v663, %v1303
      %v1334 = vsub.f32 %v664, %v1303
      %v1335 = vsub.f32 %v665, %v1303
      %v1336 = vsub.f32 %v666, %v1303
      %v1337 = vmul.f32 %v1305, 1.442695
      %v1338 = vpow.pop %v1337
      %v1339 = vmul.f32 %v1306, 1.442695
      %v1340 = vpow.pop %v1339
      %v1341 = vmul.f32 %v1307, 1.442695
      %v1342 = vpow.pop %v1341
      %v1343 = vmul.f32 %v1308, 1.442695
      %v1344 = vpow.pop %v1343
      %v1345 = vmul.f32 %v1309, 1.442695
      %v1346 = vpow.pop %v1345
      %v1347 = vmul.f32 %v1310, 1.442695
      %v1348 = vpow.pop %v1347
      %v1349 = vmul.f32 %v1311, 1.442695
      %v1350 = vpow.pop %v1349
      %v1351 = vmul.f32 %v1312, 1.442695
      %v1352 = vpow.pop %v1351
      %v1353 = vmul.f32 %v1313, 1.442695
      %v1354 = vpow.pop %v1353
      %v1355 = vmul.f32 %v1314, 1.442695
      %v1356 = vpow.pop %v1355
      %v1357 = vmul.f32 %v1315, 1.442695
      %v1358 = vpow.pop %v1357
      %v1359 = vmul.f32 %v1316, 1.442695
      %v1360 = vpow.pop %v1359
      %v1361 = vmul.f32 %v1317, 1.442695
      %v1362 = vpow.pop %v1361
      %v1363 = vmul.f32 %v1318, 1.442695
      %v1364 = vpow.pop %v1363
      %v1365 = vmul.f32 %v1319, 1.442695
      %v1366 = vpow.pop %v1365
      %v1367 = vmul.f32 %v1320, 1.442695
      %v1368 = vpow.pop %v1367
      %v1369 = vmul.f32 %v1321, 1.442695
      %v1370 = vpow.pop %v1369
      %v1371 = vmul.f32 %v1322, 1.442695
      %v1372 = vpow.pop %v1371
      %v1373 = vmul.f32 %v1323, 1.442695
      %v1374 = vpow.pop %v1373
      %v1375 = vmul.f32 %v1324, 1.442695
      %v1376 = vpow.pop %v1375
      %v1377 = vmul.f32 %v1325, 1.442695
      %v1378 = vpow.pop %v1377
      %v1379 = vmul.f32 %v1326, 1.442695
      %v1380 = vpow.pop %v1379
      %v1381 = vmul.f32 %v1327, 1.442695
      %v1382 = vpow.pop %v1381
      %v1383 = vmul.f32 %v1328, 1.442695
      %v1384 = vpow.pop %v1383
      %v1385 = vmul.f32 %v1329, 1.442695
      %v1386 = vpow.pop %v1385
      %v1387 = vmul.f32 %v1330, 1.442695
      %v1388 = vpow.pop %v1387
      %v1389 = vmul.f32 %v1331, 1.442695
      %v1390 = vpow.pop %v1389
      %v1391 = vmul.f32 %v1332, 1.442695
      %v1392 = vpow.pop %v1391
      %v1393 = vmul.f32 %v1333, 1.442695
      %v1394 = vpow.pop %v1393
      %v1395 = vmul.f32 %v1334, 1.442695
      %v1396 = vpow.pop %v1395
      %v1397 = vmul.f32 %v1335, 1.442695
      %v1398 = vpow.pop %v1397
      %v1399 = vmul.f32 %v1336, 1.442695
      %v1400 = vpow.pop %v1399
      %v1401 = vld [vmem:[#allocation3] sm:$0x1]
      %v1402 = vmul.f32 %v1298, %v1401
      %v1403 = vsel %vm1225, %v1338, 0.0
      %v1404 = vsel %vm1225, %v1340, 0.0
      %v1405 = vadd.f32 %v1403, %v1404
      %v1406 = vsel %vm1225, %v1342, 0.0
      %v1407 = vadd.f32 %v1405, %v1406
      %v1408 = vsel %vm1225, %v1344, 0.0
      %v1409 = vadd.f32 %v1407, %v1408
      %v1410 = vsel %vm1225, %v1346, 0.0
      %v1411 = vadd.f32 %v1409, %v1410
      %v1412 = vsel %vm1225, %v1348, 0.0
      %v1413 = vadd.f32 %v1411, %v1412
      %v1414 = vsel %vm1225, %v1350, 0.0
      %v1415 = vadd.f32 %v1413, %v1414
      %v1416 = vsel %vm1225, %v1352, 0.0
      %v1417 = vadd.f32 %v1415, %v1416
      %v1418 = vsel %vm1225, %v1354, 0.0
      %v1419 = vadd.f32 %v1417, %v1418
      %v1420 = vsel %vm1225, %v1356, 0.0
      %v1421 = vadd.f32 %v1419, %v1420
      %v1422 = vsel %vm1225, %v1358, 0.0
      %v1423 = vadd.f32 %v1421, %v1422
      %v1424 = vsel %vm1225, %v1360, 0.0
      %v1425 = vadd.f32 %v1423, %v1424
      %v1426 = vsel %vm1225, %v1362, 0.0
      %v1427 = vadd.f32 %v1425, %v1426
      %v1428 = vsel %vm1225, %v1364, 0.0
      %v1429 = vadd.f32 %v1427, %v1428
      %v1430 = vsel %vm1225, %v1366, 0.0
      %v1431 = vadd.f32 %v1429, %v1430
      %v1432 = vsel %vm1225, %v1368, 0.0
      %v1433 = vadd.f32 %v1431, %v1432
      %v1434 = vsel %vm1225, %v1370, 0.0
      %v1435 = vadd.f32 %v1433, %v1434
      %v1436 = vsel %vm1225, %v1372, 0.0
      %v1437 = vadd.f32 %v1435, %v1436
      %v1438 = vsel %vm1225, %v1374, 0.0
      %v1439 = vadd.f32 %v1437, %v1438
      %v1440 = vsel %vm1225, %v1376, 0.0
      %v1441 = vadd.f32 %v1439, %v1440
      %v1442 = vsel %vm1225, %v1378, 0.0
      %v1443 = vadd.f32 %v1441, %v1442
      %v1444 = vsel %vm1225, %v1380, 0.0
      %v1445 = vadd.f32 %v1443, %v1444
      %v1446 = vsel %vm1225, %v1382, 0.0
      %v1447 = vadd.f32 %v1445, %v1446
      %v1448 = vsel %vm1225, %v1384, 0.0
      %v1449 = vadd.f32 %v1447, %v1448
      %v1450 = vsel %vm1225, %v1386, 0.0
      %v1451 = vadd.f32 %v1449, %v1450
      %v1452 = vsel %vm1225, %v1388, 0.0
      %v1453 = vadd.f32 %v1451, %v1452
      %v1454 = vsel %vm1225, %v1390, 0.0
      %v1455 = vadd.f32 %v1453, %v1454
      %v1456 = vsel %vm1225, %v1392, 0.0
      %v1457 = vadd.f32 %v1455, %v1456
      %v1458 = vsel %vm1225, %v1394, 0.0
      %v1459 = vadd.f32 %v1457, %v1458
      %v1460 = vsel %vm1225, %v1396, 0.0
      %v1461 = vadd.f32 %v1459, %v1460
      %v1462 = vsel %vm1225, %v1398, 0.0
      %v1463 = vadd.f32 %v1461, %v1462
      %v1464 = vsel %vm1225, %v1400, 0.0
      %v1465 = vadd.f32 %v1463, %v1464
      %v1466 = vrot.slane %v1465, 4
      %v1467 = vadd.f32 %v1465, %v1466
      %v1468 = vrot.slane %v1467, 2
      %v1469 = vadd.f32 %v1467, %v1468
      %v1470 = vrot.slane %v1469, 1
      %v1471 = vadd.f32 %v1469, %v1470
      %v1472 = vadd.f32 %v1402, %v1471
      %vm1473 = vcmask 0
      %1474 = vst.msk [vmem:[#allocation3] sm:$0x1] %vm1473, %v1472
      %v1475 = vld [vmem:[#allocation4] sm:$0x3]
      %1477 = vset.pattern.permute.xlu0 0
      %1478 = vperm.xlu0 %1477, %v1298
      %v1479 = vpop.permute.xlu0 %1478
      %v1481 = vlaneseq
      %v1482 = vshrl.u32 %v1481, 7
      %v1483 = vsub.s32 0, %v1482
      %v1484 = vrot.slane %v1479, %v1483
      %v1485 = vmul.f32 %v1484, %v1475
      %1487 = vset.pattern.permute.xlu0 0
      %1488 = vperm.xlu0 %1487, %v1338
      %v1489 = vpop.permute.xlu0 %1488
      %1492 = vset.pattern.permute.xlu0 0
      %1493 = vperm.xlu0 %1492, %v1340
      %v1494 = vpop.permute.xlu0 %1493
      %1497 = vset.pattern.permute.xlu0 0
      %1498 = vperm.xlu0 %1497, %v1342
      %v1499 = vpop.permute.xlu0 %1498
      %1502 = vset.pattern.permute.xlu0 0
      %1503 = vperm.xlu0 %1502, %v1344
      %v1504 = vpop.permute.xlu0 %1503
      %1507 = vset.pattern.permute.xlu0 0
      %1508 = vperm.xlu0 %1507, %v1346
      %v1509 = vpop.permute.xlu0 %1508
      %1512 = vset.pattern.permute.xlu0 0
      %1513 = vperm.xlu0 %1512, %v1348
      %v1514 = vpop.permute.xlu0 %1513
      %1517 = vset.pattern.permute.xlu0 0
      %1518 = vperm.xlu0 %1517, %v1350
      %v1519 = vpop.permute.xlu0 %1518
      %1522 = vset.pattern.permute.xlu0 0
      %1523 = vperm.xlu0 %1522, %v1352
      %v1524 = vpop.permute.xlu0 %1523
      %1527 = vset.pattern.permute.xlu0 0
      %1528 = vperm.xlu0 %1527, %v1354
      %v1529 = vpop.permute.xlu0 %1528
      %1532 = vset.pattern.permute.xlu0 0
      %1533 = vperm.xlu0 %1532, %v1356
      %v1534 = vpop.permute.xlu0 %1533
      %1537 = vset.pattern.permute.xlu0 0
      %1538 = vperm.xlu0 %1537, %v1358
      %v1539 = vpop.permute.xlu0 %1538
      %1542 = vset.pattern.permute.xlu0 0
      %1543 = vperm.xlu0 %1542, %v1360
      %v1544 = vpop.permute.xlu0 %1543
      %1547 = vset.pattern.permute.xlu0 0
      %1548 = vperm.xlu0 %1547, %v1362
      %v1549 = vpop.permute.xlu0 %1548
      %1552 = vset.pattern.permute.xlu0 0
      %1553 = vperm.xlu0 %1552, %v1364
      %v1554 = vpop.permute.xlu0 %1553
      %1557 = vset.pattern.permute.xlu0 0
      %1558 = vperm.xlu0 %1557, %v1366
      %v1559 = vpop.permute.xlu0 %1558
      %1562 = vset.pattern.permute.xlu0 0
      %1563 = vperm.xlu0 %1562, %v1368
      %v1564 = vpop.permute.xlu0 %1563
      %1567 = vset.pattern.permute.xlu0 0
      %1568 = vperm.xlu0 %1567, %v1370
      %v1569 = vpop.permute.xlu0 %1568
      %1572 = vset.pattern.permute.xlu0 0
      %1573 = vperm.xlu0 %1572, %v1372
      %v1574 = vpop.permute.xlu0 %1573
      %1577 = vset.pattern.permute.xlu0 0
      %1578 = vperm.xlu0 %1577, %v1374
      %v1579 = vpop.permute.xlu0 %1578
      %1582 = vset.pattern.permute.xlu0 0
      %1583 = vperm.xlu0 %1582, %v1376
      %v1584 = vpop.permute.xlu0 %1583
      %1587 = vset.pattern.permute.xlu0 0
      %1588 = vperm.xlu0 %1587, %v1378
      %v1589 = vpop.permute.xlu0 %1588
      %1592 = vset.pattern.permute.xlu0 0
      %1593 = vperm.xlu0 %1592, %v1380
      %v1594 = vpop.permute.xlu0 %1593
      %1597 = vset.pattern.permute.xlu0 0
      %1598 = vperm.xlu0 %1597, %v1382
      %v1599 = vpop.permute.xlu0 %1598
      %1602 = vset.pattern.permute.xlu0 0
      %1603 = vperm.xlu0 %1602, %v1384
      %v1604 = vpop.permute.xlu0 %1603
      %1607 = vset.pattern.permute.xlu0 0
      %1608 = vperm.xlu0 %1607, %v1386
      %v1609 = vpop.permute.xlu0 %1608
      %1612 = vset.pattern.permute.xlu0 0
      %1613 = vperm.xlu0 %1612, %v1388
      %v1614 = vpop.permute.xlu0 %1613
      %1617 = vset.pattern.permute.xlu0 0
      %1618 = vperm.xlu0 %1617, %v1390
      %v1619 = vpop.permute.xlu0 %1618
      %1622 = vset.pattern.permute.xlu0 0
      %1623 = vperm.xlu0 %1622, %v1392
      %v1624 = vpop.permute.xlu0 %1623
      %1627 = vset.pattern.permute.xlu0 0
      %1628 = vperm.xlu0 %1627, %v1394
      %v1629 = vpop.permute.xlu0 %1628
      %1632 = vset.pattern.permute.xlu0 0
      %1633 = vperm.xlu0 %1632, %v1396
      %v1634 = vpop.permute.xlu0 %1633
      %1637 = vset.pattern.permute.xlu0 0
      %1638 = vperm.xlu0 %1637, %v1398
      %v1639 = vpop.permute.xlu0 %1638
      %1642 = vset.pattern.permute.xlu0 0
      %1643 = vperm.xlu0 %1642, %v1400
      %v1644 = vpop.permute.xlu0 %1643
      %v1646 = vmul.f32 %v1489, %v1066
      %v1647 = vmul.f32 %v1489, %v1068
      %v1648 = vmul.f32 %v1494, %v1070
      %v1649 = vmul.f32 %v1494, %v1072
      %v1650 = vmul.f32 %v1499, %v1076
      %v1651 = vmul.f32 %v1499, %v1078
      %v1652 = vmul.f32 %v1504, %v1080
      %v1653 = vmul.f32 %v1504, %v1082
      %v1654 = vmul.f32 %v1509, %v1086
      %v1655 = vmul.f32 %v1509, %v1088
      %v1656 = vmul.f32 %v1514, %v1090
      %v1657 = vmul.f32 %v1514, %v1092
      %v1658 = vmul.f32 %v1519, %v1096
      %v1659 = vmul.f32 %v1519, %v1098
      %v1660 = vmul.f32 %v1524, %v1100
      %v1661 = vmul.f32 %v1524, %v1102
      %v1662 = vmul.f32 %v1529, %v1106
      %v1663 = vmul.f32 %v1529, %v1108
      %v1664 = vmul.f32 %v1534, %v1110
      %v1665 = vmul.f32 %v1534, %v1112
      %v1666 = vmul.f32 %v1539, %v1116
      %v1667 = vmul.f32 %v1539, %v1118
      %v1668 = vmul.f32 %v1544, %v1120
      %v1669 = vmul.f32 %v1544, %v1122
      %v1670 = vmul.f32 %v1549, %v1126
      %v1671 = vmul.f32 %v1549, %v1128
      %v1672 = vmul.f32 %v1554, %v1130
      %v1673 = vmul.f32 %v1554, %v1132
      %v1674 = vmul.f32 %v1559, %v1136
      %v1675 = vmul.f32 %v1559, %v1138
      %v1676 = vmul.f32 %v1564, %v1140
      %v1677 = vmul.f32 %v1564, %v1142
      %v1678 = vmul.f32 %v1569, %v1146
      %v1679 = vmul.f32 %v1569, %v1148
      %v1680 = vmul.f32 %v1574, %v1150
      %v1681 = vmul.f32 %v1574, %v1152
      %v1682 = vmul.f32 %v1579, %v1156
      %v1683 = vmul.f32 %v1579, %v1158
      %v1684 = vmul.f32 %v1584, %v1160
      %v1685 = vmul.f32 %v1584, %v1162
      %v1686 = vmul.f32 %v1589, %v1166
      %v1687 = vmul.f32 %v1589, %v1168
      %v1688 = vmul.f32 %v1594, %v1170
      %v1689 = vmul.f32 %v1594, %v1172
      %v1690 = vmul.f32 %v1599, %v1176
      %v1691 = vmul.f32 %v1599, %v1178
      %v1692 = vmul.f32 %v1604, %v1180
      %v1693 = vmul.f32 %v1604, %v1182
      %v1694 = vmul.f32 %v1609, %v1186
      %v1695 = vmul.f32 %v1609, %v1188
      %v1696 = vmul.f32 %v1614, %v1190
      %v1697 = vmul.f32 %v1614, %v1192
      %v1698 = vmul.f32 %v1619, %v1196
      %v1699 = vmul.f32 %v1619, %v1198
      %v1700 = vmul.f32 %v1624, %v1200
      %v1701 = vmul.f32 %v1624, %v1202
      %v1702 = vmul.f32 %v1629, %v1206
      %v1703 = vmul.f32 %v1629, %v1208
      %v1704 = vmul.f32 %v1634, %v1210
      %v1705 = vmul.f32 %v1634, %v1212
      %v1706 = vmul.f32 %v1639, %v1216
      %v1707 = vmul.f32 %v1639, %v1218
      %v1708 = vmul.f32 %v1644, %v1220
      %v1709 = vmul.f32 %v1644, %v1222
      %v1710 = vadd.f32 %v1646, %v1648
      %v1711 = vadd.f32 %v1710, %v1650
      %v1712 = vadd.f32 %v1711, %v1652
      %v1713 = vadd.f32 %v1712, %v1654
      %v1714 = vadd.f32 %v1713, %v1656
      %v1715 = vadd.f32 %v1714, %v1658
      %v1716 = vadd.f32 %v1715, %v1660
      %v1717 = vadd.f32 %v1716, %v1662
      %v1718 = vadd.f32 %v1717, %v1664
      %v1719 = vadd.f32 %v1718, %v1666
      %v1720 = vadd.f32 %v1719, %v1668
      %v1721 = vadd.f32 %v1720, %v1670
      %v1722 = vadd.f32 %v1721, %v1672
      %v1723 = vadd.f32 %v1722, %v1674
      %v1724 = vadd.f32 %v1723, %v1676
      %v1725 = vadd.f32 %v1724, %v1678
      %v1726 = vadd.f32 %v1725, %v1680
      %v1727 = vadd.f32 %v1726, %v1682
      %v1728 = vadd.f32 %v1727, %v1684
      %v1729 = vadd.f32 %v1728, %v1686
      %v1730 = vadd.f32 %v1729, %v1688
      %v1731 = vadd.f32 %v1730, %v1690
      %v1732 = vadd.f32 %v1731, %v1692
      %v1733 = vadd.f32 %v1732, %v1694
      %v1734 = vadd.f32 %v1733, %v1696
      %v1735 = vadd.f32 %v1734, %v1698
      %v1736 = vadd.f32 %v1735, %v1700
      %v1737 = vadd.f32 %v1736, %v1702
      %v1738 = vadd.f32 %v1737, %v1704
      %v1739 = vadd.f32 %v1738, %v1706
      %v1740 = vadd.f32 %v1739, %v1708
      %v1741 = vrot.slane %v1740, 4
      %v1742 = vadd.f32 %v1740, %v1741
      %v1743 = vrot.slane %v1742, 2
      %v1744 = vadd.f32 %v1742, %v1743
      %v1745 = vrot.slane %v1744, 1
      %v1746 = vadd.f32 %v1744, %v1745
      %v1747 = vadd.f32 %v1647, %v1649
      %v1748 = vadd.f32 %v1747, %v1651
      %v1749 = vadd.f32 %v1748, %v1653
      %v1750 = vadd.f32 %v1749, %v1655
      %v1751 = vadd.f32 %v1750, %v1657
      %v1752 = vadd.f32 %v1751, %v1659
      %v1753 = vadd.f32 %v1752, %v1661
      %v1754 = vadd.f32 %v1753, %v1663
      %v1755 = vadd.f32 %v1754, %v1665
      %v1756 = vadd.f32 %v1755, %v1667
      %v1757 = vadd.f32 %v1756, %v1669
      %v1758 = vadd.f32 %v1757, %v1671
      %v1759 = vadd.f32 %v1758, %v1673
      %v1760 = vadd.f32 %v1759, %v1675
      %v1761 = vadd.f32 %v1760, %v1677
      %v1762 = vadd.f32 %v1761, %v1679
      %v1763 = vadd.f32 %v1762, %v1681
      %v1764 = vadd.f32 %v1763, %v1683
      %v1765 = vadd.f32 %v1764, %v1685
      %v1766 = vadd.f32 %v1765, %v1687
      %v1767 = vadd.f32 %v1766, %v1689
      %v1768 = vadd.f32 %v1767, %v1691
      %v1769 = vadd.f32 %v1768, %v1693
      %v1770 = vadd.f32 %v1769, %v1695
      %v1771 = vadd.f32 %v1770, %v1697
      %v1772 = vadd.f32 %v1771, %v1699
      %v1773 = vadd.f32 %v1772, %v1701
      %v1774 = vadd.f32 %v1773, %v1703
      %v1775 = vadd.f32 %v1774, %v1705
      %v1776 = vadd.f32 %v1775, %v1707
      %v1777 = vadd.f32 %v1776, %v1709
      %v1778 = vrot.slane %v1777, 4
      %v1779 = vadd.f32 %v1777, %v1778
      %v1780 = vrot.slane %v1779, 2
      %v1781 = vadd.f32 %v1779, %v1780
      %v1782 = vrot.slane %v1781, 1
      %v1783 = vadd.f32 %v1781, %v1782
      %v1786 = vcombine.low %v1746, %v1783
      %v1788 = vunpack.c.l.s4 1966171168
      %v1789 = vunpack.c.0.s8 %v1788
      %v1790 = vlaneseq
      %v1791 = vshrl.u32 %v1790, 7
      %v1792 = vsub.s32 %v1789, %v1791
      %v1793 = vrot.slane %v1786, %v1792
      %v1795 = vunpack.c.l.s4 1966171168
      %v1796 = vunpack.c.0.s8 %v1795
      %v1797 = vlaneseq
      %v1798 = vshrl.u32 %v1797, 7
      %v1799 = vsub.s32 %v1796, %v1798
      %v1800 = vrot.slane %v1793, %v1799
      %v1802 = vadd.f32 %v1485, %v1800
      %v1803 = vlaneseq
      %vm1804 = vcmp.ge.s32.totalorder %v1803, 0
      %vm1805 = vcmp.lt.s32.totalorder %v1803, 256
      %vm1806 = vmand %vm1804, %vm1805
      %1807 = vst.msk [vmem:[#allocation4] sm:$0x3] %vm1806, %v1802
      %1808 = vst.msk [vmem:[#allocation2] sm:$0x1] %vm1473, %v1295
      %p1809 = scmp.eq.s32.totalorder %s18, 7
      // Predicated region
      $region45: #{mobilevitv2_attention.2} parent=39 // pred_check
        %p1810 = pneg %p1809
      $region46: #{mobilevitv2_attention.2} parent=39 // pred_check_branch
        %1812 = sbr.rel (%p1810) target = $region48
      $region47: #{mobilevitv2_attention.2} parent=39 // pred_region
        %v1813 = vld [vmem:[#allocation4] sm:$0x3]
        %v1814 = vld [vmem:[#allocation3] sm:$0x1]
        %1816 = vset.pattern.permute.xlu0 0
        %1817 = vperm.xlu0 %1816, %v1814
        %v1818 = vpop.permute.xlu0 %1817
        %v1820 = vlaneseq
        %v1821 = vshrl.u32 %v1820, 7
        %v1822 = vsub.s32 0, %v1821
        %v1823 = vrot.slane %v1818, %v1822
        %v1824 = vrcp.pop %v1823
        %v1825 = vmul.f32 %v1813, %v1824
        %1826 = vst.msk [vmem:[%s5] sm:$0x3] %vm1806, %v1825
      $region48: #{mobilevitv2_attention.2} parent=39 // pred_fallthru
        _
      // Predicated region
      $region49: #{mobilevitv2_attention.2} parent=39 // pred_check
        %p1827 = pneg %p141
      $region50: #{mobilevitv2_attention.2} parent=39 // pred_check_branch
        %1829 = sbr.rel (%p1827) target = $region52
      $region51: #{mobilevitv2_attention.2} parent=39 // pred_region
        _
      $region52: #{mobilevitv2_attention.2} parent=39 // pred_fallthru
        _
      // Predicated region
      $region53: #{mobilevitv2_attention.2} parent=39 // pred_check
        %p1830 = pneg %p141
      $region54: #{mobilevitv2_attention.2} parent=39 // pred_check_branch
        %1832 = sbr.rel (%p1830) target = $region56
      $region55: #{mobilevitv2_attention.2} parent=39 // pred_region
        _
      $region56: #{mobilevitv2_attention.2} parent=39 // pred_fallthru
        _
    $region40: #{mobilevitv2_attention.2} parent=5 // pred_fallthru
      _
    %p1833 = scmp.le.s32.totalorder 2, %s13
    // Predicated region
    $region57: #{mobilevitv2_attention.2} parent=5 // pred_check
      %p1834 = pneg %p1833
    $region58: #{mobilevitv2_attention.2} parent=5 // pred_check_branch
      %1836 = sbr.rel (%p1834) target = $region60
    $region59: #{mobilevitv2_attention.2} parent=5 // pred_region
      %s1837 = ssub.s32 %s13, 2
    $region60: #{mobilevitv2_attention.2} parent=5 // pred_fallthru
      _
  $region6: #{mobilevitv2_attention.2} parent=0 // loop_footer
    %s17 = sadd.s32 1, %s13
  $region7: #{mobilevitv2_attention.2} parent=0 // loop_footer_branch
    %12 = sbr.rel target = $region3
  $region8: #{mobilevitv2_attention.2} parent=0 // loop_exit
    _

// kernel: mobilevitv2_attention.3
$region0: #{mobilevitv2_attention.3}
  #allocation0 [shape = 'u32[]', space=smem, size = 0x4, offset = 0x4, fixed_abs, tag = 'smem constant byte address 0x4 - core index']
  #allocation1 [shape = 'u32[144,128]{1,0:T(1,128)}', space=vmem, size = 0x12000, scoped, tag = 'internal scratch']
  %s0 = inlined_call_operand.vmem [shape: bf16[2048,256], index: 0, kind: input, shape index: {}]
  %s1 = inlined_call_operand.vmem [shape: f32[1,256], index: 1, kind: input, shape index: {}]
  %s2 = inlined_call_operand.vmem [shape: bf16[256,256], index: 2, kind: input, shape index: {}]
  %s3 = inlined_call_operand.vmem [shape: f32[1,256], index: 3, kind: input, shape index: {}]
  %s4 = inlined_call_operand.vmem [shape: bf16[256,256], index: 4, kind: input, shape index: {}]
  %s5 = inlined_call_operand.vmem [shape: f32[1,256], index: 5, kind: input, shape index: {}]
  %s6 = inlined_call_operand.vmem [shape: f32[2048,256], index: 6, kind: output, shape index: {}]
  %s7 = sld [smem:[#allocation0]]
  $region57: #{mobilevitv2_attention.3} parent=0
    _
  %s9 = ssub.s32 1, %s7
  %s10 = scalar_select 0, %s9, %s7
  loop: start=0, step=1, limit=10
  $region2: #{mobilevitv2_attention.3} parent=0 // loop_pre_header
    _
  $region3: #{mobilevitv2_attention.3} parent=0 // loop_header
    %s12 = sphi 0, %s16
    %p13 = scmp.ge.s32.totalorder %s12, 10
    %s22 = sphi 0, %s24
    %s25 = sphi 0, %s22
    %s26 = sphi 0, %s25
    %s42 = sphi 0, %s26
    %s46 = sphi 0, %s46
    %s48 = sphi 0, %s46
    %s49 = sphi 0, %s48
    %s63 = sphi 0, %s49
    %s67 = sphi 0, %s67
    %s69 = sphi 0, %s67
    %s70 = sphi 0, %s69
    %s84 = sphi 0, %s70
    %s88 = sphi 0, %s88
    %s90 = sphi 0, %s88
    %s91 = sphi 0, %s90
    %s105 = sphi 0, %s91
    %s109 = sphi 0, %s109
    %s111 = sphi 0, %s109
    %s112 = sphi 0, %s111
    %s126 = sphi 0, %s112
    %s130 = sphi 0, %s130
    %s132 = sphi 0, %s130
    %s133 = sphi 0, %s132
    %s147 = sphi 0, %s133
    %s153 = sphi 0, %s155
    %s156 = sphi 0, %s153
    %s157 = sphi 0, %s156
    %s173 = sphi 0, %s157
  $region4: #{mobilevitv2_attention.3} parent=0 // loop_header_branch
    %15 = sbr.rel (%p13) target = $region8
  $region5: #{mobilevitv2_attention.3} parent=0 // loop_body
    %s17 = ssub.s32 %s12, 1
    %s18 = ssub.s32 %s12, 2
    %s19 = sadd.s32 %s12, 1
    %s20 = ssub.s32 %s12, %s19
    %p21 = scmp.eq.s32.totalorder %s20, 0
    %s23 = sadd.s32 %s22, 1
    %s24 = scalar_select %p21, %s22, %s23
    %p27 = pneg %p21
    %p28 = scmp.eq.s32.totalorder %s12, 7
    %p29 = por %p27, %p28
    %p30 = scmp.ne.s32.totalorder %s22, %s25
    %p31 = scmp.eq.s32.totalorder %s12, 0
    %p32 = por %p30, %p31
    %p33 = scmp.ne.s32.totalorder %s22, %s25
    %p34 = scmp.eq.s32.totalorder %s17, 7
    %p35 = por %p33, %p34
    %p36 = scmp.ne.s32.totalorder %s25, %s26
    %p37 = scmp.eq.s32.totalorder %s17, 0
    %p38 = por %p36, %p37
    %p39 = scmp.ne.s32.totalorder %s25, %s26
    %p40 = scmp.eq.s32.totalorder %s18, 7
    %p41 = por %p39, %p40
    %p43 = scmp.ne.s32.totalorder %s26, %s42
    %p44 = scmp.eq.s32.totalorder %s18, 0
    %p45 = por %p43, %p44
    %s47 = sadd.s32 %s46, 1
    %p50 = scmp.eq.s32.totalorder %s12, 7
    %p51 = scmp.ne.s32.totalorder %s46, %s48
    %p52 = scmp.eq.s32.totalorder %s12, 0
    %p53 = por %p51, %p52
    %p54 = scmp.ne.s32.totalorder %s46, %s48
    %p55 = scmp.eq.s32.totalorder %s17, 7
    %p56 = por %p54, %p55
    %p57 = scmp.ne.s32.totalorder %s48, %s49
    %p58 = scmp.eq.s32.totalorder %s17, 0
    %p59 = por %p57, %p58
    %p60 = scmp.ne.s32.totalorder %s48, %s49
    %p61 = scmp.eq.s32.totalorder %s18, 7
    %p62 = por %p60, %p61
    %p64 = scmp.ne.s32.totalorder %s49, %s63
    %p65 = scmp.eq.s32.totalorder %s18, 0
    %p66 = por %p64, %p65
    %s68 = sadd.s32 %s67, 1
    %p71 = scmp.eq.s32.totalorder %s12, 7
    %p72 = scmp.ne.s32.totalorder %s67, %s69
    %p73 = scmp.eq.s32.totalorder %s12, 0
    %p74 = por %p72, %p73
    %p75 = scmp.ne.s32.totalorder %s67, %s69
    %p76 = scmp.eq.s32.totalorder %s17, 7
    %p77 = por %p75, %p76
    %p78 = scmp.ne.s32.totalorder %s69, %s70
    %p79 = scmp.eq.s32.totalorder %s17, 0
    %p80 = por %p78, %p79
    %p81 = scmp.ne.s32.totalorder %s69, %s70
    %p82 = scmp.eq.s32.totalorder %s18, 7
    %p83 = por %p81, %p82
    %p85 = scmp.ne.s32.totalorder %s70, %s84
    %p86 = scmp.eq.s32.totalorder %s18, 0
    %p87 = por %p85, %p86
    %s89 = sadd.s32 %s88, 1
    %p92 = scmp.eq.s32.totalorder %s12, 7
    %p93 = scmp.ne.s32.totalorder %s88, %s90
    %p94 = scmp.eq.s32.totalorder %s12, 0
    %p95 = por %p93, %p94
    %p96 = scmp.ne.s32.totalorder %s88, %s90
    %p97 = scmp.eq.s32.totalorder %s17, 7
    %p98 = por %p96, %p97
    %p99 = scmp.ne.s32.totalorder %s90, %s91
    %p100 = scmp.eq.s32.totalorder %s17, 0
    %p101 = por %p99, %p100
    %p102 = scmp.ne.s32.totalorder %s90, %s91
    %p103 = scmp.eq.s32.totalorder %s18, 7
    %p104 = por %p102, %p103
    %p106 = scmp.ne.s32.totalorder %s91, %s105
    %p107 = scmp.eq.s32.totalorder %s18, 0
    %p108 = por %p106, %p107
    %s110 = sadd.s32 %s109, 1
    %p113 = scmp.eq.s32.totalorder %s12, 7
    %p114 = scmp.ne.s32.totalorder %s109, %s111
    %p115 = scmp.eq.s32.totalorder %s12, 0
    %p116 = por %p114, %p115
    %p117 = scmp.ne.s32.totalorder %s109, %s111
    %p118 = scmp.eq.s32.totalorder %s17, 7
    %p119 = por %p117, %p118
    %p120 = scmp.ne.s32.totalorder %s111, %s112
    %p121 = scmp.eq.s32.totalorder %s17, 0
    %p122 = por %p120, %p121
    %p123 = scmp.ne.s32.totalorder %s111, %s112
    %p124 = scmp.eq.s32.totalorder %s18, 7
    %p125 = por %p123, %p124
    %p127 = scmp.ne.s32.totalorder %s112, %s126
    %p128 = scmp.eq.s32.totalorder %s18, 0
    %p129 = por %p127, %p128
    %s131 = sadd.s32 %s130, 1
    %p134 = scmp.eq.s32.totalorder %s12, 7
    %p135 = scmp.ne.s32.totalorder %s130, %s132
    %p136 = scmp.eq.s32.totalorder %s12, 0
    %p137 = por %p135, %p136
    %p138 = scmp.ne.s32.totalorder %s130, %s132
    %p139 = scmp.eq.s32.totalorder %s17, 7
    %p140 = por %p138, %p139
    %p141 = scmp.ne.s32.totalorder %s132, %s133
    %p142 = scmp.eq.s32.totalorder %s17, 0
    %p143 = por %p141, %p142
    %p144 = scmp.ne.s32.totalorder %s132, %s133
    %p145 = scmp.eq.s32.totalorder %s18, 7
    %p146 = por %p144, %p145
    %p148 = scmp.ne.s32.totalorder %s133, %s147
    %p149 = scmp.eq.s32.totalorder %s18, 0
    %p150 = por %p148, %p149
    %s151 = ssub.s32 %s12, %s19
    %p152 = scmp.eq.s32.totalorder %s151, 0
    %s154 = sadd.s32 %s153, 1
    %s155 = scalar_select %p152, %s153, %s154
    %p158 = pneg %p152
    %p159 = scmp.eq.s32.totalorder %s12, 7
    %p160 = por %p158, %p159
    %p161 = scmp.ne.s32.totalorder %s153, %s156
    %p162 = scmp.eq.s32.totalorder %s12, 0
    %p163 = por %p161, %p162
    %p164 = scmp.ne.s32.totalorder %s153, %s156
    %p165 = scmp.eq.s32.totalorder %s17, 7
    %p166 = por %p164, %p165
    %p167 = scmp.ne.s32.totalorder %s156, %s157
    %p168 = scmp.eq.s32.totalorder %s17, 0
    %p169 = por %p167, %p168
    %p170 = scmp.ne.s32.totalorder %s156, %s157
    %p171 = scmp.eq.s32.totalorder %s18, 7
    %p172 = por %p170, %p171
    %p174 = scmp.ne.s32.totalorder %s157, %s173
    %p175 = scmp.eq.s32.totalorder %s18, 0
    %p176 = por %p174, %p175
    %p177 = scmp.le.s32.totalorder 1, %s12
    %p178 = scmp.lt.s32.totalorder %s12, 9
    %p179 = pnand %p177, %p178
    %p180 = pneg %p179
    // Predicated region
    $region9: #{mobilevitv2_attention.3} parent=5 // pred_check
      _
    $region10: #{mobilevitv2_attention.3} parent=5 // pred_check_branch
      %182 = sbr.rel (%p179) target = $region12
    $region11: #{mobilevitv2_attention.3} parent=5 // pred_region
      %s183 = ssub.s32 %s12, 1
      // Predicated region
      $region13: #{mobilevitv2_attention.3} parent=11 // pred_check
        %p184 = pneg %p59
      $region14: #{mobilevitv2_attention.3} parent=11 // pred_check_branch
        %186 = sbr.rel (%p184) target = $region16
      $region15: #{mobilevitv2_attention.3} parent=11 // pred_region
        _
      $region16: #{mobilevitv2_attention.3} parent=11 // pred_fallthru
        _
      // Predicated region
      $region17: #{mobilevitv2_attention.3} parent=11 // pred_check
        %p187 = pneg %p80
      $region18: #{mobilevitv2_attention.3} parent=11 // pred_check_branch
        %189 = sbr.rel (%p187) target = $region20
      $region19: #{mobilevitv2_attention.3} parent=11 // pred_region
        _
      $region20: #{mobilevitv2_attention.3} parent=11 // pred_fallthru
        _
      // Predicated region
      $region21: #{mobilevitv2_attention.3} parent=11 // pred_check
        %p190 = pneg %p101
      $region22: #{mobilevitv2_attention.3} parent=11 // pred_check_branch
        %192 = sbr.rel (%p190) target = $region24
      $region23: #{mobilevitv2_attention.3} parent=11 // pred_region
        _
      $region24: #{mobilevitv2_attention.3} parent=11 // pred_fallthru
        _
      // Predicated region
      $region25: #{mobilevitv2_attention.3} parent=11 // pred_check
        %p193 = pneg %p122
      $region26: #{mobilevitv2_attention.3} parent=11 // pred_check_branch
        %195 = sbr.rel (%p193) target = $region28
      $region27: #{mobilevitv2_attention.3} parent=11 // pred_region
        _
      $region28: #{mobilevitv2_attention.3} parent=11 // pred_fallthru
        _
      // Predicated region
      $region29: #{mobilevitv2_attention.3} parent=11 // pred_check
        %p196 = pneg %p143
      $region30: #{mobilevitv2_attention.3} parent=11 // pred_check_branch
        %198 = sbr.rel (%p196) target = $region32
      $region31: #{mobilevitv2_attention.3} parent=11 // pred_region
        _
      $region32: #{mobilevitv2_attention.3} parent=11 // pred_fallthru
        _
    $region12: #{mobilevitv2_attention.3} parent=5 // pred_fallthru
      _
    %p199 = scmp.lt.s32.totalorder %s12, 8
    // Predicated region
    $region33: #{mobilevitv2_attention.3} parent=5 // pred_check
      %p200 = pneg %p199
    $region34: #{mobilevitv2_attention.3} parent=5 // pred_check_branch
      %202 = sbr.rel (%p200) target = $region36
    $region35: #{mobilevitv2_attention.3} parent=5 // pred_region
      // Predicated region
      $region37: #{mobilevitv2_attention.3} parent=35 // pred_check
        %p203 = pneg %p32
      $region38: #{mobilevitv2_attention.3} parent=35 // pred_check_branch
        %205 = sbr.rel (%p203) target = $region40
      $region39: #{mobilevitv2_attention.3} parent=35 // pred_region
        %s206 = smul.u32 32, %s12
        %p207 = scmp.lt.s32.totalorder %s206, 255
        %s208 = scalar_select %p207, %s206, 255
        %s209 = smul.addr %s208, 2
        %s210 = smul.addr %s209, 4
        %s211 = scalar_lea.vmem %s0, %s210
        %s212 = smul.u32 32, %s12
      $region40: #{mobilevitv2_attention.3} parent=35 // pred_fallthru
        _
    $region36: #{mobilevitv2_attention.3} parent=5 // pred_fallthru
      _
    %p213 = scmp.le.s32.totalorder 1, %s12
    %p214 = scmp.lt.s32.totalorder %s12, 9
    %p215 = pnand %p213, %p214
    %p216 = pneg %p215
    // Predicated region
    $region41: #{mobilevitv2_attention.3} parent=5 // pred_check
      _
    $region42: #{mobilevitv2_attention.3} parent=5 // pred_check_branch
      %218 = sbr.rel (%p215) target = $region44
    $region43: #{mobilevitv2_attention.3} parent=5 // pred_region
      %s219 = ssub.s32 %s12, 1
      %s220 = smul.u32 32, %s17
      %p221 = scmp.lt.s32.totalorder %s220, 255
      %s222 = scalar_select %p221, %s220, 255
      %s223 = smul.addr %s222, 2
      %s224 = smul.addr %s223, 4
      %s225 = scalar_lea.vmem %s0, %s224
      %p226 = pneg %p38
      %p227 = pneg %p35
      %p228 = pneg %p59
      %p229 = pneg %p56
      %p230 = pneg %p80
      %p231 = pneg %p77
      %p232 = pneg %p101
      %p233 = pneg %p98
      %p234 = pneg %p122
      %p235 = pneg %p119
      %p236 = pneg %p143
      %p237 = pneg %p140
      %p238 = pneg %p169
      %p239 = pneg %p166
      %s240 = smul.u32 32, %s17
      %p241 = scmp.lt.s32.totalorder %s240, 255
      %s242 = scalar_select %p241, %s240, 255
      %s243 = smul.addr %s242, 2
      %s244 = smul.addr %s243, 8
      %s245 = scalar_lea.vmem %s6, %s244
      %s246 = smul.u32 32, %s17
      %p247 = scmp.lt.s32.totalorder %s246, 255
      %s248 = scalar_select %p247, %s246, 255
      %s249 = smul.addr %s248, 2
      %s250 = smul.addr %s249, 4
      %s251 = scalar_lea.vmem %s0, %s250
      %s252 = smul.u32 32, %s17
      %s253 = smul.u32 32, %s17
      %p254 = scmp.lt.s32.totalorder %s253, 255
      %s255 = scalar_select %p254, %s253, 255
      %s256 = smul.addr %s255, 2
      %s257 = smul.addr %s256, 8
      %s258 = scalar_lea.vmem %s6, %s257
      %s259 = smul.u32 32, %s17
      %v260 = vld [vmem:[%s251] sm:$0xff]
      %v261 = vld [vmem:[%s251 + $0x8] sm:$0xff]
      %v262 = vld [vmem:[%s251 + $0x10] sm:$0xff]
      %v263 = vld [vmem:[%s251 + $0x18] sm:$0xff]
      %v264 = vld [vmem:[%s251 + $0x20] sm:$0xff]
      %v265 = vld [vmem:[%s251 + $0x28] sm:$0xff]
      %v266 = vld [vmem:[%s251 + $0x30] sm:$0xff]
      %v267 = vld [vmem:[%s251 + $0x38] sm:$0xff]
      %v268 = vld [vmem:[%s251 + $0x40] sm:$0xff]
      %v269 = vld [vmem:[%s251 + $0x48] sm:$0xff]
      %v270 = vld [vmem:[%s251 + $0x50] sm:$0xff]
      %v271 = vld [vmem:[%s251 + $0x58] sm:$0xff]
      %v272 = vld [vmem:[%s251 + $0x60] sm:$0xff]
      %v273 = vld [vmem:[%s251 + $0x68] sm:$0xff]
      %v274 = vld [vmem:[%s251 + $0x70] sm:$0xff]
      %v275 = vld [vmem:[%s251 + $0x78] sm:$0xff]
      %v276 = vld [vmem:[%s251 + $0x80] sm:$0xff]
      %v277 = vld [vmem:[%s251 + $0x88] sm:$0xff]
      %v278 = vld [vmem:[%s251 + $0x90] sm:$0xff]
      %v279 = vld [vmem:[%s251 + $0x98] sm:$0xff]
      %v280 = vld [vmem:[%s251 + $0xa0] sm:$0xff]
      %v281 = vld [vmem:[%s251 + $0xa8] sm:$0xff]
      %v282 = vld [vmem:[%s251 + $0xb0] sm:$0xff]
      %v283 = vld [vmem:[%s251 + $0xb8] sm:$0xff]
      %v284 = vld [vmem:[%s251 + $0xc0] sm:$0xff]
      %v285 = vld [vmem:[%s251 + $0xc8] sm:$0xff]
      %v286 = vld [vmem:[%s251 + $0xd0] sm:$0xff]
      %v287 = vld [vmem:[%s251 + $0xd8] sm:$0xff]
      %v288 = vld [vmem:[%s251 + $0xe0] sm:$0xff]
      %v289 = vld [vmem:[%s251 + $0xe8] sm:$0xff]
      %v290 = vld [vmem:[%s251 + $0xf0] sm:$0xff]
      %v291 = vld [vmem:[%s251 + $0xf8] sm:$0xff]
      %v292 = vld [vmem:[%s2] sm:$0xff]
      %v293 = vld [vmem:[%s2 + $0x8] sm:$0xff]
      %v294 = vld [vmem:[%s2 + $0x10] sm:$0xff]
      %v295 = vld [vmem:[%s2 + $0x18] sm:$0xff]
      %v296 = vld [vmem:[%s2 + $0x20] sm:$0xff]
      %v297 = vld [vmem:[%s2 + $0x28] sm:$0xff]
      %v298 = vld [vmem:[%s2 + $0x30] sm:$0xff]
      %v299 = vld [vmem:[%s2 + $0x38] sm:$0xff]
      %v300 = vld [vmem:[%s2 + $0x40] sm:$0xff]
      %v301 = vld [vmem:[%s2 + $0x48] sm:$0xff]
      %v302 = vld [vmem:[%s2 + $0x50] sm:$0xff]
      %v303 = vld [vmem:[%s2 + $0x58] sm:$0xff]
      %v304 = vld [vmem:[%s2 + $0x60] sm:$0xff]
      %v305 = vld [vmem:[%s2 + $0x68] sm:$0xff]
      %v306 = vld [vmem:[%s2 + $0x70] sm:$0xff]
      %v307 = vld [vmem:[%s2 + $0x78] sm:$0xff]
      %v308 = vld [vmem:[%s2 + $0x80] sm:$0xff]
      %v309 = vld [vmem:[%s2 + $0x88] sm:$0xff]
      %v310 = vld [vmem:[%s2 + $0x90] sm:$0xff]
      %v311 = vld [vmem:[%s2 + $0x98] sm:$0xff]
      %v312 = vld [vmem:[%s2 + $0xa0] sm:$0xff]
      %v313 = vld [vmem:[%s2 + $0xa8] sm:$0xff]
      %v314 = vld [vmem:[%s2 + $0xb0] sm:$0xff]
      %v315 = vld [vmem:[%s2 + $0xb8] sm:$0xff]
      %v316 = vld [vmem:[%s2 + $0xc0] sm:$0xff]
      %v317 = vld [vmem:[%s2 + $0xc8] sm:$0xff]
      %v318 = vld [vmem:[%s2 + $0xd0] sm:$0xff]
      %v319 = vld [vmem:[%s2 + $0xd8] sm:$0xff]
      %v320 = vld [vmem:[%s2 + $0xe0] sm:$0xff]
      %v321 = vld [vmem:[%s2 + $0xe8] sm:$0xff]
      %v322 = vld [vmem:[%s2 + $0xf0] sm:$0xff]
      %v323 = vld [vmem:[%s2 + $0xf8] sm:$0xff]
      %v324 = vld [vmem:[%s3] sm:$0x3]
      %v326 = vlaneseq
      %v327 = vshrl.u32 %v326, 7
      %v328 = vsub.s32 0, %v327
      %v329 = vrot.slane %v324, %v328
      %v330 = vlaneseq
      %v331 = vshrl.u32 %v330, 7
      %v332 = vsub.s32 1, %v331
      %v333 = vrot.slane %v324, %v332
      %v368 = vunpack.c.l.b16 %v260
      %v369 = vunpack.c.h.b16 %v260
      %v370 = vunpack.c.l.b16 %v261
      %v371 = vunpack.c.h.b16 %v261
      %v372 = vunpack.c.l.b16 %v262
      %v373 = vunpack.c.h.b16 %v262
      %v374 = vunpack.c.l.b16 %v263
      %v375 = vunpack.c.h.b16 %v263
      %v376 = vunpack.c.l.b16 %v264
      %v377 = vunpack.c.h.b16 %v264
      %v378 = vunpack.c.l.b16 %v265
      %v379 = vunpack.c.h.b16 %v265
      %v380 = vunpack.c.l.b16 %v266
      %v381 = vunpack.c.h.b16 %v266
      %v382 = vunpack.c.l.b16 %v267
      %v383 = vunpack.c.h.b16 %v267
      %v384 = vunpack.c.l.b16 %v268
      %v385 = vunpack.c.h.b16 %v268
      %v386 = vunpack.c.l.b16 %v269
      %v387 = vunpack.c.h.b16 %v269
      %v388 = vunpack.c.l.b16 %v270
      %v389 = vunpack.c.h.b16 %v270
      %v390 = vunpack.c.l.b16 %v271
      %v391 = vunpack.c.h.b16 %v271
      %v392 = vunpack.c.l.b16 %v272
      %v393 = vunpack.c.h.b16 %v272
      %v394 = vunpack.c.l.b16 %v273
      %v395 = vunpack.c.h.b16 %v273
      %v396 = vunpack.c.l.b16 %v274
      %v397 = vunpack.c.h.b16 %v274
      %v398 = vunpack.c.l.b16 %v275
      %v399 = vunpack.c.h.b16 %v275
      %v400 = vunpack.c.l.b16 %v276
      %v401 = vunpack.c.h.b16 %v276
      %v402 = vunpack.c.l.b16 %v277
      %v403 = vunpack.c.h.b16 %v277
      %v404 = vunpack.c.l.b16 %v278
      %v405 = vunpack.c.h.b16 %v278
      %v406 = vunpack.c.l.b16 %v279
      %v407 = vunpack.c.h.b16 %v279
      %v408 = vunpack.c.l.b16 %v280
      %v409 = vunpack.c.h.b16 %v280
      %v410 = vunpack.c.l.b16 %v281
      %v411 = vunpack.c.h.b16 %v281
      %v412 = vunpack.c.l.b16 %v282
      %v413 = vunpack.c.h.b16 %v282
      %v414 = vunpack.c.l.b16 %v283
      %v415 = vunpack.c.h.b16 %v283
      %v416 = vunpack.c.l.b16 %v284
      %v417 = vunpack.c.h.b16 %v284
      %v418 = vunpack.c.l.b16 %v285
      %v419 = vunpack.c.h.b16 %v285
      %v420 = vunpack.c.l.b16 %v286
      %v421 = vunpack.c.h.b16 %v286
      %v422 = vunpack.c.l.b16 %v287
      %v423 = vunpack.c.h.b16 %v287
      %v424 = vunpack.c.l.b16 %v288
      %v425 = vunpack.c.h.b16 %v288
      %v426 = vunpack.c.l.b16 %v289
      %v427 = vunpack.c.h.b16 %v289
      %v428 = vunpack.c.l.b16 %v290
      %v429 = vunpack.c.h.b16 %v290
      %v430 = vunpack.c.l.b16 %v291
      %v431 = vunpack.c.h.b16 %v291
      %v432 = vpack.c.b16 %v370, %v368
      %v433 = vpack.c.b16 %v371, %v369
      %v434 = vpack.c.b16 %v374, %v372
      %v435 = vpack.c.b16 %v375, %v373
      %v436 = vpack.c.b16 %v378, %v376
      %v437 = vpack.c.b16 %v379, %v377
      %v438 = vpack.c.b16 %v382, %v380
      %v439 = vpack.c.b16 %v383, %v381
      %v440 = vpack.c.b16 %v386, %v384
      %v441 = vpack.c.b16 %v387, %v385
      %v442 = vpack.c.b16 %v390, %v388
      %v443 = vpack.c.b16 %v391, %v389
      %v444 = vpack.c.b16 %v394, %v392
      %v445 = vpack.c.b16 %v395, %v393
      %v446 = vpack.c.b16 %v398, %v396
      %v447 = vpack.c.b16 %v399, %v397
      %v448 = vpack.c.b16 %v402, %v400
      %v449 = vpack.c.b16 %v403, %v401
      %v450 = vpack.c.b16 %v406, %v404
      %v451 = vpack.c.b16 %v407, %v405
      %v452 = vpack.c.b16 %v410, %v408
      %v453 = vpack.c.b16 %v411, %v409
      %v454 = vpack.c.b16 %v414, %v412
      %v455 = vpack.c.b16 %v415, %v413
      %v456 = vpack.c.b16 %v418, %v416
      %v457 = vpack.c.b16 %v419, %v417
      %v458 = vpack.c.b16 %v422, %v420
      %v459 = vpack.c.b16 %v423, %v421
      %v460 = vpack.c.b16 %v426, %v424
      %v461 = vpack.c.b16 %v427, %v425
      %v462 = vpack.c.b16 %v430, %v428
      %v463 = vpack.c.b16 %v431, %v429
      %v528 = vunpack.c.l.b16 %v292
      %v529 = vunpack.c.h.b16 %v292
      %v530 = vunpack.c.l.b16 %v293
      %v531 = vunpack.c.h.b16 %v293
      %v532 = vunpack.c.l.b16 %v294
      %v533 = vunpack.c.h.b16 %v294
      %v534 = vunpack.c.l.b16 %v295
      %v535 = vunpack.c.h.b16 %v295
      %v536 = vunpack.c.l.b16 %v296
      %v537 = vunpack.c.h.b16 %v296
      %v538 = vunpack.c.l.b16 %v297
      %v539 = vunpack.c.h.b16 %v297
      %v540 = vunpack.c.l.b16 %v298
      %v541 = vunpack.c.h.b16 %v298
      %v542 = vunpack.c.l.b16 %v299
      %v543 = vunpack.c.h.b16 %v299
      %v544 = vunpack.c.l.b16 %v300
      %v545 = vunpack.c.h.b16 %v300
      %v546 = vunpack.c.l.b16 %v301
      %v547 = vunpack.c.h.b16 %v301
      %v548 = vunpack.c.l.b16 %v302
      %v549 = vunpack.c.h.b16 %v302
      %v550 = vunpack.c.l.b16 %v303
      %v551 = vunpack.c.h.b16 %v303
      %v552 = vunpack.c.l.b16 %v304
      %v553 = vunpack.c.h.b16 %v304
      %v554 = vunpack.c.l.b16 %v305
      %v555 = vunpack.c.h.b16 %v305
      %v556 = vunpack.c.l.b16 %v306
      %v557 = vunpack.c.h.b16 %v306
      %v558 = vunpack.c.l.b16 %v307
      %v559 = vunpack.c.h.b16 %v307
      %v560 = vunpack.c.l.b16 %v308
      %v561 = vunpack.c.h.b16 %v308
      %v562 = vunpack.c.l.b16 %v309
      %v563 = vunpack.c.h.b16 %v309
      %v564 = vunpack.c.l.b16 %v310
      %v565 = vunpack.c.h.b16 %v310
      %v566 = vunpack.c.l.b16 %v311
      %v567 = vunpack.c.h.b16 %v311
      %v568 = vunpack.c.l.b16 %v312
      %v569 = vunpack.c.h.b16 %v312
      %v570 = vunpack.c.l.b16 %v313
      %v571 = vunpack.c.h.b16 %v313
      %v572 = vunpack.c.l.b16 %v314
      %v573 = vunpack.c.h.b16 %v314
      %v574 = vunpack.c.l.b16 %v315
      %v575 = vunpack.c.h.b16 %v315
      %v576 = vunpack.c.l.b16 %v316
      %v577 = vunpack.c.h.b16 %v316
      %v578 = vunpack.c.l.b16 %v317
      %v579 = vunpack.c.h.b16 %v317
      %v580 = vunpack.c.l.b16 %v318
      %v581 = vunpack.c.h.b16 %v318
      %v582 = vunpack.c.l.b16 %v319
      %v583 = vunpack.c.h.b16 %v319
      %v584 = vunpack.c.l.b16 %v320
      %v585 = vunpack.c.h.b16 %v320
      %v586 = vunpack.c.l.b16 %v321
      %v587 = vunpack.c.h.b16 %v321
      %v588 = vunpack.c.l.b16 %v322
      %v589 = vunpack.c.h.b16 %v322
      %v590 = vunpack.c.l.b16 %v323
      %v591 = vunpack.c.h.b16 %v323
      %v592 = vpack.c.b16 %v530, %v528
      %v593 = vpack.c.b16 %v531, %v529
      %v594 = vpack.c.b16 %v534, %v532
      %v595 = vpack.c.b16 %v535, %v533
      %v596 = vpack.c.b16 %v538, %v536
      %v597 = vpack.c.b16 %v539, %v537
      %v598 = vpack.c.b16 %v542, %v540
      %v599 = vpack.c.b16 %v543, %v541
      %v600 = vpack.c.b16 %v546, %v544
      %v601 = vpack.c.b16 %v547, %v545
      %v602 = vpack.c.b16 %v550, %v548
      %v603 = vpack.c.b16 %v551, %v549
      %v604 = vpack.c.b16 %v554, %v552
      %v605 = vpack.c.b16 %v555, %v553
      %v606 = vpack.c.b16 %v558, %v556
      %v607 = vpack.c.b16 %v559, %v557
      %v608 = vpack.c.b16 %v562, %v560
      %v609 = vpack.c.b16 %v563, %v561
      %v610 = vpack.c.b16 %v566, %v564
      %v611 = vpack.c.b16 %v567, %v565
      %v612 = vpack.c.b16 %v570, %v568
      %v613 = vpack.c.b16 %v571, %v569
      %v614 = vpack.c.b16 %v574, %v572
      %v615 = vpack.c.b16 %v575, %v573
      %v616 = vpack.c.b16 %v578, %v576
      %v617 = vpack.c.b16 %v579, %v577
      %v618 = vpack.c.b16 %v582, %v580
      %v619 = vpack.c.b16 %v583, %v581
      %v620 = vpack.c.b16 %v586, %v584
      %v621 = vpack.c.b16 %v587, %v585
      %v622 = vpack.c.b16 %v590, %v588
      %v623 = vpack.c.b16 %v591, %v589
      %656 = vmatprep.subr.bf16.mxu0 %v593
      %657 = vmatpush1.bf16.msra.mxu0 %v592
      %658 = vmatprep.subr.bf16.mxu0 %v595
      %659 = vmatpush1.bf16.msra.mxu0 %v594
      %660 = vmatprep.subr.bf16.mxu0 %v597
      %661 = vmatpush1.bf16.msra.mxu0 %v596
      %662 = vmatprep.subr.bf16.mxu0 %v599
      %663 = vmatpush1.bf16.msra.mxu0 %v598
      %664 = vmatprep.subr.bf16.mxu0 %v601
      %665 = vmatpush1.bf16.msra.mxu0 %v600
      %666 = vmatprep.subr.bf16.mxu0 %v603
      %667 = vmatpush1.bf16.msra.mxu0 %v602
      %668 = vmatprep.subr.bf16.mxu0 %v605
      %669 = vmatpush1.bf16.msra.mxu0 %v604
      %670 = vmatprep.subr.bf16.mxu0 %v607
      %671 = vmatpush1.bf16.msra.mxu0 %v606
      %672 = vmatprep.subr.bf16.mxu0 %v609
      %673 = vmatpush1.bf16.msra.mxu0 %v608
      %674 = vmatprep.subr.bf16.mxu0 %v611
      %675 = vmatpush1.bf16.msra.mxu0 %v610
      %676 = vmatprep.subr.bf16.mxu0 %v613
      %677 = vmatpush1.bf16.msra.mxu0 %v612
      %678 = vmatprep.subr.bf16.mxu0 %v615
      %679 = vmatpush1.bf16.msra.mxu0 %v614
      %680 = vmatprep.subr.bf16.mxu0 %v617
      %681 = vmatpush1.bf16.msra.mxu0 %v616
      %682 = vmatprep.subr.bf16.mxu0 %v619
      %683 = vmatpush1.bf16.msra.mxu0 %v618
      %684 = vmatprep.subr.bf16.mxu0 %v621
      %685 = vmatpush1.bf16.msra.mxu0 %v620
      %686 = vmatprep.subr.bf16.mxu0 %v623
      %687 = vmatpush1.bf16.msra.mxu0 %v622
      %688 = vmatprep.mubr.bf16.mxu0 %v433
      %689 = vmatmul.mubr.bf16.gmra.mrb[0].mxu0 %v432
      %v690 = vpop.f32.mrb[0].mxu0
      %v691 = vadd.f32 %v329, %v690
      %v692 = vpop.f32.mrb[0].mxu0
      %v693 = vadd.f32 %v333, %v692
      %v694 = vpop.f32.mrb[0].mxu0
      %v695 = vadd.f32 %v329, %v694
      %v696 = vpop.f32.mrb[0].mxu0
      %v697 = vadd.f32 %v333, %v696
      %698 = vmatprep.mubr.bf16.mxu0 %v435
      %699 = vmatmul.mubr.bf16.gmra.mrb[0].mxu0 %v434
      %v700 = vpop.f32.mrb[0].mxu0
      %v701 = vadd.f32 %v329, %v700
      %v702 = vpop.f32.mrb[0].mxu0
      %v703 = vadd.f32 %v333, %v702
      %v704 = vpop.f32.mrb[0].mxu0
      %v705 = vadd.f32 %v329, %v704
      %v706 = vpop.f32.mrb[0].mxu0
      %v707 = vadd.f32 %v333, %v706
      %708 = vmatprep.mubr.bf16.mxu0 %v437
      %709 = vmatmul.mubr.bf16.gmra.mrb[0].mxu0 %v436
      %v710 = vpop.f32.mrb[0].mxu0
      %v711 = vadd.f32 %v329, %v710
      %v712 = vpop.f32.mrb[0].mxu0
      %v713 = vadd.f32 %v333, %v712
      %v714 = vpop.f32.mrb[0].mxu0
      %v715 = vadd.f32 %v329, %v714
      %v716 = vpop.f32.mrb[0].mxu0
      %v717 = vadd.f32 %v333, %v716
      %718 = vmatprep.mubr.bf16.mxu0 %v439
      %719 = vmatmul.mubr.bf16.gmra.mrb[0].mxu0 %v438
      %v720 = vpop.f32.mrb[0].mxu0
      %v721 = vadd.f32 %v329, %v720
      %v722 = vpop.f32.mrb[0].mxu0
      %v723 = vadd.f32 %v333, %v722
      %v724 = vpop.f32.mrb[0].mxu0
      %v725 = vadd.f32 %v329, %v724
      %v726 = vpop.f32.mrb[0].mxu0
      %v727 = vadd.f32 %v333, %v726
      %728 = vmatprep.mubr.bf16.mxu0 %v441
      %729 = vmatmul.mubr.bf16.gmra.mrb[0].mxu0 %v440
      %v730 = vpop.f32.mrb[0].mxu0
      %v731 = vadd.f32 %v329, %v730
      %v732 = vpop.f32.mrb[0].mxu0
      %v733 = vadd.f32 %v333, %v732
      %v734 = vpop.f32.mrb[0].mxu0
      %v735 = vadd.f32 %v329, %v734
      %v736 = vpop.f32.mrb[0].mxu0
      %v737 = vadd.f32 %v333, %v736
      %738 = vmatprep.mubr.bf16.mxu0 %v443
      %739 = vmatmul.mubr.bf16.gmra.mrb[0].mxu0 %v442
      %v740 = vpop.f32.mrb[0].mxu0
      %v741 = vadd.f32 %v329, %v740
      %v742 = vpop.f32.mrb[0].mxu0
      %v743 = vadd.f32 %v333, %v742
      %v744 = vpop.f32.mrb[0].mxu0
      %v745 = vadd.f32 %v329, %v744
      %v746 = vpop.f32.mrb[0].mxu0
      %v747 = vadd.f32 %v333, %v746
      %748 = vmatprep.mubr.bf16.mxu0 %v445
      %749 = vmatmul.mubr.bf16.gmra.mrb[0].mxu0 %v444
      %v750 = vpop.f32.mrb[0].mxu0
      %v751 = vadd.f32 %v329, %v750
      %v752 = vpop.f32.mrb[0].mxu0
      %v753 = vadd.f32 %v333, %v752
      %v754 = vpop.f32.mrb[0].mxu0
      %v755 = vadd.f32 %v329, %v754
      %v756 = vpop.f32.mrb[0].mxu0
      %v757 = vadd.f32 %v333, %v756
      %758 = vmatprep.mubr.bf16.mxu0 %v447
      %759 = vmatmul.mubr.bf16.gmra.mrb[0].mxu0 %v446
      %v760 = vpop.f32.mrb[0].mxu0
      %v761 = vadd.f32 %v329, %v760
      %v762 = vpop.f32.mrb[0].mxu0
      %v763 = vadd.f32 %v333, %v762
      %v764 = vpop.f32.mrb[0].mxu0
      %v765 = vadd.f32 %v329, %v764
      %v766 = vpop.f32.mrb[0].mxu0
      %v767 = vadd.f32 %v333, %v766
      %768 = vmatprep.mubr.bf16.mxu0 %v449
      %769 = vmatmul.mubr.bf16.gmra.mrb[0].mxu0 %v448
      %v770 = vpop.f32.mrb[0].mxu0
      %v771 = vadd.f32 %v329, %v770
      %v772 = vpop.f32.mrb[0].mxu0
      %v773 = vadd.f32 %v333, %v772
      %v774 = vpop.f32.mrb[0].mxu0
      %v775 = vadd.f32 %v329, %v774
      %v776 = vpop.f32.mrb[0].mxu0
      %v777 = vadd.f32 %v333, %v776
      %778 = vmatprep.mubr.bf16.mxu0 %v451
      %779 = vmatmul.mubr.bf16.gmra.mrb[0].mxu0 %v450
      %v780 = vpop.f32.mrb[0].mxu0
      %v781 = vadd.f32 %v329, %v780
      %v782 = vpop.f32.mrb[0].mxu0
      %v783 = vadd.f32 %v333, %v782
      %v784 = vpop.f32.mrb[0].mxu0
      %v785 = vadd.f32 %v329, %v784
      %v786 = vpop.f32.mrb[0].mxu0
      %v787 = vadd.f32 %v333, %v786
      %788 = vmatprep.mubr.bf16.mxu0 %v453
      %789 = vmatmul.mubr.bf16.gmra.mrb[0].mxu0 %v452
      %v790 = vpop.f32.mrb[0].mxu0
      %v791 = vadd.f32 %v329, %v790
      %v792 = vpop.f32.mrb[0].mxu0
      %v793 = vadd.f32 %v333, %v792
      %v794 = vpop.f32.mrb[0].mxu0
      %v795 = vadd.f32 %v329, %v794
      %v796 = vpop.f32.mrb[0].mxu0
      %v797 = vadd.f32 %v333, %v796
      %798 = vmatprep.mubr.bf16.mxu0 %v455
      %799 = vmatmul.mubr.bf16.gmra.mrb[0].mxu0 %v454
      %v800 = vpop.f32.mrb[0].mxu0
      %v801 = vadd.f32 %v329, %v800
      %v802 = vpop.f32.mrb[0].mxu0
      %v803 = vadd.f32 %v333, %v802
      %v804 = vpop.f32.mrb[0].mxu0
      %v805 = vadd.f32 %v329, %v804
      %v806 = vpop.f32.mrb[0].mxu0
      %v807 = vadd.f32 %v333, %v806
      %808 = vmatprep.mubr.bf16.mxu0 %v457
      %809 = vmatmul.mubr.bf16.gmra.mrb[0].mxu0 %v456
      %v810 = vpop.f32.mrb[0].mxu0
      %v811 = vadd.f32 %v329, %v810
      %v812 = vpop.f32.mrb[0].mxu0
      %v813 = vadd.f32 %v333, %v812
      %v814 = vpop.f32.mrb[0].mxu0
      %v815 = vadd.f32 %v329, %v814
      %v816 = vpop.f32.mrb[0].mxu0
      %v817 = vadd.f32 %v333, %v816
      %818 = vmatprep.mubr.bf16.mxu0 %v459
      %819 = vmatmul.mubr.bf16.gmra.mrb[0].mxu0 %v458
      %v820 = vpop.f32.mrb[0].mxu0
      %v821 = vadd.f32 %v329, %v820
      %v822 = vpop.f32.mrb[0].mxu0
      %v823 = vadd.f32 %v333, %v822
      %v824 = vpop.f32.mrb[0].mxu0
      %v825 = vadd.f32 %v329, %v824
      %v826 = vpop.f32.mrb[0].mxu0
      %v827 = vadd.f32 %v333, %v826
      %828 = vmatprep.mubr.bf16.mxu0 %v461
      %829 = vmatmul.mubr.bf16.gmra.mrb[0].mxu0 %v460
      %v830 = vpop.f32.mrb[0].mxu0
      %v831 = vadd.f32 %v329, %v830
      %v832 = vpop.f32.mrb[0].mxu0
      %v833 = vadd.f32 %v333, %v832
      %v834 = vpop.f32.mrb[0].mxu0
      %v835 = vadd.f32 %v329, %v834
      %v836 = vpop.f32.mrb[0].mxu0
      %v837 = vadd.f32 %v333, %v836
      %838 = vmatprep.mubr.bf16.mxu0 %v463
      %839 = vmatmul.mubr.bf16.gmra.mrb[0].mxu0 %v462
      %v840 = vpop.f32.mrb[0].mxu0
      %v841 = vadd.f32 %v329, %v840
      %v842 = vpop.f32.mrb[0].mxu0
      %v843 = vadd.f32 %v333, %v842
      %v844 = vpop.f32.mrb[0].mxu0
      %v845 = vadd.f32 %v329, %v844
      %v846 = vpop.f32.mrb[0].mxu0
      %v847 = vadd.f32 %v333, %v846
      %848 = vdwg.mxu0
      %v849 = vld [vmem:[%s1] sm:$0x3]
      %v851 = vlaneseq
      %v852 = vshrl.u32 %v851, 7
      %v853 = vsub.s32 0, %v852
      %v854 = vrot.slane %v849, %v853
      %v855 = vlaneseq
      %v856 = vshrl.u32 %v855, 7
      %v857 = vsub.s32 1, %v856
      %v858 = vrot.slane %v849, %v857
      %v861 = vmul.f32 %v691, %v854
      %v862 = vmul.f32 %v693, %v858
      %v863 = vmul.f32 %v695, %v854
      %v864 = vmul.f32 %v697, %v858
      %v865 = vmul.f32 %v701, %v854
      %v866 = vmul.f32 %v703, %v858
      %v867 = vmul.f32 %v705, %v854
      %v868 = vmul.f32 %v707, %v858
      %v869 = vmul.f32 %v711, %v854
      %v870 = vmul.f32 %v713, %v858
      %v871 = vmul.f32 %v715, %v854
      %v872 = vmul.f32 %v717, %v858
      %v873 = vmul.f32 %v721, %v854
      %v874 = vmul.f32 %v723, %v858
      %v875 = vmul.f32 %v725, %v854
      %v876 = vmul.f32 %v727, %v858
      %v877 = vmul.f32 %v731, %v854
      %v878 = vmul.f32 %v733, %v858
      %v879 = vmul.f32 %v735, %v854
      %v880 = vmul.f32 %v737, %v858
      %v881 = vmul.f32 %v741, %v854
      %v882 = vmul.f32 %v743, %v858
      %v883 = vmul.f32 %v745, %v854
      %v884 = vmul.f32 %v747, %v858
      %v885 = vmul.f32 %v751, %v854
      %v886 = vmul.f32 %v753, %v858
      %v887 = vmul.f32 %v755, %v854
      %v888 = vmul.f32 %v757, %v858
      %v889 = vmul.f32 %v761, %v854
      %v890 = vmul.f32 %v763, %v858
      %v891 = vmul.f32 %v765, %v854
      %v892 = vmul.f32 %v767, %v858
      %v893 = vmul.f32 %v771, %v854
      %v894 = vmul.f32 %v773, %v858
      %v895 = vmul.f32 %v775, %v854
      %v896 = vmul.f32 %v777, %v858
      %v897 = vmul.f32 %v781, %v854
      %v898 = vmul.f32 %v783, %v858
      %v899 = vmul.f32 %v785, %v854
      %v900 = vmul.f32 %v787, %v858
      %v901 = vmul.f32 %v791, %v854
      %v902 = vmul.f32 %v793, %v858
      %v903 = vmul.f32 %v795, %v854
      %v904 = vmul.f32 %v797, %v858
      %v905 = vmul.f32 %v801, %v854
      %v906 = vmul.f32 %v803, %v858
      %v907 = vmul.f32 %v805, %v854
      %v908 = vmul.f32 %v807, %v858
      %v909 = vmul.f32 %v811, %v854
      %v910 = vmul.f32 %v813, %v858
      %v911 = vmul.f32 %v815, %v854
      %v912 = vmul.f32 %v817, %v858
      %v913 = vmul.f32 %v821, %v854
      %v914 = vmul.f32 %v823, %v858
      %v915 = vmul.f32 %v825, %v854
      %v916 = vmul.f32 %v827, %v858
      %v917 = vmul.f32 %v831, %v854
      %v918 = vmul.f32 %v833, %v858
      %v919 = vmul.f32 %v835, %v854
      %v920 = vmul.f32 %v837, %v858
      %v921 = vmul.f32 %v841, %v854
      %v922 = vmul.f32 %v843, %v858
      %v923 = vmul.f32 %v845, %v854
      %v924 = vmul.f32 %v847, %v858
      %v925 = vpack.c.bf16 %v863, %v861
      %v926 = vpack.c.bf16 %v864, %v862
      %v927 = vpack.c.bf16 %v867, %v865
      %v928 = vpack.c.bf16 %v868, %v866
      %v929 = vpack.c.bf16 %v871, %v869
      %v930 = vpack.c.bf16 %v872, %v870
      %v931 = vpack.c.bf16 %v875, %v873
      %v932 = vpack.c.bf16 %v876, %v874
      %v933 = vpack.c.bf16 %v879, %v877
      %v934 = vpack.c.bf16 %v880, %v878
      %v935 = vpack.c.bf16 %v883, %v881
      %v936 = vpack.c.bf16 %v884, %v882
      %v937 = vpack.c.bf16 %v887, %v885
      %v938 = vpack.c.bf16 %v888, %v886
      %v939 = vpack.c.bf16 %v891, %v889
      %v940 = vpack.c.bf16 %v892, %v890
      %v941 = vpack.c.bf16 %v895, %v893
      %v942 = vpack.c.bf16 %v896, %v894
      %v943 = vpack.c.bf16 %v899, %v897
      %v944 = vpack.c.bf16 %v900, %v898
      %v945 = vpack.c.bf16 %v903, %v901
      %v946 = vpack.c.bf16 %v904, %v902
      %v947 = vpack.c.bf16 %v907, %v905
      %v948 = vpack.c.bf16 %v908, %v906
      %v949 = vpack.c.bf16 %v911, %v909
      %v950 = vpack.c.bf16 %v912, %v910
      %v951 = vpack.c.bf16 %v915, %v913
      %v952 = vpack.c.bf16 %v916, %v914
      %v953 = vpack.c.bf16 %v919, %v917
      %v954 = vpack.c.bf16 %v920, %v918
      %v955 = vpack.c.bf16 %v923, %v921
      %v956 = vpack.c.bf16 %v924, %v922
      %v957 = vld [vmem:[%s4] sm:$0xff]
      %v958 = vld [vmem:[%s4 + $0x8] sm:$0xff]
      %v959 = vld [vmem:[%s4 + $0x10] sm:$0xff]
      %v960 = vld [vmem:[%s4 + $0x18] sm:$0xff]
      %v961 = vld [vmem:[%s4 + $0x20] sm:$0xff]
      %v962 = vld [vmem:[%s4 + $0x28] sm:$0xff]
      %v963 = vld [vmem:[%s4 + $0x30] sm:$0xff]
      %v964 = vld [vmem:[%s4 + $0x38] sm:$0xff]
      %v965 = vld [vmem:[%s4 + $0x40] sm:$0xff]
      %v966 = vld [vmem:[%s4 + $0x48] sm:$0xff]
      %v967 = vld [vmem:[%s4 + $0x50] sm:$0xff]
      %v968 = vld [vmem:[%s4 + $0x58] sm:$0xff]
      %v969 = vld [vmem:[%s4 + $0x60] sm:$0xff]
      %v970 = vld [vmem:[%s4 + $0x68] sm:$0xff]
      %v971 = vld [vmem:[%s4 + $0x70] sm:$0xff]
      %v972 = vld [vmem:[%s4 + $0x78] sm:$0xff]
      %v973 = vld [vmem:[%s4 + $0x80] sm:$0xff]
      %v974 = vld [vmem:[%s4 + $0x88] sm:$0xff]
      %v975 = vld [vmem:[%s4 + $0x90] sm:$0xff]
      %v976 = vld [vmem:[%s4 + $0x98] sm:$0xff]
      %v977 = vld [vmem:[%s4 + $0xa0] sm:$0xff]
      %v978 = vld [vmem:[%s4 + $0xa8] sm:$0xff]
      %v979 = vld [vmem:[%s4 + $0xb0] sm:$0xff]
      %v980 = vld [vmem:[%s4 + $0xb8] sm:$0xff]
      %v981 = vld [vmem:[%s4 + $0xc0] sm:$0xff]
      %v982 = vld [vmem:[%s4 + $0xc8] sm:$0xff]
      %v983 = vld [vmem:[%s4 + $0xd0] sm:$0xff]
      %v984 = vld [vmem:[%s4 + $0xd8] sm:$0xff]
      %v985 = vld [vmem:[%s4 + $0xe0] sm:$0xff]
      %v986 = vld [vmem:[%s4 + $0xe8] sm:$0xff]
      %v987 = vld [vmem:[%s4 + $0xf0] sm:$0xff]
      %v988 = vld [vmem:[%s4 + $0xf8] sm:$0xff]
      %v989 = vld [vmem:[%s5] sm:$0x3]
      %v991 = vlaneseq
      %v992 = vshrl.u32 %v991, 7
      %v993 = vsub.s32 0, %v992
      %v994 = vrot.slane %v989, %v993
      %v995 = vlaneseq
      %v996 = vshrl.u32 %v995, 7
      %v997 = vsub.s32 1, %v996
      %v998 = vrot.slane %v989, %v997
      %v1033 = vunpack.c.l.b16 %v957
      %v1034 = vunpack.c.h.b16 %v957
      %v1035 = vunpack.c.l.b16 %v958
      %v1036 = vunpack.c.h.b16 %v958
      %v1037 = vunpack.c.l.b16 %v959
      %v1038 = vunpack.c.h.b16 %v959
      %v1039 = vunpack.c.l.b16 %v960
      %v1040 = vunpack.c.h.b16 %v960
      %v1041 = vunpack.c.l.b16 %v961
      %v1042 = vunpack.c.h.b16 %v961
      %v1043 = vunpack.c.l.b16 %v962
      %v1044 = vunpack.c.h.b16 %v962
      %v1045 = vunpack.c.l.b16 %v963
      %v1046 = vunpack.c.h.b16 %v963
      %v1047 = vunpack.c.l.b16 %v964
      %v1048 = vunpack.c.h.b16 %v964
      %v1049 = vunpack.c.l.b16 %v965
      %v1050 = vunpack.c.h.b16 %v965
      %v1051 = vunpack.c.l.b16 %v966
      %v1052 = vunpack.c.h.b16 %v966
      %v1053 = vunpack.c.l.b16 %v967
      %v1054 = vunpack.c.h.b16 %v967
      %v1055 = vunpack.c.l.b16 %v968
      %v1056 = vunpack.c.h.b16 %v968
      %v1057 = vunpack.c.l.b16 %v969
      %v1058 = vunpack.c.h.b16 %v969
      %v1059 = vunpack.c.l.b16 %v970
      %v1060 = vunpack.c.h.b16 %v970
      %v1061 = vunpack.c.l.b16 %v971
      %v1062 = vunpack.c.h.b16 %v971
      %v1063 = vunpack.c.l.b16 %v972
      %v1064 = vunpack.c.h.b16 %v972
      %v1065 = vunpack.c.l.b16 %v973
      %v1066 = vunpack.c.h.b16 %v973
      %v1067 = vunpack.c.l.b16 %v974
      %v1068 = vunpack.c.h.b16 %v974
      %v1069 = vunpack.c.l.b16 %v975
      %v1070 = vunpack.c.h.b16 %v975
      %v1071 = vunpack.c.l.b16 %v976
      %v1072 = vunpack.c.h.b16 %v976
      %v1073 = vunpack.c.l.b16 %v977
      %v1074 = vunpack.c.h.b16 %v977
      %v1075 = vunpack.c.l.b16 %v978
      %v1076 = vunpack.c.h.b16 %v978
      %v1077 = vunpack.c.l.b16 %v979
      %v1078 = vunpack.c.h.b16 %v979
      %v1079 = vunpack.c.l.b16 %v980
      %v1080 = vunpack.c.h.b16 %v980
      %v1081 = vunpack.c.l.b16 %v981
      %v1082 = vunpack.c.h.b16 %v981
      %v1083 = vunpack.c.l.b16 %v982
      %v1084 = vunpack.c.h.b16 %v982
      %v1085 = vunpack.c.l.b16 %v983
      %v1086 = vunpack.c.h.b16 %v983
      %v1087 = vunpack.c.l.b16 %v984
      %v1088 = vunpack.c.h.b16 %v984
      %v1089 = vunpack.c.l.b16 %v985
      %v1090 = vunpack.c.h.b16 %v985
      %v1091 = vunpack.c.l.b16 %v986
      %v1092 = vunpack.c.h.b16 %v986
      %v1093 = vunpack.c.l.b16 %v987
      %v1094 = vunpack.c.h.b16 %v987
      %v1095 = vunpack.c.l.b16 %v988
      %v1096 = vunpack.c.h.b16 %v988
      %v1097 = vpack.c.b16 %v1035, %v1033
      %v1098 = vpack.c.b16 %v1036, %v1034
      %v1099 = vpack.c.b16 %v1039, %v1037
      %v1100 = vpack.c.b16 %v1040, %v1038
      %v1101 = vpack.c.b16 %v1043, %v1041
      %v1102 = vpack.c.b16 %v1044, %v1042
      %v1103 = vpack.c.b16 %v1047, %v1045
      %v1104 = vpack.c.b16 %v1048, %v1046
      %v1105 = vpack.c.b16 %v1051, %v1049
      %v1106 = vpack.c.b16 %v1052, %v1050
      %v1107 = vpack.c.b16 %v1055, %v1053
      %v1108 = vpack.c.b16 %v1056, %v1054
      %v1109 = vpack.c.b16 %v1059, %v1057
      %v1110 = vpack.c.b16 %v1060, %v1058
      %v1111 = vpack.c.b16 %v1063, %v1061
      %v1112 = vpack.c.b16 %v1064, %v1062
      %v1113 = vpack.c.b16 %v1067, %v1065
      %v1114 = vpack.c.b16 %v1068, %v1066
      %v1115 = vpack.c.b16 %v1071, %v1069
      %v1116 = vpack.c.b16 %v1072, %v1070
      %v1117 = vpack.c.b16 %v1075, %v1073
      %v1118 = vpack.c.b16 %v1076, %v1074
      %v1119 = vpack.c.b16 %v1079, %v1077
      %v1120 = vpack.c.b16 %v1080, %v1078
      %v1121 = vpack.c.b16 %v1083, %v1081
      %v1122 = vpack.c.b16 %v1084, %v1082
      %v1123 = vpack.c.b16 %v1087, %v1085
      %v1124 = vpack.c.b16 %v1088, %v1086
      %v1125 = vpack.c.b16 %v1091, %v1089
      %v1126 = vpack.c.b16 %v1092, %v1090
      %v1127 = vpack.c.b16 %v1095, %v1093
      %v1128 = vpack.c.b16 %v1096, %v1094
      %1161 = vmatprep.subr.bf16.mxu0 %v1098
      %1162 = vmatpush1.bf16.msra.mxu0 %v1097
      %1163 = vmatprep.subr.bf16.mxu0 %v1100
      %1164 = vmatpush1.bf16.msra.mxu0 %v1099
      %1165 = vmatprep.subr.bf16.mxu0 %v1102
      %1166 = vmatpush1.bf16.msra.mxu0 %v1101
      %1167 = vmatprep.subr.bf16.mxu0 %v1104
      %1168 = vmatpush1.bf16.msra.mxu0 %v1103
      %1169 = vmatprep.subr.bf16.mxu0 %v1106
      %1170 = vmatpush1.bf16.msra.mxu0 %v1105
      %1171 = vmatprep.subr.bf16.mxu0 %v1108
      %1172 = vmatpush1.bf16.msra.mxu0 %v1107
      %1173 = vmatprep.subr.bf16.mxu0 %v1110
      %1174 = vmatpush1.bf16.msra.mxu0 %v1109
      %1175 = vmatprep.subr.bf16.mxu0 %v1112
      %1176 = vmatpush1.bf16.msra.mxu0 %v1111
      %1177 = vmatprep.subr.bf16.mxu0 %v1114
      %1178 = vmatpush1.bf16.msra.mxu0 %v1113
      %1179 = vmatprep.subr.bf16.mxu0 %v1116
      %1180 = vmatpush1.bf16.msra.mxu0 %v1115
      %1181 = vmatprep.subr.bf16.mxu0 %v1118
      %1182 = vmatpush1.bf16.msra.mxu0 %v1117
      %1183 = vmatprep.subr.bf16.mxu0 %v1120
      %1184 = vmatpush1.bf16.msra.mxu0 %v1119
      %1185 = vmatprep.subr.bf16.mxu0 %v1122
      %1186 = vmatpush1.bf16.msra.mxu0 %v1121
      %1187 = vmatprep.subr.bf16.mxu0 %v1124
      %1188 = vmatpush1.bf16.msra.mxu0 %v1123
      %1189 = vmatprep.subr.bf16.mxu0 %v1126
      %1190 = vmatpush1.bf16.msra.mxu0 %v1125
      %1191 = vmatprep.subr.bf16.mxu0 %v1128
      %1192 = vmatpush1.bf16.msra.mxu0 %v1127
      %1193 = vmatprep.mubr.bf16.mxu0 %v926
      %1194 = vmatmul.mubr.bf16.gmra.mrb[0].mxu0 %v925
      %v1195 = vpop.f32.mrb[0].mxu0
      %v1196 = vadd.f32 %v994, %v1195
      %v1197 = vpop.f32.mrb[0].mxu0
      %v1198 = vadd.f32 %v998, %v1197
      %v1199 = vpop.f32.mrb[0].mxu0
      %v1200 = vadd.f32 %v994, %v1199
      %v1201 = vpop.f32.mrb[0].mxu0
      %v1202 = vadd.f32 %v998, %v1201
      %1203 = vmatprep.mubr.bf16.mxu0 %v928
      %1204 = vmatmul.mubr.bf16.gmra.mrb[0].mxu0 %v927
      %v1205 = vpop.f32.mrb[0].mxu0
      %v1206 = vadd.f32 %v994, %v1205
      %v1207 = vpop.f32.mrb[0].mxu0
      %v1208 = vadd.f32 %v998, %v1207
      %v1209 = vpop.f32.mrb[0].mxu0
      %v1210 = vadd.f32 %v994, %v1209
      %v1211 = vpop.f32.mrb[0].mxu0
      %v1212 = vadd.f32 %v998, %v1211
      %1213 = vmatprep.mubr.bf16.mxu0 %v930
      %1214 = vmatmul.mubr.bf16.gmra.mrb[0].mxu0 %v929
      %v1215 = vpop.f32.mrb[0].mxu0
      %v1216 = vadd.f32 %v994, %v1215
      %v1217 = vpop.f32.mrb[0].mxu0
      %v1218 = vadd.f32 %v998, %v1217
      %v1219 = vpop.f32.mrb[0].mxu0
      %v1220 = vadd.f32 %v994, %v1219
      %v1221 = vpop.f32.mrb[0].mxu0
      %v1222 = vadd.f32 %v998, %v1221
      %1223 = vmatprep.mubr.bf16.mxu0 %v932
      %1224 = vmatmul.mubr.bf16.gmra.mrb[0].mxu0 %v931
      %v1225 = vpop.f32.mrb[0].mxu0
      %v1226 = vadd.f32 %v994, %v1225
      %v1227 = vpop.f32.mrb[0].mxu0
      %v1228 = vadd.f32 %v998, %v1227
      %v1229 = vpop.f32.mrb[0].mxu0
      %v1230 = vadd.f32 %v994, %v1229
      %v1231 = vpop.f32.mrb[0].mxu0
      %v1232 = vadd.f32 %v998, %v1231
      %1233 = vmatprep.mubr.bf16.mxu0 %v934
      %1234 = vmatmul.mubr.bf16.gmra.mrb[0].mxu0 %v933
      %v1235 = vpop.f32.mrb[0].mxu0
      %v1236 = vadd.f32 %v994, %v1235
      %v1237 = vpop.f32.mrb[0].mxu0
      %v1238 = vadd.f32 %v998, %v1237
      %v1239 = vpop.f32.mrb[0].mxu0
      %v1240 = vadd.f32 %v994, %v1239
      %v1241 = vpop.f32.mrb[0].mxu0
      %v1242 = vadd.f32 %v998, %v1241
      %1243 = vmatprep.mubr.bf16.mxu0 %v936
      %1244 = vmatmul.mubr.bf16.gmra.mrb[0].mxu0 %v935
      %v1245 = vpop.f32.mrb[0].mxu0
      %v1246 = vadd.f32 %v994, %v1245
      %v1247 = vpop.f32.mrb[0].mxu0
      %v1248 = vadd.f32 %v998, %v1247
      %v1249 = vpop.f32.mrb[0].mxu0
      %v1250 = vadd.f32 %v994, %v1249
      %v1251 = vpop.f32.mrb[0].mxu0
      %v1252 = vadd.f32 %v998, %v1251
      %1253 = vmatprep.mubr.bf16.mxu0 %v938
      %1254 = vmatmul.mubr.bf16.gmra.mrb[0].mxu0 %v937
      %v1255 = vpop.f32.mrb[0].mxu0
      %v1256 = vadd.f32 %v994, %v1255
      %v1257 = vpop.f32.mrb[0].mxu0
      %v1258 = vadd.f32 %v998, %v1257
      %v1259 = vpop.f32.mrb[0].mxu0
      %v1260 = vadd.f32 %v994, %v1259
      %v1261 = vpop.f32.mrb[0].mxu0
      %v1262 = vadd.f32 %v998, %v1261
      %1263 = vmatprep.mubr.bf16.mxu0 %v940
      %1264 = vmatmul.mubr.bf16.gmra.mrb[0].mxu0 %v939
      %v1265 = vpop.f32.mrb[0].mxu0
      %v1266 = vadd.f32 %v994, %v1265
      %v1267 = vpop.f32.mrb[0].mxu0
      %v1268 = vadd.f32 %v998, %v1267
      %v1269 = vpop.f32.mrb[0].mxu0
      %v1270 = vadd.f32 %v994, %v1269
      %v1271 = vpop.f32.mrb[0].mxu0
      %v1272 = vadd.f32 %v998, %v1271
      %1273 = vmatprep.mubr.bf16.mxu0 %v942
      %1274 = vmatmul.mubr.bf16.gmra.mrb[0].mxu0 %v941
      %v1275 = vpop.f32.mrb[0].mxu0
      %v1276 = vadd.f32 %v994, %v1275
      %v1277 = vpop.f32.mrb[0].mxu0
      %v1278 = vadd.f32 %v998, %v1277
      %v1279 = vpop.f32.mrb[0].mxu0
      %v1280 = vadd.f32 %v994, %v1279
      %v1281 = vpop.f32.mrb[0].mxu0
      %v1282 = vadd.f32 %v998, %v1281
      %1283 = vmatprep.mubr.bf16.mxu0 %v944
      %1284 = vmatmul.mubr.bf16.gmra.mrb[0].mxu0 %v943
      %v1285 = vpop.f32.mrb[0].mxu0
      %v1286 = vadd.f32 %v994, %v1285
      %v1287 = vpop.f32.mrb[0].mxu0
      %v1288 = vadd.f32 %v998, %v1287
      %v1289 = vpop.f32.mrb[0].mxu0
      %v1290 = vadd.f32 %v994, %v1289
      %v1291 = vpop.f32.mrb[0].mxu0
      %v1292 = vadd.f32 %v998, %v1291
      %1293 = vmatprep.mubr.bf16.mxu0 %v946
      %1294 = vmatmul.mubr.bf16.gmra.mrb[0].mxu0 %v945
      %v1295 = vpop.f32.mrb[0].mxu0
      %v1296 = vadd.f32 %v994, %v1295
      %v1297 = vpop.f32.mrb[0].mxu0
      %v1298 = vadd.f32 %v998, %v1297
      %v1299 = vpop.f32.mrb[0].mxu0
      %v1300 = vadd.f32 %v994, %v1299
      %v1301 = vpop.f32.mrb[0].mxu0
      %v1302 = vadd.f32 %v998, %v1301
      %1303 = vmatprep.mubr.bf16.mxu0 %v948
      %1304 = vmatmul.mubr.bf16.gmra.mrb[0].mxu0 %v947
      %v1305 = vpop.f32.mrb[0].mxu0
      %v1306 = vadd.f32 %v994, %v1305
      %v1307 = vpop.f32.mrb[0].mxu0
      %v1308 = vadd.f32 %v998, %v1307
      %v1309 = vpop.f32.mrb[0].mxu0
      %v1310 = vadd.f32 %v994, %v1309
      %v1311 = vpop.f32.mrb[0].mxu0
      %v1312 = vadd.f32 %v998, %v1311
      %1313 = vmatprep.mubr.bf16.mxu0 %v950
      %1314 = vmatmul.mubr.bf16.gmra.mrb[0].mxu0 %v949
      %v1315 = vpop.f32.mrb[0].mxu0
      %v1316 = vadd.f32 %v994, %v1315
      %v1317 = vpop.f32.mrb[0].mxu0
      %v1318 = vadd.f32 %v998, %v1317
      %v1319 = vpop.f32.mrb[0].mxu0
      %v1320 = vadd.f32 %v994, %v1319
      %v1321 = vpop.f32.mrb[0].mxu0
      %v1322 = vadd.f32 %v998, %v1321
      %1323 = vmatprep.mubr.bf16.mxu0 %v952
      %1324 = vmatmul.mubr.bf16.gmra.mrb[0].mxu0 %v951
      %v1325 = vpop.f32.mrb[0].mxu0
      %v1326 = vadd.f32 %v994, %v1325
      %v1327 = vpop.f32.mrb[0].mxu0
      %v1328 = vadd.f32 %v998, %v1327
      %v1329 = vpop.f32.mrb[0].mxu0
      %v1330 = vadd.f32 %v994, %v1329
      %v1331 = vpop.f32.mrb[0].mxu0
      %v1332 = vadd.f32 %v998, %v1331
      %1333 = vmatprep.mubr.bf16.mxu0 %v954
      %1334 = vmatmul.mubr.bf16.gmra.mrb[0].mxu0 %v953
      %v1335 = vpop.f32.mrb[0].mxu0
      %v1336 = vadd.f32 %v994, %v1335
      %v1337 = vpop.f32.mrb[0].mxu0
      %v1338 = vadd.f32 %v998, %v1337
      %v1339 = vpop.f32.mrb[0].mxu0
      %v1340 = vadd.f32 %v994, %v1339
      %v1341 = vpop.f32.mrb[0].mxu0
      %v1342 = vadd.f32 %v998, %v1341
      %1343 = vmatprep.mubr.bf16.mxu0 %v956
      %1344 = vmatmul.mubr.bf16.gmra.mrb[0].mxu0 %v955
      %v1345 = vpop.f32.mrb[0].mxu0
      %v1346 = vadd.f32 %v994, %v1345
      %v1347 = vpop.f32.mrb[0].mxu0
      %v1348 = vadd.f32 %v998, %v1347
      %v1349 = vpop.f32.mrb[0].mxu0
      %v1350 = vadd.f32 %v994, %v1349
      %v1351 = vpop.f32.mrb[0].mxu0
      %v1352 = vadd.f32 %v998, %v1351
      %1353 = vdwg.mxu0
      %1354 = vst [vmem:[%s258] sm:$0xff] %v1196
      %1355 = vst [vmem:[%s258 + $0x8] sm:$0xff] %v1198
      %1356 = vst [vmem:[%s258 + $0x10] sm:$0xff] %v1200
      %1357 = vst [vmem:[%s258 + $0x18] sm:$0xff] %v1202
      %1358 = vst [vmem:[%s258 + $0x20] sm:$0xff] %v1206
      %1359 = vst [vmem:[%s258 + $0x28] sm:$0xff] %v1208
      %1360 = vst [vmem:[%s258 + $0x30] sm:$0xff] %v1210
      %1361 = vst [vmem:[%s258 + $0x38] sm:$0xff] %v1212
      %1362 = vst [vmem:[%s258 + $0x40] sm:$0xff] %v1216
      %1363 = vst [vmem:[%s258 + $0x48] sm:$0xff] %v1218
      %1364 = vst [vmem:[%s258 + $0x50] sm:$0xff] %v1220
      %1365 = vst [vmem:[%s258 + $0x58] sm:$0xff] %v1222
      %1366 = vst [vmem:[%s258 + $0x60] sm:$0xff] %v1226
      %1367 = vst [vmem:[%s258 + $0x68] sm:$0xff] %v1228
      %1368 = vst [vmem:[%s258 + $0x70] sm:$0xff] %v1230
      %1369 = vst [vmem:[%s258 + $0x78] sm:$0xff] %v1232
      %1370 = vst [vmem:[%s258 + $0x80] sm:$0xff] %v1236
      %1371 = vst [vmem:[%s258 + $0x88] sm:$0xff] %v1238
      %1372 = vst [vmem:[%s258 + $0x90] sm:$0xff] %v1240
      %1373 = vst [vmem:[%s258 + $0x98] sm:$0xff] %v1242
      %1374 = vst [vmem:[%s258 + $0xa0] sm:$0xff] %v1246
      %1375 = vst [vmem:[%s258 + $0xa8] sm:$0xff] %v1248
      %1376 = vst [vmem:[%s258 + $0xb0] sm:$0xff] %v1250
      %1377 = vst [vmem:[%s258 + $0xb8] sm:$0xff] %v1252
      %1378 = vst [vmem:[%s258 + $0xc0] sm:$0xff] %v1256
      %1379 = vst [vmem:[%s258 + $0xc8] sm:$0xff] %v1258
      %1380 = vst [vmem:[%s258 + $0xd0] sm:$0xff] %v1260
      %1381 = vst [vmem:[%s258 + $0xd8] sm:$0xff] %v1262
      %1382 = vst [vmem:[%s258 + $0xe0] sm:$0xff] %v1266
      %1383 = vst [vmem:[%s258 + $0xe8] sm:$0xff] %v1268
      %1384 = vst [vmem:[%s258 + $0xf0] sm:$0xff] %v1270
      %1385 = vst [vmem:[%s258 + $0xf8] sm:$0xff] %v1272
      %1386 = vst [vmem:[%s258 + $0x100] sm:$0xff] %v1276
      %1387 = vst [vmem:[%s258 + $0x108] sm:$0xff] %v1278
      %1388 = vst [vmem:[%s258 + $0x110] sm:$0xff] %v1280
      %1389 = vst [vmem:[%s258 + $0x118] sm:$0xff] %v1282
      %1390 = vst [vmem:[%s258 + $0x120] sm:$0xff] %v1286
      %1391 = vst [vmem:[%s258 + $0x128] sm:$0xff] %v1288
      %1392 = vst [vmem:[%s258 + $0x130] sm:$0xff] %v1290
      %1393 = vst [vmem:[%s258 + $0x138] sm:$0xff] %v1292
      %1394 = vst [vmem:[%s258 + $0x140] sm:$0xff] %v1296
      %1395 = vst [vmem:[%s258 + $0x148] sm:$0xff] %v1298
      %1396 = vst [vmem:[%s258 + $0x150] sm:$0xff] %v1300
      %1397 = vst [vmem:[%s258 + $0x158] sm:$0xff] %v1302
      %1398 = vst [vmem:[%s258 + $0x160] sm:$0xff] %v1306
      %1399 = vst [vmem:[%s258 + $0x168] sm:$0xff] %v1308
      %1400 = vst [vmem:[%s258 + $0x170] sm:$0xff] %v1310
      %1401 = vst [vmem:[%s258 + $0x178] sm:$0xff] %v1312
      %1402 = vst [vmem:[%s258 + $0x180] sm:$0xff] %v1316
      %1403 = vst [vmem:[%s258 + $0x188] sm:$0xff] %v1318
      %1404 = vst [vmem:[%s258 + $0x190] sm:$0xff] %v1320
      %1405 = vst [vmem:[%s258 + $0x198] sm:$0xff] %v1322
      %1406 = vst [vmem:[%s258 + $0x1a0] sm:$0xff] %v1326
      %1407 = vst [vmem:[%s258 + $0x1a8] sm:$0xff] %v1328
      %1408 = vst [vmem:[%s258 + $0x1b0] sm:$0xff] %v1330
      %1409 = vst [vmem:[%s258 + $0x1b8] sm:$0xff] %v1332
      %1410 = vst [vmem:[%s258 + $0x1c0] sm:$0xff] %v1336
      %1411 = vst [vmem:[%s258 + $0x1c8] sm:$0xff] %v1338
      %1412 = vst [vmem:[%s258 + $0x1d0] sm:$0xff] %v1340
      %1413 = vst [vmem:[%s258 + $0x1d8] sm:$0xff] %v1342
      %1414 = vst [vmem:[%s258 + $0x1e0] sm:$0xff] %v1346
      %1415 = vst [vmem:[%s258 + $0x1e8] sm:$0xff] %v1348
      %1416 = vst [vmem:[%s258 + $0x1f0] sm:$0xff] %v1350
      %1417 = vst [vmem:[%s258 + $0x1f8] sm:$0xff] %v1352
      %s1418 = smul.u32 32, %s17
      %p1419 = scmp.lt.s32.totalorder %s1418, 255
      %s1420 = scalar_select %p1419, %s1418, 255
      %s1421 = smul.addr %s1420, 2
      %s1422 = smul.addr %s1421, 8
      %s1423 = scalar_lea.vmem %s6, %s1422
      // Predicated region
      $region45: #{mobilevitv2_attention.3} parent=43 // pred_check
        %p1424 = pneg %p166
      $region46: #{mobilevitv2_attention.3} parent=43 // pred_check_branch
        %1426 = sbr.rel (%p1424) target = $region48
      $region47: #{mobilevitv2_attention.3} parent=43 // pred_region
        %s1427 = smul.u32 32, %s17
      $region48: #{mobilevitv2_attention.3} parent=43 // pred_fallthru
        _
    $region44: #{mobilevitv2_attention.3} parent=5 // pred_fallthru
      _
    %p1428 = scmp.le.s32.totalorder 2, %s12
    // Predicated region
    $region49: #{mobilevitv2_attention.3} parent=5 // pred_check
      %p1429 = pneg %p1428
    $region50: #{mobilevitv2_attention.3} parent=5 // pred_check_branch
      %1431 = sbr.rel (%p1429) target = $region52
    $region51: #{mobilevitv2_attention.3} parent=5 // pred_region
      %s1432 = ssub.s32 %s12, 2
      // Predicated region
      $region53: #{mobilevitv2_attention.3} parent=51 // pred_check
        %p1433 = pneg %p172
      $region54: #{mobilevitv2_attention.3} parent=51 // pred_check_branch
        %1435 = sbr.rel (%p1433) target = $region56
      $region55: #{mobilevitv2_attention.3} parent=51 // pred_region
        %s1436 = smul.u32 32, %s18
        %p1437 = scmp.lt.s32.totalorder %s1436, 255
        %s1438 = scalar_select %p1437, %s1436, 255
        %s1439 = smul.addr %s1438, 2
        %s1440 = smul.addr %s1439, 8
        %s1441 = scalar_lea.vmem %s6, %s1440
      $region56: #{mobilevitv2_attention.3} parent=51 // pred_fallthru
        _
    $region52: #{mobilevitv2_attention.3} parent=5 // pred_fallthru
      _
  $region6: #{mobilevitv2_attention.3} parent=0 // loop_footer
    %s16 = sadd.s32 1, %s12
  $region7: #{mobilevitv2_attention.3} parent=0 // loop_footer_branch
    %11 = sbr.rel target = $region3
  $region8: #{mobilevitv2_attention.3} parent=0 // loop_exit
    _

</llo_original>
